<compile_context>
chip_gen: v5e
topology: v5e:2x2
jax: 0.10.0
libtpu: 0.0.40
codegen_flags: <defaults>
</compile_context>

<pallas_src>
import functools

import jax
import jax.numpy as jnp
from jax.experimental import pallas as pl
from jax.experimental.pallas import tpu as pltpu


# ----------------------------------------------------------------------------
# helpers
# ----------------------------------------------------------------------------
def _tile(dim, target, align):
    """Largest block <= target that is a multiple of `align` and divides `dim`; else dim."""
    if dim <= target:
        return dim
    t = (target // align) * align
    while t >= align:
        if dim % t == 0:
            return t
        t -= align
    return dim


def _ln_rows(y, g, b, eps):
    """Row-wise LayerNorm of f32 y:(R, D); g/b:(1, D)."""
    mean = jnp.mean(y, axis=-1, keepdims=True)
    var = jnp.mean(jnp.square(y - mean), axis=-1, keepdims=True)
    return (y - mean) * jax.lax.rsqrt(var + eps) * g + b


def _mha_out(q, k, v, bias, wo_ref, num_heads, scale):
    """Multi-head attention + output projection, all in-kernel.

    q: (Sq, D) f32, k/v: (Skv, D) f32, bias: (Sq, Skv) f32 additive mask, wo_ref: (D, D) bf16 ref.
    Returns (Sq, D) f32 = concat_h(softmax(Q_h K_h^T * scale + bias) V_h) @ Wo computed as the
    equivalent sum over heads of ctx_h @ Wo[h*dh:(h+1)*dh, :]  (no lane-dim concat needed).
    """
    Sq, D = q.shape
    dh = D // num_heads
    y = jnp.zeros((Sq, D), jnp.float32)
    for h in range(num_heads):
        sl = slice(h * dh, (h + 1) * dh)
        qh = q[:, sl].astype(jnp.bfloat16)
        kh = k[:, sl].astype(jnp.bfloat16)
        vh = v[:, sl].astype(jnp.bfloat16)
        s = jnp.dot(qh, kh.T, preferred_element_type=jnp.float32) * scale + bias
        s = s - jnp.max(s, axis=-1, keepdims=True)
        p = jnp.exp(s)
        p = p * pl.reciprocal(jnp.sum(p, axis=-1, keepdims=True), approx=True)
        ctx_h = jnp.dot(p.astype(jnp.bfloat16), vh, preferred_element_type=jnp.float32)
        y = y + jnp.dot(ctx_h.astype(jnp.bfloat16), wo_ref[sl, :],
                        preferred_element_type=jnp.float32)
    return y


# ----------------------------------------------------------------------------
# Pallas kernels
# ----------------------------------------------------------------------------
def _self_attn_kernel(x_ref, bias_ref, wqkv_ref, bqkv_ref, wo_ref, bo_ref,
                      g_ref, b_ref, o_ref, *, num_heads, scale, eps):
    x = x_ref[0].astype(jnp.float32)                                 # (Sq, D)
    D = x.shape[-1]
    qkv = jnp.dot(x.astype(jnp.bfloat16), wqkv_ref[...].astype(jnp.bfloat16),
                  preferred_element_type=jnp.float32) + bqkv_ref[...]  # (Sq, 3D), in VMEM
    y = _mha_out(qkv[:, :D], qkv[:, D:2 * D], qkv[:, 2 * D:], bias_ref[...],
                 wo_ref, num_heads, scale)
    y = y + bo_ref[...] + x                                          # out-proj bias + residual
    o_ref[0] = _ln_rows(y, g_ref[...], b_ref[...], eps).astype(o_ref.dtype)


def _cross_attn_kernel(x_ref, mem_ref, bias_ref, wq_ref, bq_ref, wkv_ref, bkv_ref,
                       wo_ref, bo_ref, g_ref, b_ref, o_ref, *, num_heads, scale, eps):
    x = x_ref[0].astype(jnp.float32)                                 # (Sq, D)
    mem = mem_ref[0].astype(jnp.float32)                             # (Skv, D)
    D = x.shape[-1]
    q = jnp.dot(x.astype(jnp.bfloat16), wq_ref[...].astype(jnp.bfloat16),
                preferred_element_type=jnp.float32) + bq_ref[...]    # (Sq, D)
    kv = jnp.dot(mem.astype(jnp.bfloat16), wkv_ref[...].astype(jnp.bfloat16),
                 preferred_element_type=jnp.float32) + bkv_ref[...]  # (Skv, 2D)
    y = _mha_out(q, kv[:, :D], kv[:, D:], bias_ref[...], wo_ref, num_heads, scale)
    y = y + bo_ref[...] + x
    o_ref[0] = _ln_rows(y, g_ref[...], b_ref[...], eps).astype(o_ref.dtype)


def _ffn_block_kernel(x_ref, w1_ref, b1_ref, w2_ref, b2_ref, g_ref, b_ref, o_ref, *, eps):
    x = x_ref[...].astype(jnp.float32)
    h = jnp.dot(x.astype(jnp.bfloat16), w1_ref[...].astype(jnp.bfloat16),
                preferred_element_type=jnp.float32) + b1_ref[...]
    h = jnp.maximum(h, 0.0)                                          # [tm, ff_dim] stays in VMEM
    y = jnp.dot(h.astype(jnp.bfloat16), w2_ref[...].astype(jnp.bfloat16),
                preferred_element_type=jnp.float32) + b2_ref[...]
    y = y + x                                                        # residual
    o_ref[...] = _ln_rows(y, g_ref[...], b_ref[...], eps).astype(o_ref.dtype)


def _ln_logits_kernel(x_ref, g_ref, b_ref, wt_ref, o_ref, *, eps):
    xn = _ln_rows(x_ref[...].astype(jnp.float32), g_ref[...], b_ref[...], eps)
    o_ref[...] = jnp.dot(xn.astype(jnp.bfloat16), wt_ref[...].astype(jnp.bfloat16),
                         preferred_element_type=jnp.float32).astype(o_ref.dtype)


# ----------------------------------------------------------------------------
# pallas_call wrappers
# ----------------------------------------------------------------------------
def self_attn_block(x, attn_bias, w_qkv, b_qkv, wo, bo, gamma, beta, num_heads, eps=1e-5):
    """LN(x + MHA_self(x) @ Wo + bo); x: [B, Sq, D], attn_bias: [Sq, Sq] additive."""
    B, Sq, D = x.shape
    scale = 1.0 / float((D // num_heads) ** 0.5)
    return pl.pallas_call(
        functools.partial(_self_attn_kernel, num_heads=num_heads, scale=scale, eps=eps),
        out_shape=jax.ShapeDtypeStruct((B, Sq, D), jnp.float32),
        grid=(B,),
        in_specs=[
            pl.BlockSpec((1, Sq, D), lambda i: (i, 0, 0)),
            pl.BlockSpec((Sq, Sq), lambda i: (0, 0)),
            pl.BlockSpec((D, 3 * D), lambda i: (0, 0)),
            pl.BlockSpec((1, 3 * D), lambda i: (0, 0)),
            pl.BlockSpec((D, D), lambda i: (0, 0)),
            pl.BlockSpec((1, D), lambda i: (0, 0)),
            pl.BlockSpec((1, D), lambda i: (0, 0)),
            pl.BlockSpec((1, D), lambda i: (0, 0)),
        ],
        out_specs=pl.BlockSpec((1, Sq, D), lambda i: (i, 0, 0)),
        compiler_params=pltpu.CompilerParams(dimension_semantics=("parallel",)),
    )(x, attn_bias, w_qkv, b_qkv.reshape(1, 3 * D), wo, bo.reshape(1, D),
      gamma.reshape(1, D), beta.reshape(1, D))


def cross_attn_block(x, memory, attn_bias, wq, bq, w_kv, b_kv, wo, bo, gamma, beta,
                     num_heads, eps=1e-5):
    """LN(x + MHA_cross(x, memory) @ Wo + bo); x: [B, Sq, D], memory: [B, Skv, D]."""
    B, Sq, D = x.shape
    Skv = memory.shape[1]
    scale = 1.0 / float((D // num_heads) ** 0.5)
    return pl.pallas_call(
        functools.partial(_cross_attn_kernel, num_heads=num_heads, scale=scale, eps=eps),
        out_shape=jax.ShapeDtypeStruct((B, Sq, D), jnp.float32),
        grid=(B,),
        in_specs=[
            pl.BlockSpec((1, Sq, D), lambda i: (i, 0, 0)),
            pl.BlockSpec((1, Skv, D), lambda i: (i, 0, 0)),
            pl.BlockSpec((Sq, Skv), lambda i: (0, 0)),
            pl.BlockSpec((D, D), lambda i: (0, 0)),
            pl.BlockSpec((1, D), lambda i: (0, 0)),
            pl.BlockSpec((D, 2 * D), lambda i: (0, 0)),
            pl.BlockSpec((1, 2 * D), lambda i: (0, 0)),
            pl.BlockSpec((D, D), lambda i: (0, 0)),
            pl.BlockSpec((1, D), lambda i: (0, 0)),
            pl.BlockSpec((1, D), lambda i: (0, 0)),
            pl.BlockSpec((1, D), lambda i: (0, 0)),
        ],
        out_specs=pl.BlockSpec((1, Sq, D), lambda i: (i, 0, 0)),
        compiler_params=pltpu.CompilerParams(dimension_semantics=("parallel",)),
    )(x, memory, attn_bias, wq, bq.reshape(1, D), w_kv, b_kv.reshape(1, 2 * D),
      wo, bo.reshape(1, D), gamma.reshape(1, D), beta.reshape(1, D))


def ffn_block(x, w1, b1, w2, b2, gamma, beta, eps=1e-5, tm=256):
    """LN(x + relu(x@w1+b1)@w2+b2); x: [M, D]."""
    M, D = x.shape
    F = w1.shape[1]
    bm = _tile(M, tm, 8)
    return pl.pallas_call(
        functools.partial(_ffn_block_kernel, eps=eps),
        out_shape=jax.ShapeDtypeStruct((M, D), jnp.float32),
        grid=(M // bm,),
        in_specs=[
            pl.BlockSpec((bm, D), lambda i: (i, 0)),
            pl.BlockSpec((D, F), lambda i: (0, 0)),
            pl.BlockSpec((1, F), lambda i: (0, 0)),
            pl.BlockSpec((F, D), lambda i: (0, 0)),
            pl.BlockSpec((1, D), lambda i: (0, 0)),
            pl.BlockSpec((1, D), lambda i: (0, 0)),
            pl.BlockSpec((1, D), lambda i: (0, 0)),
        ],
        out_specs=pl.BlockSpec((bm, D), lambda i: (i, 0)),
        compiler_params=pltpu.CompilerParams(dimension_semantics=("parallel",)),
    )(x, w1, b1.reshape(1, F), w2, b2.reshape(1, D), gamma.reshape(1, D), beta.reshape(1, D))


def ln_logits(x, gamma, beta, wt, eps=1e-5, tm=256, tn=1024):
    """Fused final LayerNorm + tied-logits matmul (no bias); x: [M, D], wt: [D, V]."""
    M, D = x.shape
    V = wt.shape[1]
    bm = _tile(M, tm, 8)
    bn = _tile(V, tn, 128)
    return pl.pallas_call(
        functools.partial(_ln_logits_kernel, eps=eps),
        out_shape=jax.ShapeDtypeStruct((M, V), jnp.float32),
        grid=(M // bm, V // bn),
        in_specs=[
            pl.BlockSpec((bm, D), lambda i, j: (i, 0)),
            pl.BlockSpec((1, D), lambda i, j: (0, 0)),
            pl.BlockSpec((1, D), lambda i, j: (0, 0)),
            pl.BlockSpec((D, bn), lambda i, j: (0, j)),
        ],
        out_specs=pl.BlockSpec((bm, bn), lambda i, j: (i, j)),
        compiler_params=pltpu.CompilerParams(
            dimension_semantics=("parallel", "parallel")),
    )(x, gamma.reshape(1, D), beta.reshape(1, D), wt)


# ----------------------------------------------------------------------------
# One-time parameter preparation (fused QKV/KV weights, bf16 weight cast,
# pre-transposed tied output weight)
# ----------------------------------------------------------------------------
def prepare_params(params):
    def bf(w):
        return w.astype(jnp.bfloat16)

    layers = []
    for p in params["layers"]:
        sa, ca = p["self_attn"], p["cross_attn"]
        layers.append({
            "w_qkv": bf(jnp.concatenate([sa["wq"], sa["wk"], sa["wv"]], axis=1)),
            "b_qkv": jnp.concatenate([sa["bq"], sa["bk"], sa["bv"]]),
            "wo_sa": bf(sa["wo"]), "bo_sa": sa["bo"],
            "wq_ca": bf(ca["wq"]), "bq_ca": ca["bq"],
            "w_kv": bf(jnp.concatenate([ca["wk"], ca["wv"]], axis=1)),
            "b_kv": jnp.concatenate([ca["bk"], ca["bv"]]),
            "wo_ca": bf(ca["wo"]), "bo_ca": ca["bo"],
            "ffn_w1": bf(p["ffn_w1"]), "ffn_b1": p["ffn_b1"],
            "ffn_w2": bf(p["ffn_w2"]), "ffn_b2": p["ffn_b2"],
            "ln1_g": p["ln1_g"], "ln1_b": p["ln1_b"],
            "ln2_g": p["ln2_g"], "ln2_b": p["ln2_b"],
            "ln3_g": p["ln3_g"], "ln3_b": p["ln3_b"],
        })
    return {
        "embed_w": params["embed_w"],                        # f32, for the gather
        "embed_wt": bf(params["embed_w"].T),                 # tied logits weight, transposed once
        "pos_embed": params["pos_embed"],
        "layers": layers,
        "norm_g": params["norm_g"], "norm_b": params["norm_b"],
    }


# ----------------------------------------------------------------------------
# Forward pass (Pallas)
# ----------------------------------------------------------------------------
def decoder_forward(fp, tgt_ids, memory, tgt_mask, memory_mask, num_heads):
    B, S = tgt_ids.shape
    D = fp["embed_w"].shape[1]

    # TODO(synk): embedding gather + positional add kept in plain JAX (data-dependent gather).
    x = jnp.take(fp["embed_w"], tgt_ids, axis=0) + fp["pos_embed"][:, :S, :]
    x = x.astype(jnp.float32)
    mem = memory.astype(jnp.float32)

    # additive attention biases (finite -1e30 avoids NaN for fully-masked rows)
    tgt_bias = jnp.where(tgt_mask == 0.0, jnp.float32(-1e30), jnp.float32(0.0))
    mem_bias = jnp.where(memory_mask == 0.0, jnp.float32(-1e30), jnp.float32(0.0))

    for lp in fp["layers"]:
        # self-attention: fused [QKV proj + attn + out-proj + residual + LN]
        x = self_attn_block(x, tgt_bias, lp["w_qkv"], lp["b_qkv"], lp["wo_sa"], lp["bo_sa"],
                            lp["ln1_g"], lp["ln1_b"], num_heads)
        # cross-attention: fused [Q proj + KV proj + attn + out-proj + residual + LN]
        x = cross_attn_block(x, mem, mem_bias, lp["wq_ca"], lp["bq_ca"],
                             lp["w_kv"], lp["b_kv"], lp["wo_ca"], lp["bo_ca"],
                             lp["ln2_g"], lp["ln2_b"], num_heads)
        # FFN + residual + LN (fully fused)
        x = ffn_block(x.reshape(B * S, D), lp["ffn_w1"], lp["ffn_b1"],
                      lp["ffn_w2"], lp["ffn_b2"],
                      lp["ln3_g"], lp["ln3_b"]).reshape(B, S, D)

    V = fp["embed_wt"].shape[1]
    logits = ln_logits(x.reshape(B * S, D), fp["norm_g"], fp["norm_b"], fp["embed_wt"])
    return logits.reshape(B, S, V)


# ----------------------------------------------------------------------------
# Pure-JAX f32 reference (mirrors the PyTorch forward, for validation)
# ----------------------------------------------------------------------------
def ref_forward(params, tgt_ids, memory, tgt_mask, memory_mask, num_heads):
    HP = jax.lax.Precision.HIGHEST

    def lin(x, w, b):
        return jnp.dot(x, w, precision=HP) + b

    def ln(x, g, b, eps=1e-5):
        m = x.mean(-1, keepdims=True)
        v = ((x - m) ** 2).mean(-1, keepdims=True)
        return (x - m) / jnp.sqrt(v + eps) * g + b

    def mha(p, q_in, k_in, v_in, mask):
        B, Sq, D = q_in.shape
        Skv = k_in.shape[1]
        Dh = D // num_heads
        q = lin(q_in, p["wq"], p["bq"]).reshape(B, Sq, num_heads, Dh).transpose(0, 2, 1, 3)
        k = lin(k_in, p["wk"], p["bk"]).reshape(B, Skv, num_heads, Dh).transpose(0, 2, 1, 3)
        v = lin(v_in, p["wv"], p["bv"]).reshape(B, Skv, num_heads, Dh).transpose(0, 2, 1, 3)
        s = jnp.einsum("bhqd,bhkd->bhqk", q, k, precision=HP) / (Dh ** 0.5)
        s = jnp.where(mask[None, None] == 0, -jnp.inf, s)
        a = jax.nn.softmax(s, axis=-1)
        ctx = jnp.einsum("bhqk,bhkd->bhqd", a, v, precision=HP)
        ctx = ctx.transpose(0, 2, 1, 3).reshape(B, Sq, D)
        return lin(ctx, p["wo"], p["bo"])

    x = jnp.take(params["embed_w"], tgt_ids, axis=0)
    x = x + params["pos_embed"][:, : tgt_ids.shape[1], :]
    for p in params["layers"]:
        x = ln(x + mha(p["self_attn"], x, x, x, tgt_mask), p["ln1_g"], p["ln1_b"])
        x = ln(x + mha(p["cross_attn"], x, memory, memory, memory_mask), p["ln2_g"], p["ln2_b"])
        h = jax.nn.relu(lin(x, p["ffn_w1"], p["ffn_b1"]))
        x = ln(x + lin(h, p["ffn_w2"], p["ffn_b2"]), p["ln3_g"], p["ln3_b"])
    x = ln(x, params["norm_g"], params["norm_b"])
    return jnp.dot(x, params["embed_w"].T, precision=HP)


# ----------------------------------------------------------------------------
# Deterministic parameter initialization (shapes match the PyTorch module)
# ----------------------------------------------------------------------------
def init_params(seed, vocab, embed_dim, ff_dim, num_layers, max_seq_len):
    root = jax.random.PRNGKey(seed)
    counter = iter(range(100000))

    def nk():
        return jax.random.fold_in(root, next(counter))

    def dense(din, dout):
        return (jax.random.normal(nk(), (din, dout), jnp.float32) * 0.05,
                jax.random.normal(nk(), (dout,), jnp.float32) * 0.05)

    def attn_params():
        wq, bq = dense(embed_dim, embed_dim)
        wk, bk = dense(embed_dim, embed_dim)
        wv, bv = dense(embed_dim, embed_dim)
        wo, bo = dense(embed_dim, embed_dim)
        return {"wq": wq, "bq": bq, "wk": wk, "bk": bk,
                "wv": wv, "bv": bv, "wo": wo, "bo": bo}

    layers = []
    for _ in range(num_layers):
        w1, b1 = dense(embed_dim, ff_dim)
        w2, b2 = dense(ff_dim, embed_dim)
        layers.append({
            "self_attn": attn_params(),
            "cross_attn": attn_params(),
            "ffn_w1": w1, "ffn_b1": b1, "ffn_w2": w2, "ffn_b2": b2,
            "ln1_g": jnp.ones((embed_dim,), jnp.float32),
            "ln1_b": jnp.zeros((embed_dim,), jnp.float32),
            "ln2_g": jnp.ones((embed_dim,), jnp.float32),
            "ln2_b": jnp.zeros((embed_dim,), jnp.float32),
            "ln3_g": jnp.ones((embed_dim,), jnp.float32),
            "ln3_b": jnp.zeros((embed_dim,), jnp.float32),
        })

    return {
        "embed_w": jax.random.normal(nk(), (vocab, embed_dim), jnp.float32) * 0.05,
        "pos_embed": jax.random.normal(nk(), (1, max_seq_len, embed_dim), jnp.float32) * 0.02,
        "layers": layers,
        "norm_g": jnp.ones((embed_dim,), jnp.float32),
        "norm_b": jnp.zeros((embed_dim,), jnp.float32),
    }


# ----------------------------------------------------------------------------
if __name__ == "__main__":
    VOCAB = 32
    EMBED_DIM = 32
    NUM_HEADS = 4          # head_dim = 8
    FF_DIM = 64
    NUM_LAYERS = 2
    MAX_SEQ_LEN = 16
    B, S_TGT, S_MEM = 2, 8, 8

    key = jax.random.PRNGKey(0)
    k_tgt, k_mem = jax.random.split(key)
    tgt_ids = jax.random.randint(k_tgt, (B, S_TGT), 0, VOCAB, dtype=jnp.int32)
    memory = jax.random.normal(k_mem, (B, S_MEM, EMBED_DIM), jnp.float32)

    # causal tgt_mask; memory_mask = all ones (i.e. None in the PyTorch module)
    tgt_mask = jnp.tril(jnp.ones((S_TGT, S_TGT), jnp.float32))
    memory_mask = jnp.ones((S_TGT, S_MEM), jnp.float32)

    params = init_params(0, VOCAB, EMBED_DIM, FF_DIM, NUM_LAYERS, MAX_SEQ_LEN)
    fused = prepare_params(params)   # one-time: fuse QKV/KV, bf16 weights, W_embed^T

    fwd = jax.jit(decoder_forward, static_argnums=5)
    logits = fwd(fused, tgt_ids, memory, tgt_mask, memory_mask, NUM_HEADS)
    logits = jax.block_until_ready(logits)

    ref = ref_forward(params, tgt_ids, memory, tgt_mask, memory_mask, NUM_HEADS)
    ref = jax.block_until_ready(ref)

    assert logits.shape == (B, S_TGT, VOCAB), logits.shape
    assert bool(jnp.all(jnp.isfinite(logits)))
    assert bool(jnp.allclose(logits, ref, rtol=2e-2, atol=2e-2)), float(
        jnp.max(jnp.abs(logits - ref)))

    print("KERNEL_OK")
</pallas_src>

<mosaic_0001>
module attributes {stable_mosaic.version = 11 : i64} {
  func.func @_self_attn_kernel(%arg0: i32, %arg1: memref<1x8x32xf32, #tpu.memory_space<vmem>>, %arg2: memref<8x8xf32, #tpu.memory_space<vmem>>, %arg3: memref<32x96xbf16, #tpu.memory_space<vmem>>, %arg4: memref<1x96xf32, #tpu.memory_space<vmem>>, %arg5: memref<32x32xbf16, #tpu.memory_space<vmem>>, %arg6: memref<1x32xf32, #tpu.memory_space<vmem>>, %arg7: memref<1x32xf32, #tpu.memory_space<vmem>>, %arg8: memref<1x32xf32, #tpu.memory_space<vmem>>, %arg9: memref<1x8x32xf32, #tpu.memory_space<vmem>>) attributes {dimension_semantics = [#tpu.dimension_semantics<parallel>], iteration_bounds = array<i64: 2>, scalar_prefetch = 0 : i64, scratch_operands = 0 : i64, tpu.core_type = #tpu.core_type<tc>, window_params = [{transform_indices = @transform_0, window_bounds = array<i64: 1, 8, 32>}, {pipeline_mode = #tpu.pipeline_mode<synchronous>, transform_indices = @transform_1, window_bounds = array<i64: 8, 8>}, {pipeline_mode = #tpu.pipeline_mode<synchronous>, transform_indices = @transform_2, window_bounds = array<i64: 32, 96>}, {pipeline_mode = #tpu.pipeline_mode<synchronous>, transform_indices = @transform_3, window_bounds = array<i64: 1, 96>}, {pipeline_mode = #tpu.pipeline_mode<synchronous>, transform_indices = @transform_4, window_bounds = array<i64: 32, 32>}, {pipeline_mode = #tpu.pipeline_mode<synchronous>, transform_indices = @transform_5, window_bounds = array<i64: 1, 32>}, {pipeline_mode = #tpu.pipeline_mode<synchronous>, transform_indices = @transform_6, window_bounds = array<i64: 1, 32>}, {pipeline_mode = #tpu.pipeline_mode<synchronous>, transform_indices = @transform_7, window_bounds = array<i64: 1, 32>}, {transform_indices = @transform_8, window_bounds = array<i64: 1, 8, 32>}]} {
    %c0 = arith.constant 0 : index
    %c0_0 = arith.constant 0 : index
    %c0_1 = arith.constant 0 : index
    %0 = vector.load %arg1[%c0, %c0_0, %c0_1] : memref<1x8x32xf32, #tpu.memory_space<vmem>>, vector<1x8x32xf32>
    %1 = vector.shape_cast %0 : vector<1x8x32xf32> to vector<8x32xf32>
    %2 = arith.truncf %1 : vector<8x32xf32> to vector<8x32xbf16>
    %c0_2 = arith.constant 0 : index
    %c0_3 = arith.constant 0 : index
    %3 = vector.load %arg3[%c0_2, %c0_3] : memref<32x96xbf16, #tpu.memory_space<vmem>>, vector<32x96xbf16>
    %cst = arith.constant dense<0.000000e+00> : vector<8x96xf32>
    %4 = tpu.matmul %2, %3, %cst {dimension_numbers = #tpu.dot_dimension_numbers<[1], [0], [0], [1], [0, 0, 1, 1], [], []>} : vector<8x32xbf16>, vector<32x96xbf16>, vector<8x96xf32> -> vector<8x96xf32>
    %c0_4 = arith.constant 0 : index
    %c0_5 = arith.constant 0 : index
    %5 = vector.load %arg4[%c0_4, %c0_5] : memref<1x96xf32, #tpu.memory_space<vmem>>, vector<1x96xf32>
    %6 = vector.broadcast %5 : vector<1x96xf32> to vector<8x96xf32>
    %7 = arith.addf %4, %6 : vector<8x96xf32>
    %8 = vector.extract_strided_slice %7 {offsets = [0, 0], sizes = [8, 32], strides = [1, 1]} : vector<8x96xf32> to vector<8x32xf32>
    %9 = vector.extract_strided_slice %7 {offsets = [0, 32], sizes = [8, 32], strides = [1, 1]} : vector<8x96xf32> to vector<8x32xf32>
    %10 = vector.extract_strided_slice %7 {offsets = [0, 64], sizes = [8, 32], strides = [1, 1]} : vector<8x96xf32> to vector<8x32xf32>
    %c0_6 = arith.constant 0 : index
    %c0_7 = arith.constant 0 : index
    %11 = vector.load %arg2[%c0_6, %c0_7] : memref<8x8xf32, #tpu.memory_space<vmem>>, vector<8x8xf32>
    %cst_8 = arith.constant 0.000000e+00 : f32
    %12 = vector.broadcast %cst_8 : f32 to vector<8x32xf32>
    %13 = vector.extract_strided_slice %8 {offsets = [0, 0], sizes = [8, 8], strides = [1, 1]} : vector<8x32xf32> to vector<8x8xf32>
    %14 = arith.truncf %13 : vector<8x8xf32> to vector<8x8xbf16>
    %15 = vector.extract_strided_slice %9 {offsets = [0, 0], sizes = [8, 8], strides = [1, 1]} : vector<8x32xf32> to vector<8x8xf32>
    %16 = arith.truncf %15 : vector<8x8xf32> to vector<8x8xbf16>
    %17 = vector.extract_strided_slice %10 {offsets = [0, 0], sizes = [8, 8], strides = [1, 1]} : vector<8x32xf32> to vector<8x8xf32>
    %18 = arith.truncf %17 : vector<8x8xf32> to vector<8x8xbf16>
    %19 = tpu.transpose %16, [1, 0] : vector<8x8xbf16> -> vector<8x8xbf16>
    %cst_9 = arith.constant dense<0.000000e+00> : vector<8x8xf32>
    %20 = tpu.matmul %14, %19, %cst_9 {dimension_numbers = #tpu.dot_dimension_numbers<[1], [0], [0], [1], [0, 0, 1, 1], [], []>} : vector<8x8xbf16>, vector<8x8xbf16>, vector<8x8xf32> -> vector<8x8xf32>
    %cst_10 = arith.constant 0.353553385 : f32
    %21 = vector.broadcast %cst_10 : f32 to vector<8x8xf32>
    %22 = arith.mulf %20, %21 : vector<8x8xf32>
    %23 = arith.addf %22, %11 : vector<8x8xf32>
    %cst_11 = arith.constant dense<0xFF800000> : vector<8xf32>
    %24 = vector.multi_reduction <maximumf>, %23, %cst_11 [1] : vector<8x8xf32> to vector<8xf32>
    %25 = vector.shape_cast %24 : vector<8xf32> to vector<8x1xf32>
    %26 = vector.broadcast %25 : vector<8x1xf32> to vector<8x8xf32>
    %27 = arith.subf %23, %26 : vector<8x8xf32>
    %28 = math.exp %27 : vector<8x8xf32>
    %cst_12 = arith.constant dense<0.000000e+00> : vector<8xf32>
    %29 = vector.multi_reduction <add>, %28, %cst_12 [1] : vector<8x8xf32> to vector<8xf32>
    %30 = vector.shape_cast %29 : vector<8xf32> to vector<8x1xf32>
    %31 = tpu.reciprocal %30 {approx = true} : vector<8x1xf32> -> vector<8x1xf32>
    %32 = vector.broadcast %31 : vector<8x1xf32> to vector<8x8xf32>
    %33 = arith.mulf %28, %32 : vector<8x8xf32>
    %34 = arith.truncf %33 : vector<8x8xf32> to vector<8x8xbf16>
    %cst_13 = arith.constant dense<0.000000e+00> : vector<8x8xf32>
    %35 = tpu.matmul %34, %18, %cst_13 {dimension_numbers = #tpu.dot_dimension_numbers<[1], [0], [0], [1], [0, 0, 1, 1], [], []>} : vector<8x8xbf16>, vector<8x8xbf16>, vector<8x8xf32> -> vector<8x8xf32>
    %36 = arith.truncf %35 : vector<8x8xf32> to vector<8x8xbf16>
    %c0_14 = arith.constant 0 : index
    %c0_15 = arith.constant 0 : index
    %37 = vector.load %arg5[%c0_14, %c0_15] : memref<32x32xbf16, #tpu.memory_space<vmem>>, vector<8x32xbf16>
    %cst_16 = arith.constant dense<0.000000e+00> : vector<8x32xf32>
    %38 = tpu.matmul %36, %37, %cst_16 {dimension_numbers = #tpu.dot_dimension_numbers<[1], [0], [0], [1], [0, 0, 1, 1], [], []>} : vector<8x8xbf16>, vector<8x32xbf16>, vector<8x32xf32> -> vector<8x32xf32>
    %39 = arith.addf %12, %38 : vector<8x32xf32>
    %40 = vector.extract_strided_slice %8 {offsets = [0, 8], sizes = [8, 8], strides = [1, 1]} : vector<8x32xf32> to vector<8x8xf32>
    %41 = arith.truncf %40 : vector<8x8xf32> to vector<8x8xbf16>
    %42 = vector.extract_strided_slice %9 {offsets = [0, 8], sizes = [8, 8], strides = [1, 1]} : vector<8x32xf32> to vector<8x8xf32>
    %43 = arith.truncf %42 : vector<8x8xf32> to vector<8x8xbf16>
    %44 = vector.extract_strided_slice %10 {offsets = [0, 8], sizes = [8, 8], strides = [1, 1]} : vector<8x32xf32> to vector<8x8xf32>
    %45 = arith.truncf %44 : vector<8x8xf32> to vector<8x8xbf16>
    %46 = tpu.transpose %43, [1, 0] : vector<8x8xbf16> -> vector<8x8xbf16>
    %cst_17 = arith.constant dense<0.000000e+00> : vector<8x8xf32>
    %47 = tpu.matmul %41, %46, %cst_17 {dimension_numbers = #tpu.dot_dimension_numbers<[1], [0], [0], [1], [0, 0, 1, 1], [], []>} : vector<8x8xbf16>, vector<8x8xbf16>, vector<8x8xf32> -> vector<8x8xf32>
    %cst_18 = arith.constant 0.353553385 : f32
    %48 = vector.broadcast %cst_18 : f32 to vector<8x8xf32>
    %49 = arith.mulf %47, %48 : vector<8x8xf32>
    %50 = arith.addf %49, %11 : vector<8x8xf32>
    %cst_19 = arith.constant dense<0xFF800000> : vector<8xf32>
    %51 = vector.multi_reduction <maximumf>, %50, %cst_19 [1] : vector<8x8xf32> to vector<8xf32>
    %52 = vector.shape_cast %51 : vector<8xf32> to vector<8x1xf32>
    %53 = vector.broadcast %52 : vector<8x1xf32> to vector<8x8xf32>
    %54 = arith.subf %50, %53 : vector<8x8xf32>
    %55 = math.exp %54 : vector<8x8xf32>
    %cst_20 = arith.constant dense<0.000000e+00> : vector<8xf32>
    %56 = vector.multi_reduction <add>, %55, %cst_20 [1] : vector<8x8xf32> to vector<8xf32>
    %57 = vector.shape_cast %56 : vector<8xf32> to vector<8x1xf32>
    %58 = tpu.reciprocal %57 {approx = true} : vector<8x1xf32> -> vector<8x1xf32>
    %59 = vector.broadcast %58 : vector<8x1xf32> to vector<8x8xf32>
    %60 = arith.mulf %55, %59 : vector<8x8xf32>
    %61 = arith.truncf %60 : vector<8x8xf32> to vector<8x8xbf16>
    %cst_21 = arith.constant dense<0.000000e+00> : vector<8x8xf32>
    %62 = tpu.matmul %61, %45, %cst_21 {dimension_numbers = #tpu.dot_dimension_numbers<[1], [0], [0], [1], [0, 0, 1, 1], [], []>} : vector<8x8xbf16>, vector<8x8xbf16>, vector<8x8xf32> -> vector<8x8xf32>
    %63 = arith.truncf %62 : vector<8x8xf32> to vector<8x8xbf16>
    %c8 = arith.constant 8 : index
    %c0_22 = arith.constant 0 : index
    %64 = vector.load %arg5[%c8, %c0_22] : memref<32x32xbf16, #tpu.memory_space<vmem>>, vector<8x32xbf16>
    %cst_23 = arith.constant dense<0.000000e+00> : vector<8x32xf32>
    %65 = tpu.matmul %63, %64, %cst_23 {dimension_numbers = #tpu.dot_dimension_numbers<[1], [0], [0], [1], [0, 0, 1, 1], [], []>} : vector<8x8xbf16>, vector<8x32xbf16>, vector<8x32xf32> -> vector<8x32xf32>
    %66 = arith.addf %39, %65 : vector<8x32xf32>
    %67 = vector.extract_strided_slice %8 {offsets = [0, 16], sizes = [8, 8], strides = [1, 1]} : vector<8x32xf32> to vector<8x8xf32>
    %68 = arith.truncf %67 : vector<8x8xf32> to vector<8x8xbf16>
    %69 = vector.extract_strided_slice %9 {offsets = [0, 16], sizes = [8, 8], strides = [1, 1]} : vector<8x32xf32> to vector<8x8xf32>
    %70 = arith.truncf %69 : vector<8x8xf32> to vector<8x8xbf16>
    %71 = vector.extract_strided_slice %10 {offsets = [0, 16], sizes = [8, 8], strides = [1, 1]} : vector<8x32xf32> to vector<8x8xf32>
    %72 = arith.truncf %71 : vector<8x8xf32> to vector<8x8xbf16>
    %73 = tpu.transpose %70, [1, 0] : vector<8x8xbf16> -> vector<8x8xbf16>
    %cst_24 = arith.constant dense<0.000000e+00> : vector<8x8xf32>
    %74 = tpu.matmul %68, %73, %cst_24 {dimension_numbers = #tpu.dot_dimension_numbers<[1], [0], [0], [1], [0, 0, 1, 1], [], []>} : vector<8x8xbf16>, vector<8x8xbf16>, vector<8x8xf32> -> vector<8x8xf32>
    %cst_25 = arith.constant 0.353553385 : f32
    %75 = vector.broadcast %cst_25 : f32 to vector<8x8xf32>
    %76 = arith.mulf %74, %75 : vector<8x8xf32>
    %77 = arith.addf %76, %11 : vector<8x8xf32>
    %cst_26 = arith.constant dense<0xFF800000> : vector<8xf32>
    %78 = vector.multi_reduction <maximumf>, %77, %cst_26 [1] : vector<8x8xf32> to vector<8xf32>
    %79 = vector.shape_cast %78 : vector<8xf32> to vector<8x1xf32>
    %80 = vector.broadcast %79 : vector<8x1xf32> to vector<8x8xf32>
    %81 = arith.subf %77, %80 : vector<8x8xf32>
    %82 = math.exp %81 : vector<8x8xf32>
    %cst_27 = arith.constant dense<0.000000e+00> : vector<8xf32>
    %83 = vector.multi_reduction <add>, %82, %cst_27 [1] : vector<8x8xf32> to vector<8xf32>
    %84 = vector.shape_cast %83 : vector<8xf32> to vector<8x1xf32>
    %85 = tpu.reciprocal %84 {approx = true} : vector<8x1xf32> -> vector<8x1xf32>
    %86 = vector.broadcast %85 : vector<8x1xf32> to vector<8x8xf32>
    %87 = arith.mulf %82, %86 : vector<8x8xf32>
    %88 = arith.truncf %87 : vector<8x8xf32> to vector<8x8xbf16>
    %cst_28 = arith.constant dense<0.000000e+00> : vector<8x8xf32>
    %89 = tpu.matmul %88, %72, %cst_28 {dimension_numbers = #tpu.dot_dimension_numbers<[1], [0], [0], [1], [0, 0, 1, 1], [], []>} : vector<8x8xbf16>, vector<8x8xbf16>, vector<8x8xf32> -> vector<8x8xf32>
    %90 = arith.truncf %89 : vector<8x8xf32> to vector<8x8xbf16>
    %c16 = arith.constant 16 : index
    %c0_29 = arith.constant 0 : index
    %91 = vector.load %arg5[%c16, %c0_29] : memref<32x32xbf16, #tpu.memory_space<vmem>>, vector<8x32xbf16>
    %cst_30 = arith.constant dense<0.000000e+00> : vector<8x32xf32>
    %92 = tpu.matmul %90, %91, %cst_30 {dimension_numbers = #tpu.dot_dimension_numbers<[1], [0], [0], [1], [0, 0, 1, 1], [], []>} : vector<8x8xbf16>, vector<8x32xbf16>, vector<8x32xf32> -> vector<8x32xf32>
    %93 = arith.addf %66, %92 : vector<8x32xf32>
    %94 = vector.extract_strided_slice %8 {offsets = [0, 24], sizes = [8, 8], strides = [1, 1]} : vector<8x32xf32> to vector<8x8xf32>
    %95 = arith.truncf %94 : vector<8x8xf32> to vector<8x8xbf16>
    %96 = vector.extract_strided_slice %9 {offsets = [0, 24], sizes = [8, 8], strides = [1, 1]} : vector<8x32xf32> to vector<8x8xf32>
    %97 = arith.truncf %96 : vector<8x8xf32> to vector<8x8xbf16>
    %98 = vector.extract_strided_slice %10 {offsets = [0, 24], sizes = [8, 8], strides = [1, 1]} : vector<8x32xf32> to vector<8x8xf32>
    %99 = arith.truncf %98 : vector<8x8xf32> to vector<8x8xbf16>
    %100 = tpu.transpose %97, [1, 0] : vector<8x8xbf16> -> vector<8x8xbf16>
    %cst_31 = arith.constant dense<0.000000e+00> : vector<8x8xf32>
    %101 = tpu.matmul %95, %100, %cst_31 {dimension_numbers = #tpu.dot_dimension_numbers<[1], [0], [0], [1], [0, 0, 1, 1], [], []>} : vector<8x8xbf16>, vector<8x8xbf16>, vector<8x8xf32> -> vector<8x8xf32>
    %cst_32 = arith.constant 0.353553385 : f32
    %102 = vector.broadcast %cst_32 : f32 to vector<8x8xf32>
    %103 = arith.mulf %101, %102 : vector<8x8xf32>
    %104 = arith.addf %103, %11 : vector<8x8xf32>
    %cst_33 = arith.constant dense<0xFF800000> : vector<8xf32>
    %105 = vector.multi_reduction <maximumf>, %104, %cst_33 [1] : vector<8x8xf32> to vector<8xf32>
    %106 = vector.shape_cast %105 : vector<8xf32> to vector<8x1xf32>
    %107 = vector.broadcast %106 : vector<8x1xf32> to vector<8x8xf32>
    %108 = arith.subf %104, %107 : vector<8x8xf32>
    %109 = math.exp %108 : vector<8x8xf32>
    %cst_34 = arith.constant dense<0.000000e+00> : vector<8xf32>
    %110 = vector.multi_reduction <add>, %109, %cst_34 [1] : vector<8x8xf32> to vector<8xf32>
    %111 = vector.shape_cast %110 : vector<8xf32> to vector<8x1xf32>
    %112 = tpu.reciprocal %111 {approx = true} : vector<8x1xf32> -> vector<8x1xf32>
    %113 = vector.broadcast %112 : vector<8x1xf32> to vector<8x8xf32>
    %114 = arith.mulf %109, %113 : vector<8x8xf32>
    %115 = arith.truncf %114 : vector<8x8xf32> to vector<8x8xbf16>
    %cst_35 = arith.constant dense<0.000000e+00> : vector<8x8xf32>
    %116 = tpu.matmul %115, %99, %cst_35 {dimension_numbers = #tpu.dot_dimension_numbers<[1], [0], [0], [1], [0, 0, 1, 1], [], []>} : vector<8x8xbf16>, vector<8x8xbf16>, vector<8x8xf32> -> vector<8x8xf32>
    %117 = arith.truncf %116 : vector<8x8xf32> to vector<8x8xbf16>
    %c24 = arith.constant 24 : index
    %c0_36 = arith.constant 0 : index
    %118 = vector.load %arg5[%c24, %c0_36] : memref<32x32xbf16, #tpu.memory_space<vmem>>, vector<8x32xbf16>
    %cst_37 = arith.constant dense<0.000000e+00> : vector<8x32xf32>
    %119 = tpu.matmul %117, %118, %cst_37 {dimension_numbers = #tpu.dot_dimension_numbers<[1], [0], [0], [1], [0, 0, 1, 1], [], []>} : vector<8x8xbf16>, vector<8x32xbf16>, vector<8x32xf32> -> vector<8x32xf32>
    %120 = arith.addf %93, %119 : vector<8x32xf32>
    %c0_38 = arith.constant 0 : index
    %c0_39 = arith.constant 0 : index
    %121 = vector.load %arg6[%c0_38, %c0_39] : memref<1x32xf32, #tpu.memory_space<vmem>>, vector<1x32xf32>
    %122 = vector.broadcast %121 : vector<1x32xf32> to vector<8x32xf32>
    %123 = arith.addf %120, %122 : vector<8x32xf32>
    %124 = arith.addf %123, %1 : vector<8x32xf32>
    %c0_40 = arith.constant 0 : index
    %c0_41 = arith.constant 0 : index
    %125 = vector.load %arg7[%c0_40, %c0_41] : memref<1x32xf32, #tpu.memory_space<vmem>>, vector<1x32xf32>
    %c0_42 = arith.constant 0 : index
    %c0_43 = arith.constant 0 : index
    %126 = vector.load %arg8[%c0_42, %c0_43] : memref<1x32xf32, #tpu.memory_space<vmem>>, vector<1x32xf32>
    %cst_44 = arith.constant dense<0.000000e+00> : vector<8xf32>
    %127 = vector.multi_reduction <add>, %124, %cst_44 [1] : vector<8x32xf32> to vector<8xf32>
    %128 = vector.shape_cast %127 : vector<8xf32> to vector<8x1xf32>
    %cst_45 = arith.constant 3.200000e+01 : f32
    %129 = vector.broadcast %cst_45 : f32 to vector<8x1xf32>
    %130 = arith.divf %128, %129 : vector<8x1xf32>
    %131 = vector.broadcast %130 : vector<8x1xf32> to vector<8x32xf32>
    %132 = arith.subf %124, %131 : vector<8x32xf32>
    %133 = arith.mulf %132, %132 : vector<8x32xf32>
    %cst_46 = arith.constant dense<0.000000e+00> : vector<8xf32>
    %134 = vector.multi_reduction <add>, %133, %cst_46 [1] : vector<8x32xf32> to vector<8xf32>
    %135 = vector.shape_cast %134 : vector<8xf32> to vector<8x1xf32>
    %cst_47 = arith.constant 3.200000e+01 : f32
    %136 = vector.broadcast %cst_47 : f32 to vector<8x1xf32>
    %137 = arith.divf %135, %136 : vector<8x1xf32>
    %138 = vector.broadcast %130 : vector<8x1xf32> to vector<8x32xf32>
    %139 = arith.subf %124, %138 : vector<8x32xf32>
    %cst_48 = arith.constant 9.99999974E-6 : f32
    %140 = vector.broadcast %cst_48 : f32 to vector<8x1xf32>
    %141 = arith.addf %137, %140 : vector<8x1xf32>
    %142 = math.rsqrt %141 : vector<8x1xf32>
    %143 = vector.broadcast %142 : vector<8x1xf32> to vector<8x32xf32>
    %144 = arith.mulf %139, %143 : vector<8x32xf32>
    %145 = vector.broadcast %125 : vector<1x32xf32> to vector<8x32xf32>
    %146 = arith.mulf %144, %145 : vector<8x32xf32>
    %147 = vector.broadcast %126 : vector<1x32xf32> to vector<8x32xf32>
    %148 = arith.addf %146, %147 : vector<8x32xf32>
    %c0_49 = arith.constant 0 : index
    %c0_50 = arith.constant 0 : index
    %c0_51 = arith.constant 0 : index
    %149 = vector.load %arg9[%c0_49, %c0_50, %c0_51] : memref<1x8x32xf32, #tpu.memory_space<vmem>>, vector<1x8x32xf32>
    %150 = vector.shape_cast %149 : vector<1x8x32xf32> to vector<8x32xf32>
    %151 = vector.shape_cast %148 : vector<8x32xf32> to vector<1x8x32xf32>
    tpu.vector_store %arg9[%c0_49, %c0_50, %c0_51], %151 {strides = array<i32>} : memref<1x8x32xf32, #tpu.memory_space<vmem>>, vector<1x8x32xf32>,
    return
  }
  func.func @transform_0(%arg0: i32) -> (i32, i32, i32) {
    %c0_i32 = arith.constant 0 : i32
    %c0_i32_0 = arith.constant 0 : i32
    %c0_i32_1 = arith.constant 0 : i32
    return %arg0, %c0_i32, %c0_i32_0 : i32, i32, i32
  }
  func.func @transform_1(%arg0: i32) -> (i32, i32) {
    %c0_i32 = arith.constant 0 : i32
    %c0_i32_0 = arith.constant 0 : i32
    %c0_i32_1 = arith.constant 0 : i32
    return %c0_i32, %c0_i32_0 : i32, i32
  }
  func.func @transform_2(%arg0: i32) -> (i32, i32) {
    %c0_i32 = arith.constant 0 : i32
    %c0_i32_0 = arith.constant 0 : i32
    %c0_i32_1 = arith.constant 0 : i32
    return %c0_i32, %c0_i32_0 : i32, i32
  }
  func.func @transform_3(%arg0: i32) -> (i32, i32) {
    %c0_i32 = arith.constant 0 : i32
    %c0_i32_0 = arith.constant 0 : i32
    %c0_i32_1 = arith.constant 0 : i32
    return %c0_i32, %c0_i32_0 : i32, i32
  }
  func.func @transform_4(%arg0: i32) -> (i32, i32) {
    %c0_i32 = arith.constant 0 : i32
    %c0_i32_0 = arith.constant 0 : i32
    %c0_i32_1 = arith.constant 0 : i32
    return %c0_i32, %c0_i32_0 : i32, i32
  }
  func.func @transform_5(%arg0: i32) -> (i32, i32) {
    %c0_i32 = arith.constant 0 : i32
    %c0_i32_0 = arith.constant 0 : i32
    %c0_i32_1 = arith.constant 0 : i32
    return %c0_i32, %c0_i32_0 : i32, i32
  }
  func.func @transform_6(%arg0: i32) -> (i32, i32) {
    %c0_i32 = arith.constant 0 : i32
    %c0_i32_0 = arith.constant 0 : i32
    %c0_i32_1 = arith.constant 0 : i32
    return %c0_i32, %c0_i32_0 : i32, i32
  }
  func.func @transform_7(%arg0: i32) -> (i32, i32) {
    %c0_i32 = arith.constant 0 : i32
    %c0_i32_0 = arith.constant 0 : i32
    %c0_i32_1 = arith.constant 0 : i32
    return %c0_i32, %c0_i32_0 : i32, i32
  }
  func.func @transform_8(%arg0: i32) -> (i32, i32, i32) {
    %c0_i32 = arith.constant 0 : i32
    %c0_i32_0 = arith.constant 0 : i32
    %c0_i32_1 = arith.constant 0 : i32
    return %arg0, %c0_i32, %c0_i32_0 : i32, i32, i32
  }
}

module attributes {stable_mosaic.version = 11 : i64} {
  func.func @_cross_attn_kernel(%arg0: i32, %arg1: memref<1x8x32xf32, #tpu.memory_space<vmem>>, %arg2: memref<1x8x32xf32, #tpu.memory_space<vmem>>, %arg3: memref<8x8xf32, #tpu.memory_space<vmem>>, %arg4: memref<32x32xbf16, #tpu.memory_space<vmem>>, %arg5: memref<1x32xf32, #tpu.memory_space<vmem>>, %arg6: memref<32x64xbf16, #tpu.memory_space<vmem>>, %arg7: memref<1x64xf32, #tpu.memory_space<vmem>>, %arg8: memref<32x32xbf16, #tpu.memory_space<vmem>>, %arg9: memref<1x32xf32, #tpu.memory_space<vmem>>, %arg10: memref<1x32xf32, #tpu.memory_space<vmem>>, %arg11: memref<1x32xf32, #tpu.memory_space<vmem>>, %arg12: memref<1x8x32xf32, #tpu.memory_space<vmem>>) attributes {dimension_semantics = [#tpu.dimension_semantics<parallel>], iteration_bounds = array<i64: 2>, scalar_prefetch = 0 : i64, scratch_operands = 0 : i64, tpu.core_type = #tpu.core_type<tc>, window_params = [{transform_indices = @transform_0, window_bounds = array<i64: 1, 8, 32>}, {transform_indices = @transform_1, window_bounds = array<i64: 1, 8, 32>}, {pipeline_mode = #tpu.pipeline_mode<synchronous>, transform_indices = @transform_2, window_bounds = array<i64: 8, 8>}, {pipeline_mode = #tpu.pipeline_mode<synchronous>, transform_indices = @transform_3, window_bounds = array<i64: 32, 32>}, {pipeline_mode = #tpu.pipeline_mode<synchronous>, transform_indices = @transform_4, window_bounds = array<i64: 1, 32>}, {pipeline_mode = #tpu.pipeline_mode<synchronous>, transform_indices = @transform_5, window_bounds = array<i64: 32, 64>}, {pipeline_mode = #tpu.pipeline_mode<synchronous>, transform_indices = @transform_6, window_bounds = array<i64: 1, 64>}, {pipeline_mode = #tpu.pipeline_mode<synchronous>, transform_indices = @transform_7, window_bounds = array<i64: 32, 32>}, {pipeline_mode = #tpu.pipeline_mode<synchronous>, transform_indices = @transform_8, window_bounds = array<i64: 1, 32>}, {pipeline_mode = #tpu.pipeline_mode<synchronous>, transform_indices = @transform_9, window_bounds = array<i64: 1, 32>}, {pipeline_mode = #tpu.pipeline_mode<synchronous>, transform_indices = @transform_10, window_bounds = array<i64: 1, 32>}, {transform_indices = @transform_11, window_bounds = array<i64: 1, 8, 32>}]} {
    %c0 = arith.constant 0 : index
    %c0_0 = arith.constant 0 : index
    %c0_1 = arith.constant 0 : index
    %0 = vector.load %arg1[%c0, %c0_0, %c0_1] : memref<1x8x32xf32, #tpu.memory_space<vmem>>, vector<1x8x32xf32>
    %1 = vector.shape_cast %0 : vector<1x8x32xf32> to vector<8x32xf32>
    %c0_2 = arith.constant 0 : index
    %c0_3 = arith.constant 0 : index
    %c0_4 = arith.constant 0 : index
    %2 = vector.load %arg2[%c0_2, %c0_3, %c0_4] : memref<1x8x32xf32, #tpu.memory_space<vmem>>, vector<1x8x32xf32>
    %3 = vector.shape_cast %2 : vector<1x8x32xf32> to vector<8x32xf32>
    %4 = arith.truncf %1 : vector<8x32xf32> to vector<8x32xbf16>
    %c0_5 = arith.constant 0 : index
    %c0_6 = arith.constant 0 : index
    %5 = vector.load %arg4[%c0_5, %c0_6] : memref<32x32xbf16, #tpu.memory_space<vmem>>, vector<32x32xbf16>
    %cst = arith.constant dense<0.000000e+00> : vector<8x32xf32>
    %6 = tpu.matmul %4, %5, %cst {dimension_numbers = #tpu.dot_dimension_numbers<[1], [0], [0], [1], [0, 0, 1, 1], [], []>} : vector<8x32xbf16>, vector<32x32xbf16>, vector<8x32xf32> -> vector<8x32xf32>
    %c0_7 = arith.constant 0 : index
    %c0_8 = arith.constant 0 : index
    %7 = vector.load %arg5[%c0_7, %c0_8] : memref<1x32xf32, #tpu.memory_space<vmem>>, vector<1x32xf32>
    %8 = vector.broadcast %7 : vector<1x32xf32> to vector<8x32xf32>
    %9 = arith.addf %6, %8 : vector<8x32xf32>
    %10 = arith.truncf %3 : vector<8x32xf32> to vector<8x32xbf16>
    %c0_9 = arith.constant 0 : index
    %c0_10 = arith.constant 0 : index
    %11 = vector.load %arg6[%c0_9, %c0_10] : memref<32x64xbf16, #tpu.memory_space<vmem>>, vector<32x64xbf16>
    %cst_11 = arith.constant dense<0.000000e+00> : vector<8x64xf32>
    %12 = tpu.matmul %10, %11, %cst_11 {dimension_numbers = #tpu.dot_dimension_numbers<[1], [0], [0], [1], [0, 0, 1, 1], [], []>} : vector<8x32xbf16>, vector<32x64xbf16>, vector<8x64xf32> -> vector<8x64xf32>
    %c0_12 = arith.constant 0 : index
    %c0_13 = arith.constant 0 : index
    %13 = vector.load %arg7[%c0_12, %c0_13] : memref<1x64xf32, #tpu.memory_space<vmem>>, vector<1x64xf32>
    %14 = vector.broadcast %13 : vector<1x64xf32> to vector<8x64xf32>
    %15 = arith.addf %12, %14 : vector<8x64xf32>
    %16 = vector.extract_strided_slice %15 {offsets = [0, 0], sizes = [8, 32], strides = [1, 1]} : vector<8x64xf32> to vector<8x32xf32>
    %17 = vector.extract_strided_slice %15 {offsets = [0, 32], sizes = [8, 32], strides = [1, 1]} : vector<8x64xf32> to vector<8x32xf32>
    %c0_14 = arith.constant 0 : index
    %c0_15 = arith.constant 0 : index
    %18 = vector.load %arg3[%c0_14, %c0_15] : memref<8x8xf32, #tpu.memory_space<vmem>>, vector<8x8xf32>
    %cst_16 = arith.constant 0.000000e+00 : f32
    %19 = vector.broadcast %cst_16 : f32 to vector<8x32xf32>
    %20 = vector.extract_strided_slice %9 {offsets = [0, 0], sizes = [8, 8], strides = [1, 1]} : vector<8x32xf32> to vector<8x8xf32>
    %21 = arith.truncf %20 : vector<8x8xf32> to vector<8x8xbf16>
    %22 = vector.extract_strided_slice %16 {offsets = [0, 0], sizes = [8, 8], strides = [1, 1]} : vector<8x32xf32> to vector<8x8xf32>
    %23 = arith.truncf %22 : vector<8x8xf32> to vector<8x8xbf16>
    %24 = vector.extract_strided_slice %17 {offsets = [0, 0], sizes = [8, 8], strides = [1, 1]} : vector<8x32xf32> to vector<8x8xf32>
    %25 = arith.truncf %24 : vector<8x8xf32> to vector<8x8xbf16>
    %26 = tpu.transpose %23, [1, 0] : vector<8x8xbf16> -> vector<8x8xbf16>
    %cst_17 = arith.constant dense<0.000000e+00> : vector<8x8xf32>
    %27 = tpu.matmul %21, %26, %cst_17 {dimension_numbers = #tpu.dot_dimension_numbers<[1], [0], [0], [1], [0, 0, 1, 1], [], []>} : vector<8x8xbf16>, vector<8x8xbf16>, vector<8x8xf32> -> vector<8x8xf32>
    %cst_18 = arith.constant 0.353553385 : f32
    %28 = vector.broadcast %cst_18 : f32 to vector<8x8xf32>
    %29 = arith.mulf %27, %28 : vector<8x8xf32>
    %30 = arith.addf %29, %18 : vector<8x8xf32>
    %cst_19 = arith.constant dense<0xFF800000> : vector<8xf32>
    %31 = vector.multi_reduction <maximumf>, %30, %cst_19 [1] : vector<8x8xf32> to vector<8xf32>
    %32 = vector.shape_cast %31 : vector<8xf32> to vector<8x1xf32>
    %33 = vector.broadcast %32 : vector<8x1xf32> to vector<8x8xf32>
    %34 = arith.subf %30, %33 : vector<8x8xf32>
    %35 = math.exp %34 : vector<8x8xf32>
    %cst_20 = arith.constant dense<0.000000e+00> : vector<8xf32>
    %36 = vector.multi_reduction <add>, %35, %cst_20 [1] : vector<8x8xf32> to vector<8xf32>
    %37 = vector.shape_cast %36 : vector<8xf32> to vector<8x1xf32>
    %38 = tpu.reciprocal %37 {approx = true} : vector<8x1xf32> -> vector<8x1xf32>
    %39 = vector.broadcast %38 : vector<8x1xf32> to vector<8x8xf32>
    %40 = arith.mulf %35, %39 : vector<8x8xf32>
    %41 = arith.truncf %40 : vector<8x8xf32> to vector<8x8xbf16>
    %cst_21 = arith.constant dense<0.000000e+00> : vector<8x8xf32>
    %42 = tpu.matmul %41, %25, %cst_21 {dimension_numbers = #tpu.dot_dimension_numbers<[1], [0], [0], [1], [0, 0, 1, 1], [], []>} : vector<8x8xbf16>, vector<8x8xbf16>, vector<8x8xf32> -> vector<8x8xf32>
    %43 = arith.truncf %42 : vector<8x8xf32> to vector<8x8xbf16>
    %c0_22 = arith.constant 0 : index
    %c0_23 = arith.constant 0 : index
    %44 = vector.load %arg8[%c0_22, %c0_23] : memref<32x32xbf16, #tpu.memory_space<vmem>>, vector<8x32xbf16>
    %cst_24 = arith.constant dense<0.000000e+00> : vector<8x32xf32>
    %45 = tpu.matmul %43, %44, %cst_24 {dimension_numbers = #tpu.dot_dimension_numbers<[1], [0], [0], [1], [0, 0, 1, 1], [], []>} : vector<8x8xbf16>, vector<8x32xbf16>, vector<8x32xf32> -> vector<8x32xf32>
    %46 = arith.addf %19, %45 : vector<8x32xf32>
    %47 = vector.extract_strided_slice %9 {offsets = [0, 8], sizes = [8, 8], strides = [1, 1]} : vector<8x32xf32> to vector<8x8xf32>
    %48 = arith.truncf %47 : vector<8x8xf32> to vector<8x8xbf16>
    %49 = vector.extract_strided_slice %16 {offsets = [0, 8], sizes = [8, 8], strides = [1, 1]} : vector<8x32xf32> to vector<8x8xf32>
    %50 = arith.truncf %49 : vector<8x8xf32> to vector<8x8xbf16>
    %51 = vector.extract_strided_slice %17 {offsets = [0, 8], sizes = [8, 8], strides = [1, 1]} : vector<8x32xf32> to vector<8x8xf32>
    %52 = arith.truncf %51 : vector<8x8xf32> to vector<8x8xbf16>
    %53 = tpu.transpose %50, [1, 0] : vector<8x8xbf16> -> vector<8x8xbf16>
    %cst_25 = arith.constant dense<0.000000e+00> : vector<8x8xf32>
    %54 = tpu.matmul %48, %53, %cst_25 {dimension_numbers = #tpu.dot_dimension_numbers<[1], [0], [0], [1], [0, 0, 1, 1], [], []>} : vector<8x8xbf16>, vector<8x8xbf16>, vector<8x8xf32> -> vector<8x8xf32>
    %cst_26 = arith.constant 0.353553385 : f32
    %55 = vector.broadcast %cst_26 : f32 to vector<8x8xf32>
    %56 = arith.mulf %54, %55 : vector<8x8xf32>
    %57 = arith.addf %56, %18 : vector<8x8xf32>
    %cst_27 = arith.constant dense<0xFF800000> : vector<8xf32>
    %58 = vector.multi_reduction <maximumf>, %57, %cst_27 [1] : vector<8x8xf32> to vector<8xf32>
    %59 = vector.shape_cast %58 : vector<8xf32> to vector<8x1xf32>
    %60 = vector.broadcast %59 : vector<8x1xf32> to vector<8x8xf32>
    %61 = arith.subf %57, %60 : vector<8x8xf32>
    %62 = math.exp %61 : vector<8x8xf32>
    %cst_28 = arith.constant dense<0.000000e+00> : vector<8xf32>
    %63 = vector.multi_reduction <add>, %62, %cst_28 [1] : vector<8x8xf32> to vector<8xf32>
    %64 = vector.shape_cast %63 : vector<8xf32> to vector<8x1xf32>
    %65 = tpu.reciprocal %64 {approx = true} : vector<8x1xf32> -> vector<8x1xf32>
    %66 = vector.broadcast %65 : vector<8x1xf32> to vector<8x8xf32>
    %67 = arith.mulf %62, %66 : vector<8x8xf32>
    %68 = arith.truncf %67 : vector<8x8xf32> to vector<8x8xbf16>
    %cst_29 = arith.constant dense<0.000000e+00> : vector<8x8xf32>
    %69 = tpu.matmul %68, %52, %cst_29 {dimension_numbers = #tpu.dot_dimension_numbers<[1], [0], [0], [1], [0, 0, 1, 1], [], []>} : vector<8x8xbf16>, vector<8x8xbf16>, vector<8x8xf32> -> vector<8x8xf32>
    %70 = arith.truncf %69 : vector<8x8xf32> to vector<8x8xbf16>
    %c8 = arith.constant 8 : index
    %c0_30 = arith.constant 0 : index
    %71 = vector.load %arg8[%c8, %c0_30] : memref<32x32xbf16, #tpu.memory_space<vmem>>, vector<8x32xbf16>
    %cst_31 = arith.constant dense<0.000000e+00> : vector<8x32xf32>
    %72 = tpu.matmul %70, %71, %cst_31 {dimension_numbers = #tpu.dot_dimension_numbers<[1], [0], [0], [1], [0, 0, 1, 1], [], []>} : vector<8x8xbf16>, vector<8x32xbf16>, vector<8x32xf32> -> vector<8x32xf32>
    %73 = arith.addf %46, %72 : vector<8x32xf32>
    %74 = vector.extract_strided_slice %9 {offsets = [0, 16], sizes = [8, 8], strides = [1, 1]} : vector<8x32xf32> to vector<8x8xf32>
    %75 = arith.truncf %74 : vector<8x8xf32> to vector<8x8xbf16>
    %76 = vector.extract_strided_slice %16 {offsets = [0, 16], sizes = [8, 8], strides = [1, 1]} : vector<8x32xf32> to vector<8x8xf32>
    %77 = arith.truncf %76 : vector<8x8xf32> to vector<8x8xbf16>
    %78 = vector.extract_strided_slice %17 {offsets = [0, 16], sizes = [8, 8], strides = [1, 1]} : vector<8x32xf32> to vector<8x8xf32>
    %79 = arith.truncf %78 : vector<8x8xf32> to vector<8x8xbf16>
    %80 = tpu.transpose %77, [1, 0] : vector<8x8xbf16> -> vector<8x8xbf16>
    %cst_32 = arith.constant dense<0.000000e+00> : vector<8x8xf32>
    %81 = tpu.matmul %75, %80, %cst_32 {dimension_numbers = #tpu.dot_dimension_numbers<[1], [0], [0], [1], [0, 0, 1, 1], [], []>} : vector<8x8xbf16>, vector<8x8xbf16>, vector<8x8xf32> -> vector<8x8xf32>
    %cst_33 = arith.constant 0.353553385 : f32
    %82 = vector.broadcast %cst_33 : f32 to vector<8x8xf32>
    %83 = arith.mulf %81, %82 : vector<8x8xf32>
    %84 = arith.addf %83, %18 : vector<8x8xf32>
    %cst_34 = arith.constant dense<0xFF800000> : vector<8xf32>
    %85 = vector.multi_reduction <maximumf>, %84, %cst_34 [1] : vector<8x8xf32> to vector<8xf32>
    %86 = vector.shape_cast %85 : vector<8xf32> to vector<8x1xf32>
    %87 = vector.broadcast %86 : vector<8x1xf32> to vector<8x8xf32>
    %88 = arith.subf %84, %87 : vector<8x8xf32>
    %89 = math.exp %88 : vector<8x8xf32>
    %cst_35 = arith.constant dense<0.000000e+00> : vector<8xf32>
    %90 = vector.multi_reduction <add>, %89, %cst_35 [1] : vector<8x8xf32> to vector<8xf32>
    %91 = vector.shape_cast %90 : vector<8xf32> to vector<8x1xf32>
    %92 = tpu.reciprocal %91 {approx = true} : vector<8x1xf32> -> vector<8x1xf32>
    %93 = vector.broadcast %92 : vector<8x1xf32> to vector<8x8xf32>
    %94 = arith.mulf %89, %93 : vector<8x8xf32>
    %95 = arith.truncf %94 : vector<8x8xf32> to vector<8x8xbf16>
    %cst_36 = arith.constant dense<0.000000e+00> : vector<8x8xf32>
    %96 = tpu.matmul %95, %79, %cst_36 {dimension_numbers = #tpu.dot_dimension_numbers<[1], [0], [0], [1], [0, 0, 1, 1], [], []>} : vector<8x8xbf16>, vector<8x8xbf16>, vector<8x8xf32> -> vector<8x8xf32>
    %97 = arith.truncf %96 : vector<8x8xf32> to vector<8x8xbf16>
    %c16 = arith.constant 16 : index
    %c0_37 = arith.constant 0 : index
    %98 = vector.load %arg8[%c16, %c0_37] : memref<32x32xbf16, #tpu.memory_space<vmem>>, vector<8x32xbf16>
    %cst_38 = arith.constant dense<0.000000e+00> : vector<8x32xf32>
    %99 = tpu.matmul %97, %98, %cst_38 {dimension_numbers = #tpu.dot_dimension_numbers<[1], [0], [0], [1], [0, 0, 1, 1], [], []>} : vector<8x8xbf16>, vector<8x32xbf16>, vector<8x32xf32> -> vector<8x32xf32>
    %100 = arith.addf %73, %99 : vector<8x32xf32>
    %101 = vector.extract_strided_slice %9 {offsets = [0, 24], sizes = [8, 8], strides = [1, 1]} : vector<8x32xf32> to vector<8x8xf32>
    %102 = arith.truncf %101 : vector<8x8xf32> to vector<8x8xbf16>
    %103 = vector.extract_strided_slice %16 {offsets = [0, 24], sizes = [8, 8], strides = [1, 1]} : vector<8x32xf32> to vector<8x8xf32>
    %104 = arith.truncf %103 : vector<8x8xf32> to vector<8x8xbf16>
    %105 = vector.extract_strided_slice %17 {offsets = [0, 24], sizes = [8, 8], strides = [1, 1]} : vector<8x32xf32> to vector<8x8xf32>
    %106 = arith.truncf %105 : vector<8x8xf32> to vector<8x8xbf16>
    %107 = tpu.transpose %104, [1, 0] : vector<8x8xbf16> -> vector<8x8xbf16>
    %cst_39 = arith.constant dense<0.000000e+00> : vector<8x8xf32>
    %108 = tpu.matmul %102, %107, %cst_39 {dimension_numbers = #tpu.dot_dimension_numbers<[1], [0], [0], [1], [0, 0, 1, 1], [], []>} : vector<8x8xbf16>, vector<8x8xbf16>, vector<8x8xf32> -> vector<8x8xf32>
    %cst_40 = arith.constant 0.353553385 : f32
    %109 = vector.broadcast %cst_40 : f32 to vector<8x8xf32>
    %110 = arith.mulf %108, %109 : vector<8x8xf32>
    %111 = arith.addf %110, %18 : vector<8x8xf32>
    %cst_41 = arith.constant dense<0xFF800000> : vector<8xf32>
    %112 = vector.multi_reduction <maximumf>, %111, %cst_41 [1] : vector<8x8xf32> to vector<8xf32>
    %113 = vector.shape_cast %112 : vector<8xf32> to vector<8x1xf32>
    %114 = vector.broadcast %113 : vector<8x1xf32> to vector<8x8xf32>
    %115 = arith.subf %111, %114 : vector<8x8xf32>
    %116 = math.exp %115 : vector<8x8xf32>
    %cst_42 = arith.constant dense<0.000000e+00> : vector<8xf32>
    %117 = vector.multi_reduction <add>, %116, %cst_42 [1] : vector<8x8xf32> to vector<8xf32>
    %118 = vector.shape_cast %117 : vector<8xf32> to vector<8x1xf32>
    %119 = tpu.reciprocal %118 {approx = true} : vector<8x1xf32> -> vector<8x1xf32>
    %120 = vector.broadcast %119 : vector<8x1xf32> to vector<8x8xf32>
    %121 = arith.mulf %116, %120 : vector<8x8xf32>
    %122 = arith.truncf %121 : vector<8x8xf32> to vector<8x8xbf16>
    %cst_43 = arith.constant dense<0.000000e+00> : vector<8x8xf32>
    %123 = tpu.matmul %122, %106, %cst_43 {dimension_numbers = #tpu.dot_dimension_numbers<[1], [0], [0], [1], [0, 0, 1, 1], [], []>} : vector<8x8xbf16>, vector<8x8xbf16>, vector<8x8xf32> -> vector<8x8xf32>
    %124 = arith.truncf %123 : vector<8x8xf32> to vector<8x8xbf16>
    %c24 = arith.constant 24 : index
    %c0_44 = arith.constant 0 : index
    %125 = vector.load %arg8[%c24, %c0_44] : memref<32x32xbf16, #tpu.memory_space<vmem>>, vector<8x32xbf16>
    %cst_45 = arith.constant dense<0.000000e+00> : vector<8x32xf32>
    %126 = tpu.matmul %124, %125, %cst_45 {dimension_numbers = #tpu.dot_dimension_numbers<[1], [0], [0], [1], [0, 0, 1, 1], [], []>} : vector<8x8xbf16>, vector<8x32xbf16>, vector<8x32xf32> -> vector<8x32xf32>
    %127 = arith.addf %100, %126 : vector<8x32xf32>
    %c0_46 = arith.constant 0 : index
    %c0_47 = arith.constant 0 : index
    %128 = vector.load %arg9[%c0_46, %c0_47] : memref<1x32xf32, #tpu.memory_space<vmem>>, vector<1x32xf32>
    %129 = vector.broadcast %128 : vector<1x32xf32> to vector<8x32xf32>
    %130 = arith.addf %127, %129 : vector<8x32xf32>
    %131 = arith.addf %130, %1 : vector<8x32xf32>
    %c0_48 = arith.constant 0 : index
    %c0_49 = arith.constant 0 : index
    %132 = vector.load %arg10[%c0_48, %c0_49] : memref<1x32xf32, #tpu.memory_space<vmem>>, vector<1x32xf32>
    %c0_50 = arith.constant 0 : index
    %c0_51 = arith.constant 0 : index
    %133 = vector.load %arg11[%c0_50, %c0_51] : memref<1x32xf32, #tpu.memory_space<vmem>>, vector<1x32xf32>
    %cst_52 = arith.constant dense<0.000000e+00> : vector<8xf32>
    %134 = vector.multi_reduction <add>, %131, %cst_52 [1] : vector<8x32xf32> to vector<8xf32>
    %135 = vector.shape_cast %134 : vector<8xf32> to vector<8x1xf32>
    %cst_53 = arith.constant 3.200000e+01 : f32
    %136 = vector.broadcast %cst_53 : f32 to vector<8x1xf32>
    %137 = arith.divf %135, %136 : vector<8x1xf32>
    %138 = vector.broadcast %137 : vector<8x1xf32> to vector<8x32xf32>
    %139 = arith.subf %131, %138 : vector<8x32xf32>
    %140 = arith.mulf %139, %139 : vector<8x32xf32>
    %cst_54 = arith.constant dense<0.000000e+00> : vector<8xf32>
    %141 = vector.multi_reduction <add>, %140, %cst_54 [1] : vector<8x32xf32> to vector<8xf32>
    %142 = vector.shape_cast %141 : vector<8xf32> to vector<8x1xf32>
    %cst_55 = arith.constant 3.200000e+01 : f32
    %143 = vector.broadcast %cst_55 : f32 to vector<8x1xf32>
    %144 = arith.divf %142, %143 : vector<8x1xf32>
    %145 = vector.broadcast %137 : vector<8x1xf32> to vector<8x32xf32>
    %146 = arith.subf %131, %145 : vector<8x32xf32>
    %cst_56 = arith.constant 9.99999974E-6 : f32
    %147 = vector.broadcast %cst_56 : f32 to vector<8x1xf32>
    %148 = arith.addf %144, %147 : vector<8x1xf32>
    %149 = math.rsqrt %148 : vector<8x1xf32>
    %150 = vector.broadcast %149 : vector<8x1xf32> to vector<8x32xf32>
    %151 = arith.mulf %146, %150 : vector<8x32xf32>
    %152 = vector.broadcast %132 : vector<1x32xf32> to vector<8x32xf32>
    %153 = arith.mulf %151, %152 : vector<8x32xf32>
    %154 = vector.broadcast %133 : vector<1x32xf32> to vector<8x32xf32>
    %155 = arith.addf %153, %154 : vector<8x32xf32>
    %c0_57 = arith.constant 0 : index
    %c0_58 = arith.constant 0 : index
    %c0_59 = arith.constant 0 : index
    %156 = vector.load %arg12[%c0_57, %c0_58, %c0_59] : memref<1x8x32xf32, #tpu.memory_space<vmem>>, vector<1x8x32xf32>
    %157 = vector.shape_cast %156 : vector<1x8x32xf32> to vector<8x32xf32>
    %158 = vector.shape_cast %155 : vector<8x32xf32> to vector<1x8x32xf32>
    tpu.vector_store %arg12[%c0_57, %c0_58, %c0_59], %158 {strides = array<i32>} : memref<1x8x32xf32, #tpu.memory_space<vmem>>, vector<1x8x32xf32>,
    return
  }
  func.func @transform_0(%arg0: i32) -> (i32, i32, i32) {
    %c0_i32 = arith.constant 0 : i32
    %c0_i32_0 = arith.constant 0 : i32
    %c0_i32_1 = arith.constant 0 : i32
    return %arg0, %c0_i32, %c0_i32_0 : i32, i32, i32
  }
  func.func @transform_1(%arg0: i32) -> (i32, i32, i32) {
    %c0_i32 = arith.constant 0 : i32
    %c0_i32_0 = arith.constant 0 : i32
    %c0_i32_1 = arith.constant 0 : i32
    return %arg0, %c0_i32, %c0_i32_0 : i32, i32, i32
  }
  func.func @transform_2(%arg0: i32) -> (i32, i32) {
    %c0_i32 = arith.constant 0 : i32
    %c0_i32_0 = arith.constant 0 : i32
    %c0_i32_1 = arith.constant 0 : i32
    return %c0_i32, %c0_i32_0 : i32, i32
  }
  func.func @transform_3(%arg0: i32) -> (i32, i32) {
    %c0_i32 = arith.constant 0 : i32
    %c0_i32_0 = arith.constant 0 : i32
    %c0_i32_1 = arith.constant 0 : i32
    return %c0_i32, %c0_i32_0 : i32, i32
  }
  func.func @transform_4(%arg0: i32) -> (i32, i32) {
    %c0_i32 = arith.constant 0 : i32
    %c0_i32_0 = arith.constant 0 : i32
    %c0_i32_1 = arith.constant 0 : i32
    return %c0_i32, %c0_i32_0 : i32, i32
  }
  func.func @transform_5(%arg0: i32) -> (i32, i32) {
    %c0_i32 = arith.constant 0 : i32
    %c0_i32_0 = arith.constant 0 : i32
    %c0_i32_1 = arith.constant 0 : i32
    return %c0_i32, %c0_i32_0 : i32, i32
  }
  func.func @transform_6(%arg0: i32) -> (i32, i32) {
    %c0_i32 = arith.constant 0 : i32
    %c0_i32_0 = arith.constant 0 : i32
    %c0_i32_1 = arith.constant 0 : i32
    return %c0_i32, %c0_i32_0 : i32, i32
  }
  func.func @transform_7(%arg0: i32) -> (i32, i32) {
    %c0_i32 = arith.constant 0 : i32
    %c0_i32_0 = arith.constant 0 : i32
    %c0_i32_1 = arith.constant 0 : i32
    return %c0_i32, %c0_i32_0 : i32, i32
  }
  func.func @transform_8(%arg0: i32) -> (i32, i32) {
    %c0_i32 = arith.constant 0 : i32
    %c0_i32_0 = arith.constant 0 : i32
    %c0_i32_1 = arith.constant 0 : i32
    return %c0_i32, %c0_i32_0 : i32, i32
  }
  func.func @transform_9(%arg0: i32) -> (i32, i32) {
    %c0_i32 = arith.constant 0 : i32
    %c0_i32_0 = arith.constant 0 : i32
    %c0_i32_1 = arith.constant 0 : i32
    return %c0_i32, %c0_i32_0 : i32, i32
  }
  func.func @transform_10(%arg0: i32) -> (i32, i32) {
    %c0_i32 = arith.constant 0 : i32
    %c0_i32_0 = arith.constant 0 : i32
    %c0_i32_1 = arith.constant 0 : i32
    return %c0_i32, %c0_i32_0 : i32, i32
  }
  func.func @transform_11(%arg0: i32) -> (i32, i32, i32) {
    %c0_i32 = arith.constant 0 : i32
    %c0_i32_0 = arith.constant 0 : i32
    %c0_i32_1 = arith.constant 0 : i32
    return %arg0, %c0_i32, %c0_i32_0 : i32, i32, i32
  }
}

module attributes {stable_mosaic.version = 11 : i64} {
  func.func @_ffn_block_kernel(%arg0: i32, %arg1: memref<16x32xf32, #tpu.memory_space<vmem>>, %arg2: memref<32x64xbf16, #tpu.memory_space<vmem>>, %arg3: memref<1x64xf32, #tpu.memory_space<vmem>>, %arg4: memref<64x32xbf16, #tpu.memory_space<vmem>>, %arg5: memref<1x32xf32, #tpu.memory_space<vmem>>, %arg6: memref<1x32xf32, #tpu.memory_space<vmem>>, %arg7: memref<1x32xf32, #tpu.memory_space<vmem>>, %arg8: memref<16x32xf32, #tpu.memory_space<vmem>>) attributes {dimension_semantics = [#tpu.dimension_semantics<parallel>], iteration_bounds = array<i64: 1>, scalar_prefetch = 0 : i64, scratch_operands = 0 : i64, tpu.core_type = #tpu.core_type<tc>, window_params = [{transform_indices = @transform_0, window_bounds = array<i64: 16, 32>}, {pipeline_mode = #tpu.pipeline_mode<synchronous>, transform_indices = @transform_1, window_bounds = array<i64: 32, 64>}, {pipeline_mode = #tpu.pipeline_mode<synchronous>, transform_indices = @transform_2, window_bounds = array<i64: 1, 64>}, {pipeline_mode = #tpu.pipeline_mode<synchronous>, transform_indices = @transform_3, window_bounds = array<i64: 64, 32>}, {pipeline_mode = #tpu.pipeline_mode<synchronous>, transform_indices = @transform_4, window_bounds = array<i64: 1, 32>}, {pipeline_mode = #tpu.pipeline_mode<synchronous>, transform_indices = @transform_5, window_bounds = array<i64: 1, 32>}, {pipeline_mode = #tpu.pipeline_mode<synchronous>, transform_indices = @transform_6, window_bounds = array<i64: 1, 32>}, {transform_indices = @transform_7, window_bounds = array<i64: 16, 32>}]} {
    %c0 = arith.constant 0 : index
    %c0_0 = arith.constant 0 : index
    %0 = vector.load %arg1[%c0, %c0_0] : memref<16x32xf32, #tpu.memory_space<vmem>>, vector<16x32xf32>
    %1 = arith.truncf %0 : vector<16x32xf32> to vector<16x32xbf16>
    %c0_1 = arith.constant 0 : index
    %c0_2 = arith.constant 0 : index
    %2 = vector.load %arg2[%c0_1, %c0_2] : memref<32x64xbf16, #tpu.memory_space<vmem>>, vector<32x64xbf16>
    %cst = arith.constant dense<0.000000e+00> : vector<16x64xf32>
    %3 = tpu.matmul %1, %2, %cst {dimension_numbers = #tpu.dot_dimension_numbers<[1], [0], [0], [1], [0, 0, 1, 1], [], []>} : vector<16x32xbf16>, vector<32x64xbf16>, vector<16x64xf32> -> vector<16x64xf32>
    %c0_3 = arith.constant 0 : index
    %c0_4 = arith.constant 0 : index
    %4 = vector.load %arg3[%c0_3, %c0_4] : memref<1x64xf32, #tpu.memory_space<vmem>>, vector<1x64xf32>
    %5 = vector.broadcast %4 : vector<1x64xf32> to vector<16x64xf32>
    %6 = arith.addf %3, %5 : vector<16x64xf32>
    %cst_5 = arith.constant 0.000000e+00 : f32
    %7 = vector.broadcast %cst_5 : f32 to vector<16x64xf32>
    %8 = arith.maximumf %6, %7 : vector<16x64xf32>
    %9 = arith.truncf %8 : vector<16x64xf32> to vector<16x64xbf16>
    %c0_6 = arith.constant 0 : index
    %c0_7 = arith.constant 0 : index
    %10 = vector.load %arg4[%c0_6, %c0_7] : memref<64x32xbf16, #tpu.memory_space<vmem>>, vector<64x32xbf16>
    %cst_8 = arith.constant dense<0.000000e+00> : vector<16x32xf32>
    %11 = tpu.matmul %9, %10, %cst_8 {dimension_numbers = #tpu.dot_dimension_numbers<[1], [0], [0], [1], [0, 0, 1, 1], [], []>} : vector<16x64xbf16>, vector<64x32xbf16>, vector<16x32xf32> -> vector<16x32xf32>
    %c0_9 = arith.constant 0 : index
    %c0_10 = arith.constant 0 : index
    %12 = vector.load %arg5[%c0_9, %c0_10] : memref<1x32xf32, #tpu.memory_space<vmem>>, vector<1x32xf32>
    %13 = vector.broadcast %12 : vector<1x32xf32> to vector<16x32xf32>
    %14 = arith.addf %11, %13 : vector<16x32xf32>
    %15 = arith.addf %14, %0 : vector<16x32xf32>
    %c0_11 = arith.constant 0 : index
    %c0_12 = arith.constant 0 : index
    %16 = vector.load %arg6[%c0_11, %c0_12] : memref<1x32xf32, #tpu.memory_space<vmem>>, vector<1x32xf32>
    %c0_13 = arith.constant 0 : index
    %c0_14 = arith.constant 0 : index
    %17 = vector.load %arg7[%c0_13, %c0_14] : memref<1x32xf32, #tpu.memory_space<vmem>>, vector<1x32xf32>
    %cst_15 = arith.constant dense<0.000000e+00> : vector<16xf32>
    %18 = vector.multi_reduction <add>, %15, %cst_15 [1] : vector<16x32xf32> to vector<16xf32>
    %19 = vector.shape_cast %18 : vector<16xf32> to vector<16x1xf32>
    %cst_16 = arith.constant 3.200000e+01 : f32
    %20 = vector.broadcast %cst_16 : f32 to vector<16x1xf32>
    %21 = arith.divf %19, %20 : vector<16x1xf32>
    %22 = vector.broadcast %21 : vector<16x1xf32> to vector<16x32xf32>
    %23 = arith.subf %15, %22 : vector<16x32xf32>
    %24 = arith.mulf %23, %23 : vector<16x32xf32>
    %cst_17 = arith.constant dense<0.000000e+00> : vector<16xf32>
    %25 = vector.multi_reduction <add>, %24, %cst_17 [1] : vector<16x32xf32> to vector<16xf32>
    %26 = vector.shape_cast %25 : vector<16xf32> to vector<16x1xf32>
    %cst_18 = arith.constant 3.200000e+01 : f32
    %27 = vector.broadcast %cst_18 : f32 to vector<16x1xf32>
    %28 = arith.divf %26, %27 : vector<16x1xf32>
    %29 = vector.broadcast %21 : vector<16x1xf32> to vector<16x32xf32>
    %30 = arith.subf %15, %29 : vector<16x32xf32>
    %cst_19 = arith.constant 9.99999974E-6 : f32
    %31 = vector.broadcast %cst_19 : f32 to vector<16x1xf32>
    %32 = arith.addf %28, %31 : vector<16x1xf32>
    %33 = math.rsqrt %32 : vector<16x1xf32>
    %34 = vector.broadcast %33 : vector<16x1xf32> to vector<16x32xf32>
    %35 = arith.mulf %30, %34 : vector<16x32xf32>
    %36 = vector.broadcast %16 : vector<1x32xf32> to vector<16x32xf32>
    %37 = arith.mulf %35, %36 : vector<16x32xf32>
    %38 = vector.broadcast %17 : vector<1x32xf32> to vector<16x32xf32>
    %39 = arith.addf %37, %38 : vector<16x32xf32>
    %c0_20 = arith.constant 0 : index
    %c0_21 = arith.constant 0 : index
    %40 = vector.load %arg8[%c0_20, %c0_21] : memref<16x32xf32, #tpu.memory_space<vmem>>, vector<16x32xf32>
    tpu.vector_store %arg8[%c0_20, %c0_21], %39 {strides = array<i32>} : memref<16x32xf32, #tpu.memory_space<vmem>>, vector<16x32xf32>,
    return
  }
  func.func @transform_0(%arg0: i32) -> (i32, i32) {
    %c0_i32 = arith.constant 0 : i32
    %c0_i32_0 = arith.constant 0 : i32
    return %arg0, %c0_i32 : i32, i32
  }
  func.func @transform_1(%arg0: i32) -> (i32, i32) {
    %c0_i32 = arith.constant 0 : i32
    %c0_i32_0 = arith.constant 0 : i32
    %c0_i32_1 = arith.constant 0 : i32
    return %c0_i32, %c0_i32_0 : i32, i32
  }
  func.func @transform_2(%arg0: i32) -> (i32, i32) {
    %c0_i32 = arith.constant 0 : i32
    %c0_i32_0 = arith.constant 0 : i32
    %c0_i32_1 = arith.constant 0 : i32
    return %c0_i32, %c0_i32_0 : i32, i32
  }
  func.func @transform_3(%arg0: i32) -> (i32, i32) {
    %c0_i32 = arith.constant 0 : i32
    %c0_i32_0 = arith.constant 0 : i32
    %c0_i32_1 = arith.constant 0 : i32
    return %c0_i32, %c0_i32_0 : i32, i32
  }
  func.func @transform_4(%arg0: i32) -> (i32, i32) {
    %c0_i32 = arith.constant 0 : i32
    %c0_i32_0 = arith.constant 0 : i32
    %c0_i32_1 = arith.constant 0 : i32
    return %c0_i32, %c0_i32_0 : i32, i32
  }
  func.func @transform_5(%arg0: i32) -> (i32, i32) {
    %c0_i32 = arith.constant 0 : i32
    %c0_i32_0 = arith.constant 0 : i32
    %c0_i32_1 = arith.constant 0 : i32
    return %c0_i32, %c0_i32_0 : i32, i32
  }
  func.func @transform_6(%arg0: i32) -> (i32, i32) {
    %c0_i32 = arith.constant 0 : i32
    %c0_i32_0 = arith.constant 0 : i32
    %c0_i32_1 = arith.constant 0 : i32
    return %c0_i32, %c0_i32_0 : i32, i32
  }
  func.func @transform_7(%arg0: i32) -> (i32, i32) {
    %c0_i32 = arith.constant 0 : i32
    %c0_i32_0 = arith.constant 0 : i32
    return %arg0, %c0_i32 : i32, i32
  }
}

module attributes {stable_mosaic.version = 11 : i64} {
  func.func @_ln_logits_kernel(%arg0: i32, %arg1: i32, %arg2: memref<16x32xf32, #tpu.memory_space<vmem>>, %arg3: memref<1x32xf32, #tpu.memory_space<vmem>>, %arg4: memref<1x32xf32, #tpu.memory_space<vmem>>, %arg5: memref<32x32xbf16, #tpu.memory_space<vmem>>, %arg6: memref<16x32xf32, #tpu.memory_space<vmem>>) attributes {dimension_semantics = [#tpu.dimension_semantics<parallel>, #tpu.dimension_semantics<parallel>], iteration_bounds = array<i64: 1, 1>, scalar_prefetch = 0 : i64, scratch_operands = 0 : i64, tpu.core_type = #tpu.core_type<tc>, window_params = [{transform_indices = @transform_0, window_bounds = array<i64: 16, 32>}, {pipeline_mode = #tpu.pipeline_mode<synchronous>, transform_indices = @transform_1, window_bounds = array<i64: 1, 32>}, {pipeline_mode = #tpu.pipeline_mode<synchronous>, transform_indices = @transform_2, window_bounds = array<i64: 1, 32>}, {transform_indices = @transform_3, window_bounds = array<i64: 32, 32>}, {transform_indices = @transform_4, window_bounds = array<i64: 16, 32>}]} {
    %c0 = arith.constant 0 : index
    %c0_0 = arith.constant 0 : index
    %0 = vector.load %arg2[%c0, %c0_0] : memref<16x32xf32, #tpu.memory_space<vmem>>, vector<16x32xf32>
    %c0_1 = arith.constant 0 : index
    %c0_2 = arith.constant 0 : index
    %1 = vector.load %arg3[%c0_1, %c0_2] : memref<1x32xf32, #tpu.memory_space<vmem>>, vector<1x32xf32>
    %c0_3 = arith.constant 0 : index
    %c0_4 = arith.constant 0 : index
    %2 = vector.load %arg4[%c0_3, %c0_4] : memref<1x32xf32, #tpu.memory_space<vmem>>, vector<1x32xf32>
    %cst = arith.constant dense<0.000000e+00> : vector<16xf32>
    %3 = vector.multi_reduction <add>, %0, %cst [1] : vector<16x32xf32> to vector<16xf32>
    %4 = vector.shape_cast %3 : vector<16xf32> to vector<16x1xf32>
    %cst_5 = arith.constant 3.200000e+01 : f32
    %5 = vector.broadcast %cst_5 : f32 to vector<16x1xf32>
    %6 = arith.divf %4, %5 : vector<16x1xf32>
    %7 = vector.broadcast %6 : vector<16x1xf32> to vector<16x32xf32>
    %8 = arith.subf %0, %7 : vector<16x32xf32>
    %9 = arith.mulf %8, %8 : vector<16x32xf32>
    %cst_6 = arith.constant dense<0.000000e+00> : vector<16xf32>
    %10 = vector.multi_reduction <add>, %9, %cst_6 [1] : vector<16x32xf32> to vector<16xf32>
    %11 = vector.shape_cast %10 : vector<16xf32> to vector<16x1xf32>
    %cst_7 = arith.constant 3.200000e+01 : f32
    %12 = vector.broadcast %cst_7 : f32 to vector<16x1xf32>
    %13 = arith.divf %11, %12 : vector<16x1xf32>
    %14 = vector.broadcast %6 : vector<16x1xf32> to vector<16x32xf32>
    %15 = arith.subf %0, %14 : vector<16x32xf32>
    %cst_8 = arith.constant 9.99999974E-6 : f32
    %16 = vector.broadcast %cst_8 : f32 to vector<16x1xf32>
    %17 = arith.addf %13, %16 : vector<16x1xf32>
    %18 = math.rsqrt %17 : vector<16x1xf32>
    %19 = vector.broadcast %18 : vector<16x1xf32> to vector<16x32xf32>
    %20 = arith.mulf %15, %19 : vector<16x32xf32>
    %21 = vector.broadcast %1 : vector<1x32xf32> to vector<16x32xf32>
    %22 = arith.mulf %20, %21 : vector<16x32xf32>
    %23 = vector.broadcast %2 : vector<1x32xf32> to vector<16x32xf32>
    %24 = arith.addf %22, %23 : vector<16x32xf32>
    %25 = arith.truncf %24 : vector<16x32xf32> to vector<16x32xbf16>
    %c0_9 = arith.constant 0 : index
    %c0_10 = arith.constant 0 : index
    %26 = vector.load %arg5[%c0_9, %c0_10] : memref<32x32xbf16, #tpu.memory_space<vmem>>, vector<32x32xbf16>
    %cst_11 = arith.constant dense<0.000000e+00> : vector<16x32xf32>
    %27 = tpu.matmul %25, %26, %cst_11 {dimension_numbers = #tpu.dot_dimension_numbers<[1], [0], [0], [1], [0, 0, 1, 1], [], []>} : vector<16x32xbf16>, vector<32x32xbf16>, vector<16x32xf32> -> vector<16x32xf32>
    %c0_12 = arith.constant 0 : index
    %c0_13 = arith.constant 0 : index
    %28 = vector.load %arg6[%c0_12, %c0_13] : memref<16x32xf32, #tpu.memory_space<vmem>>, vector<16x32xf32>
    tpu.vector_store %arg6[%c0_12, %c0_13], %27 {strides = array<i32>} : memref<16x32xf32, #tpu.memory_space<vmem>>, vector<16x32xf32>,
    return
  }
  func.func @transform_0(%arg0: i32, %arg1: i32) -> (i32, i32) {
    %c0_i32 = arith.constant 0 : i32
    %c0_i32_0 = arith.constant 0 : i32
    return %arg0, %c0_i32 : i32, i32
  }
  func.func @transform_1(%arg0: i32, %arg1: i32) -> (i32, i32) {
    %c0_i32 = arith.constant 0 : i32
    %c0_i32_0 = arith.constant 0 : i32
    %c0_i32_1 = arith.constant 0 : i32
    return %c0_i32, %c0_i32_0 : i32, i32
  }
  func.func @transform_2(%arg0: i32, %arg1: i32) -> (i32, i32) {
    %c0_i32 = arith.constant 0 : i32
    %c0_i32_0 = arith.constant 0 : i32
    %c0_i32_1 = arith.constant 0 : i32
    return %c0_i32, %c0_i32_0 : i32, i32
  }
  func.func @transform_3(%arg0: i32, %arg1: i32) -> (i32, i32) {
    %c0_i32 = arith.constant 0 : i32
    %c0_i32_0 = arith.constant 0 : i32
    return %c0_i32, %arg1 : i32, i32
  }
  func.func @transform_4(%arg0: i32, %arg1: i32) -> (i32, i32) {
    %c0_i32 = arith.constant 0 : i32
    return %arg0, %arg1 : i32, i32
  }
}

</mosaic_0001>

<llo_original>
// kernel: decoder_forward.13
$region0: #{decoder_forward.13}
  #allocation0 [shape = 'u32[]', space=smem, size = 0x4, offset = 0x4, fixed_abs, tag = 'smem constant byte address 0x4 - core index']
  #allocation1 [shape = 'u32[72,128]{1,0:T(1,128)}', space=vmem, size = 0x9000, scoped, tag = 'internal scratch']
  %s0 = inlined_call_operand.vmem [shape: f32[16,32], index: 0, kind: input, shape index: {}]
  %s1 = inlined_call_operand.vmem [shape: f32[1,32], index: 1, kind: input, shape index: {}]
  %s2 = inlined_call_operand.vmem [shape: f32[1,32], index: 2, kind: input, shape index: {}]
  %s3 = inlined_call_operand.vmem [shape: bf16[32,32], index: 3, kind: input, shape index: {}]
  %s4 = inlined_call_operand.hbm [shape: f32[16,32], index: 4, kind: output, shape index: {}]
  %s5 = sld [smem:[#allocation0]]
  $region26: #{decoder_forward.13} parent=0
    _
  %s7 = ssub.s32 1, %s5
  %s8 = scalar_select 0, %s7, %s5
  $region1: #{decoder_forward.13} parent=0
    #allocation2 [shape = 'u8[8192]{0}', space=vmem, size = 0x2000, scoped, tag = 'output window, operand 0, single buffered']
    #allocation3 [shape = 's32[1]{0}', space=sflag, size = 0x4, scoped, tag = 'scoped memory for decoder_forward.13']
    %9 = vsyncpa [#allocation3], 0
    // Predicated region
    $region2: #{decoder_forward.13} parent=1 // pred_check
      _
    $region3: #{decoder_forward.13} parent=1 // pred_check_branch
      %11 = sbr.rel (0) target = $region5
    $region4: #{decoder_forward.13} parent=1 // pred_region
      _
    $region5: #{decoder_forward.13} parent=1 // pred_fallthru
      _
    // Predicated region
    $region6: #{decoder_forward.13} parent=1 // pred_check
      _
    $region7: #{decoder_forward.13} parent=1 // pred_check_branch
      %13 = sbr.rel (0) target = $region9
    $region8: #{decoder_forward.13} parent=1 // pred_region
      _
    $region9: #{decoder_forward.13} parent=1 // pred_fallthru
      _
    // Predicated region
    $region10: #{decoder_forward.13} parent=1 // pred_check
      _
    $region11: #{decoder_forward.13} parent=1 // pred_check_branch
      %15 = sbr.rel (0) target = $region13
    $region12: #{decoder_forward.13} parent=1 // pred_region
      _
    $region13: #{decoder_forward.13} parent=1 // pred_fallthru
      _
    // Predicated region
    $region14: #{decoder_forward.13} parent=1 // pred_check
      _
    $region15: #{decoder_forward.13} parent=1 // pred_check_branch
      %17 = sbr.rel (0) target = $region17
    $region16: #{decoder_forward.13} parent=1 // pred_region
      _
    $region17: #{decoder_forward.13} parent=1 // pred_fallthru
      _
    %v19 = vld [vmem:[%s0] sm:$0xff]
    %v20 = vld [vmem:[%s0 + $0x8] sm:$0xff]
    %v21 = vld [vmem:[%s1] sm:$0x1]
    %v22 = vld [vmem:[%s2] sm:$0x1]
    %vm23 = vcmask 261120
    %v24 = vsel %vm23, %v19, 0.0
    %25 = vadd.xlane.f32.xlu0 %v24
    %v26 = vpop.xlane.xlu0 %25
    %v27 = vsel %vm23, %v20, 0.0
    %28 = vadd.xlane.f32.xlu0 %v27
    %v29 = vpop.xlane.xlu0 %28
    %v30 = vrcp.pop 32.0
    %v31 = vmul.f32 32.0, %v30
    %v32 = vsub.f32 1.0, %v31
    %v33 = vmul.f32 %v30, %v32
    %v34 = vadd.f32 %v30, %v33
    %vm35 = vweird.f32 %v30
    %v36 = vsel %vm35, %v30, %v34
    %v37 = vmul.f32 %v26, %v36
    %v38 = vmul.f32 %v29, %v36
    %v39 = vsub.f32 %v19, %v37
    %v40 = vsub.f32 %v20, %v38
    %v41 = vmul.f32 %v39, %v39
    %v42 = vmul.f32 %v40, %v40
    %v43 = vsel %vm23, %v41, 0.0
    %44 = vadd.xlane.f32.xlu0 %v43
    %v45 = vpop.xlane.xlu0 %44
    %v46 = vsel %vm23, %v42, 0.0
    %47 = vadd.xlane.f32.xlu0 %v46
    %v48 = vpop.xlane.xlu0 %47
    %v49 = vmul.f32 %v45, %v36
    %v50 = vmul.f32 %v48, %v36
    %v51 = vadd.f32 %v49, 1e-05
    %v52 = vadd.f32 %v50, 1e-05
    %v53 = vrsqrt.pop %v51
    %v54 = vmul.f32 %v53, %v51
    %v55 = vmul.f32 %v54, %v53
    %v56 = vmul.f32 0.5, %v55
    %v57 = vsub.f32 1.5, %v56
    %v58 = vmul.f32 %v53, %v57
    %vm59 = vweird.f32 %v51
    %vm60 = vweird.f32 %v53
    %vm61 = vmor %vm59, %vm60
    %v62 = vsel %vm61, %v53, %v58
    %v63 = vrsqrt.pop %v52
    %v64 = vmul.f32 %v63, %v52
    %v65 = vmul.f32 %v64, %v63
    %v66 = vmul.f32 0.5, %v65
    %v67 = vsub.f32 1.5, %v66
    %v68 = vmul.f32 %v63, %v67
    %vm69 = vweird.f32 %v52
    %vm70 = vweird.f32 %v63
    %vm71 = vmor %vm69, %vm70
    %v72 = vsel %vm71, %v63, %v68
    %v73 = vmul.f32 %v39, %v62
    %v74 = vmul.f32 %v40, %v72
    %v76 = vperm.slane %v21, 0
    %v78 = vmul.f32 %v73, %v76
    %v79 = vmul.f32 %v74, %v76
    %v81 = vperm.slane %v22, 0
    %v83 = vadd.f32 %v78, %v81
    %v84 = vadd.f32 %v79, %v81
    %v85 = vpack.c.bf16 %v84, %v83
    %v86 = vld [vmem:[%s3] sm:$0xf]
    %v87 = vld [vmem:[%s3 + $0x4] sm:$0xf]
    %v88 = vld [vmem:[%s3 + $0x8] sm:$0xf]
    %v89 = vld [vmem:[%s3 + $0xc] sm:$0xf]
    %v94 = vunpack.c.l.b16 %v86
    %v95 = vunpack.c.l.b16 %v87
    %v96 = vunpack.c.l.b16 %v88
    %v97 = vunpack.c.l.b16 %v89
    %v98 = vpack.c.b16 %v95, %v94
    %v99 = vpack.c.b16 %v97, %v96
    %v103 = vsel %vm23, %v85, 0
    %105 = vmatpush.bf16.msra.mxu0 0
    %106 = vmatpush.bf16.msra.mxu0 0
    %107 = vmatpush.bf16.msra.mxu0 0
    %108 = vmatpush.bf16.msra.mxu0 0
    %109 = vmatpush.bf16.msra.mxu0 0
    %110 = vmatpush.bf16.msra.mxu0 0
    %111 = vmatpush.bf16.msra.mxu0 %v99
    %112 = vmatpush.bf16.msra.mxu0 %v98
    %113 = vmatmul.bf16.gmra.mxu0 %v103
    %v114 = vpop.f32.mrf.mxu0
    %v115 = vadd.f32 0.0, %v114
    %v116 = vpop.f32.mrf.mxu0
    %v117 = vadd.f32 0.0, %v116
    %118 = vdwg.mxu0
    %119 = vst.msk [vmem:[#allocation2] sm:$0xff] %vm23, %v115
    %120 = vst.msk [vmem:[#allocation2 + $0x8] sm:$0xff] %vm23, %v117
    // Predicated region
    $region18: #{decoder_forward.13} parent=1 // pred_check
      _
    $region19: #{decoder_forward.13} parent=1 // pred_check_branch
      %122 = sbr.rel (0) target = $region21
    $region20: #{decoder_forward.13} parent=1 // pred_region
      %124 = vsyncadd [#allocation3], 0
      %s125 = sshll.u32 [#allocation2], 4
      %s126 = int_to_ptr.vmem [resolvable:$true] %s125
      %s127 = sshll.u32 %s4, 4
      %s128 = int_to_ptr.hbm [resolvable:$true] %s127
      %133 = dma.vmem_to_hbm [thread:$0]  %s126, 256, %s128, [#allocation3], 128, 128, 8
    $region21: #{decoder_forward.13} parent=1 // pred_fallthru
      _
    // Predicated region
    $region22: #{decoder_forward.13} parent=1 // pred_check
      _
    $region23: #{decoder_forward.13} parent=1 // pred_check_branch
      %135 = sbr.rel (0) target = $region25
    $region24: #{decoder_forward.13} parent=1 // pred_region
      %137 = dma.done [#allocation3], 256
    $region25: #{decoder_forward.13} parent=1 // pred_fallthru
      _
    %138 = vsyncpa [#allocation3], 1

// kernel: decoder_forward.9
$region0: #{decoder_forward.9}
  #allocation0 [shape = 'u32[]', space=smem, size = 0x4, offset = 0x4, fixed_abs, tag = 'smem constant byte address 0x4 - core index']
  #allocation1 [shape = 'u32[72,128]{1,0:T(1,128)}', space=vmem, size = 0x9000, scoped, tag = 'internal scratch']
  %s0 = inlined_call_operand.vmem [shape: f32[16,32], index: 0, kind: input, shape index: {}]
  %s1 = inlined_call_operand.vmem [shape: bf16[32,64], index: 1, kind: input, shape index: {}]
  %s2 = inlined_call_operand.vmem [shape: f32[1,64], index: 2, kind: input, shape index: {}]
  %s3 = inlined_call_operand.vmem [shape: bf16[64,32], index: 3, kind: input, shape index: {}]
  %s4 = inlined_call_operand.vmem [shape: f32[1,32], index: 4, kind: input, shape index: {}]
  %s5 = inlined_call_operand.vmem [shape: f32[1,32], index: 5, kind: input, shape index: {}]
  %s6 = inlined_call_operand.vmem [shape: f32[1,32], index: 6, kind: input, shape index: {}]
  %s7 = inlined_call_operand.vmem [shape: f32[16,32], index: 7, kind: output, shape index: {}]
  %s8 = sld [smem:[#allocation0]]
  $region38: #{decoder_forward.9} parent=0
    _
  %s10 = ssub.s32 1, %s8
  %s11 = scalar_select 0, %s10, %s8
  // Predicated region
  $region2: #{decoder_forward.9} parent=0 // pred_check
    _
  $region3: #{decoder_forward.9} parent=0 // pred_check_branch
    %13 = sbr.rel (0) target = $region5
  $region4: #{decoder_forward.9} parent=0 // pred_region
    _
  $region5: #{decoder_forward.9} parent=0 // pred_fallthru
    _
  // Predicated region
  $region6: #{decoder_forward.9} parent=0 // pred_check
    _
  $region7: #{decoder_forward.9} parent=0 // pred_check_branch
    %15 = sbr.rel (0) target = $region9
  $region8: #{decoder_forward.9} parent=0 // pred_region
    _
  $region9: #{decoder_forward.9} parent=0 // pred_fallthru
    _
  // Predicated region
  $region10: #{decoder_forward.9} parent=0 // pred_check
    _
  $region11: #{decoder_forward.9} parent=0 // pred_check_branch
    %17 = sbr.rel (0) target = $region13
  $region12: #{decoder_forward.9} parent=0 // pred_region
    _
  $region13: #{decoder_forward.9} parent=0 // pred_fallthru
    _
  // Predicated region
  $region14: #{decoder_forward.9} parent=0 // pred_check
    _
  $region15: #{decoder_forward.9} parent=0 // pred_check_branch
    %19 = sbr.rel (0) target = $region17
  $region16: #{decoder_forward.9} parent=0 // pred_region
    _
  $region17: #{decoder_forward.9} parent=0 // pred_fallthru
    _
  // Predicated region
  $region18: #{decoder_forward.9} parent=0 // pred_check
    _
  $region19: #{decoder_forward.9} parent=0 // pred_check_branch
    %21 = sbr.rel (0) target = $region21
  $region20: #{decoder_forward.9} parent=0 // pred_region
    _
  $region21: #{decoder_forward.9} parent=0 // pred_fallthru
    _
  // Predicated region
  $region22: #{decoder_forward.9} parent=0 // pred_check
    _
  $region23: #{decoder_forward.9} parent=0 // pred_check_branch
    %23 = sbr.rel (0) target = $region25
  $region24: #{decoder_forward.9} parent=0 // pred_region
    _
  $region25: #{decoder_forward.9} parent=0 // pred_fallthru
    _
  // Predicated region
  $region26: #{decoder_forward.9} parent=0 // pred_check
    _
  $region27: #{decoder_forward.9} parent=0 // pred_check_branch
    %25 = sbr.rel (0) target = $region29
  $region28: #{decoder_forward.9} parent=0 // pred_region
    _
  $region29: #{decoder_forward.9} parent=0 // pred_fallthru
    _
  %v27 = vld [vmem:[%s0] sm:$0xff]
  %v28 = vld [vmem:[%s0 + $0x8] sm:$0xff]
  %v29 = vpack.c.bf16 %v28, %v27
  %v30 = vld [vmem:[%s1] sm:$0xf]
  %v31 = vld [vmem:[%s1 + $0x4] sm:$0xf]
  %v32 = vld [vmem:[%s1 + $0x8] sm:$0xf]
  %v33 = vld [vmem:[%s1 + $0xc] sm:$0xf]
  %v34 = vld [vmem:[%s2] sm:$0x1]
  %v36 = vperm.slane %v34, 0
  %v42 = vunpack.c.l.b16 %v30
  %v43 = vunpack.c.l.b16 %v31
  %v44 = vunpack.c.l.b16 %v32
  %v45 = vunpack.c.l.b16 %v33
  %v46 = vpack.c.b16 %v43, %v42
  %v47 = vpack.c.b16 %v45, %v44
  %vm50 = vcmask 261120
  %v52 = vsel %vm50, %v29, 0
  %54 = vmatpush.bf16.msra.mxu0 0
  %55 = vmatpush.bf16.msra.mxu0 0
  %56 = vmatpush.bf16.msra.mxu0 0
  %57 = vmatpush.bf16.msra.mxu0 0
  %58 = vmatpush.bf16.msra.mxu0 0
  %59 = vmatpush.bf16.msra.mxu0 0
  %60 = vmatpush.bf16.msra.mxu0 %v47
  %61 = vmatpush.bf16.msra.mxu0 %v46
  %62 = vmatmul.bf16.gmra.mxu0 %v52
  %v63 = vpop.f32.mrf.mxu0
  %v64 = vadd.f32 %v36, %v63
  %v65 = vpop.f32.mrf.mxu0
  %v66 = vadd.f32 %v36, %v65
  %67 = vdwg.mxu0
  %v68 = vmax.f32 %v64, 0.0
  %v69 = vmax.f32 %v66, 0.0
  %v70 = vpack.c.bf16 %v69, %v68
  %v71 = vld [vmem:[%s3] sm:$0xf]
  %v72 = vld [vmem:[%s3 + $0x4] sm:$0xf]
  %v73 = vld [vmem:[%s3 + $0x8] sm:$0xf]
  %v74 = vld [vmem:[%s3 + $0xc] sm:$0xf]
  %v75 = vld [vmem:[%s3 + $0x10] sm:$0xf]
  %v76 = vld [vmem:[%s3 + $0x14] sm:$0xf]
  %v77 = vld [vmem:[%s3 + $0x18] sm:$0xf]
  %v78 = vld [vmem:[%s3 + $0x1c] sm:$0xf]
  %v79 = vld [vmem:[%s4] sm:$0x1]
  %v81 = vperm.slane %v79, 0
  %v91 = vunpack.c.l.b16 %v71
  %v92 = vunpack.c.l.b16 %v72
  %v93 = vunpack.c.l.b16 %v73
  %v94 = vunpack.c.l.b16 %v74
  %v95 = vunpack.c.l.b16 %v75
  %v96 = vunpack.c.l.b16 %v76
  %v97 = vunpack.c.l.b16 %v77
  %v98 = vunpack.c.l.b16 %v78
  %v99 = vpack.c.b16 %v92, %v91
  %v100 = vpack.c.b16 %v94, %v93
  %v101 = vpack.c.b16 %v96, %v95
  %v102 = vpack.c.b16 %v98, %v97
  %vm107 = vcmask 523264
  %v109 = vsel %vm107, %v70, 0
  %111 = vmatpush.bf16.msra.mxu0 0
  %112 = vmatpush.bf16.msra.mxu0 0
  %113 = vmatpush.bf16.msra.mxu0 0
  %114 = vmatpush.bf16.msra.mxu0 0
  %115 = vmatpush.bf16.msra.mxu0 %v102
  %116 = vmatpush.bf16.msra.mxu0 %v101
  %117 = vmatpush.bf16.msra.mxu0 %v100
  %118 = vmatpush.bf16.msra.mxu0 %v99
  %119 = vmatmul.bf16.gmra.mxu0 %v109
  %v120 = vpop.f32.mrf.mxu0
  %v121 = vadd.f32 %v81, %v120
  %v122 = vpop.f32.mrf.mxu0
  %v123 = vadd.f32 %v81, %v122
  %124 = vdwg.mxu0
  %v125 = vadd.f32 %v121, %v27
  %v126 = vadd.f32 %v123, %v28
  %v127 = vld [vmem:[%s5] sm:$0x1]
  %v128 = vld [vmem:[%s6] sm:$0x1]
  %v129 = vsel %vm50, %v125, 0.0
  %130 = vadd.xlane.f32.xlu0 %v129
  %v131 = vpop.xlane.xlu0 %130
  %v132 = vsel %vm50, %v126, 0.0
  %133 = vadd.xlane.f32.xlu0 %v132
  %v134 = vpop.xlane.xlu0 %133
  %v135 = vrcp.pop 32.0
  %v136 = vmul.f32 32.0, %v135
  %v137 = vsub.f32 1.0, %v136
  %v138 = vmul.f32 %v135, %v137
  %v139 = vadd.f32 %v135, %v138
  %vm140 = vweird.f32 %v135
  %v141 = vsel %vm140, %v135, %v139
  %v142 = vmul.f32 %v131, %v141
  %v143 = vmul.f32 %v134, %v141
  %v144 = vsub.f32 %v125, %v142
  %v145 = vsub.f32 %v126, %v143
  %v146 = vmul.f32 %v144, %v144
  %v147 = vmul.f32 %v145, %v145
  %v148 = vsel %vm50, %v146, 0.0
  %149 = vadd.xlane.f32.xlu0 %v148
  %v150 = vpop.xlane.xlu0 %149
  %v151 = vsel %vm50, %v147, 0.0
  %152 = vadd.xlane.f32.xlu0 %v151
  %v153 = vpop.xlane.xlu0 %152
  %v154 = vmul.f32 %v150, %v141
  %v155 = vmul.f32 %v153, %v141
  %v156 = vadd.f32 %v154, 1e-05
  %v157 = vadd.f32 %v155, 1e-05
  %v158 = vrsqrt.pop %v156
  %v159 = vmul.f32 %v158, %v156
  %v160 = vmul.f32 %v159, %v158
  %v161 = vmul.f32 0.5, %v160
  %v162 = vsub.f32 1.5, %v161
  %v163 = vmul.f32 %v158, %v162
  %vm164 = vweird.f32 %v156
  %vm165 = vweird.f32 %v158
  %vm166 = vmor %vm164, %vm165
  %v167 = vsel %vm166, %v158, %v163
  %v168 = vrsqrt.pop %v157
  %v169 = vmul.f32 %v168, %v157
  %v170 = vmul.f32 %v169, %v168
  %v171 = vmul.f32 0.5, %v170
  %v172 = vsub.f32 1.5, %v171
  %v173 = vmul.f32 %v168, %v172
  %vm174 = vweird.f32 %v157
  %vm175 = vweird.f32 %v168
  %vm176 = vmor %vm174, %vm175
  %v177 = vsel %vm176, %v168, %v173
  %v178 = vmul.f32 %v144, %v167
  %v179 = vmul.f32 %v145, %v177
  %v181 = vperm.slane %v127, 0
  %v183 = vmul.f32 %v178, %v181
  %v184 = vmul.f32 %v179, %v181
  %v186 = vperm.slane %v128, 0
  %v188 = vadd.f32 %v183, %v186
  %v189 = vadd.f32 %v184, %v186
  %190 = vst.msk [vmem:[%s7] sm:$0xff] %vm50, %v188
  %191 = vst.msk [vmem:[%s7 + $0x8] sm:$0xff] %vm50, %v189
  // Predicated region
  $region30: #{decoder_forward.9} parent=0 // pred_check
    _
  $region31: #{decoder_forward.9} parent=0 // pred_check_branch
    %193 = sbr.rel (0) target = $region33
  $region32: #{decoder_forward.9} parent=0 // pred_region
    _
  $region33: #{decoder_forward.9} parent=0 // pred_fallthru
    _
  // Predicated region
  $region34: #{decoder_forward.9} parent=0 // pred_check
    _
  $region35: #{decoder_forward.9} parent=0 // pred_check_branch
    %195 = sbr.rel (0) target = $region37
  $region36: #{decoder_forward.9} parent=0 // pred_region
    _
  $region37: #{decoder_forward.9} parent=0 // pred_fallthru
    _

// kernel: decoder_forward.7
$region0: #{decoder_forward.7}
  #allocation0 [shape = 'u32[]', space=smem, size = 0x4, offset = 0x4, fixed_abs, tag = 'smem constant byte address 0x4 - core index']
  #allocation1 [shape = 'u32[72,128]{1,0:T(1,128)}', space=vmem, size = 0x9000, scoped, tag = 'internal scratch']
  %s0 = inlined_call_operand.vmem [shape: f32[2,8,32], index: 0, kind: input, shape index: {}]
  %s1 = inlined_call_operand.vmem [shape: f32[8,8], index: 1, kind: input, shape index: {}]
  %s2 = inlined_call_operand.vmem [shape: bf16[32,96], index: 2, kind: input, shape index: {}]
  %s3 = inlined_call_operand.vmem [shape: f32[1,96], index: 3, kind: input, shape index: {}]
  %s4 = inlined_call_operand.vmem [shape: bf16[32,32], index: 4, kind: input, shape index: {}]
  %s5 = inlined_call_operand.vmem [shape: f32[1,32], index: 5, kind: input, shape index: {}]
  %s6 = inlined_call_operand.vmem [shape: f32[1,32], index: 6, kind: input, shape index: {}]
  %s7 = inlined_call_operand.vmem [shape: f32[1,32], index: 7, kind: input, shape index: {}]
  %s8 = inlined_call_operand.vmem [shape: f32[2,8,32], index: 8, kind: output, shape index: {}]
  %s9 = sld [smem:[#allocation0]]
  $region65: #{decoder_forward.7} parent=0
    _
  %s11 = ssub.s32 1, %s9
  %s12 = scalar_select 0, %s11, %s9
  loop: start=0, step=1, limit=4
  $region2: #{decoder_forward.7} parent=0 // loop_pre_header
    _
  $region3: #{decoder_forward.7} parent=0 // loop_header
    %s14 = sphi 0, %s18
    %p15 = scmp.ge.s32.totalorder %s14, 4
    %s24 = sphi 0, %s26
    %s27 = sphi 0, %s24
    %s28 = sphi 0, %s27
    %s44 = sphi 0, %s28
    %s48 = sphi 0, %s48
    %s50 = sphi 0, %s48
    %s51 = sphi 0, %s50
    %s65 = sphi 0, %s51
    %s69 = sphi 0, %s69
    %s71 = sphi 0, %s69
    %s72 = sphi 0, %s71
    %s86 = sphi 0, %s72
    %s90 = sphi 0, %s90
    %s92 = sphi 0, %s90
    %s93 = sphi 0, %s92
    %s107 = sphi 0, %s93
    %s111 = sphi 0, %s111
    %s113 = sphi 0, %s111
    %s114 = sphi 0, %s113
    %s128 = sphi 0, %s114
    %s132 = sphi 0, %s132
    %s134 = sphi 0, %s132
    %s135 = sphi 0, %s134
    %s149 = sphi 0, %s135
    %s153 = sphi 0, %s153
    %s155 = sphi 0, %s153
    %s156 = sphi 0, %s155
    %s170 = sphi 0, %s156
    %s174 = sphi 0, %s174
    %s176 = sphi 0, %s174
    %s177 = sphi 0, %s176
    %s191 = sphi 0, %s177
    %s197 = sphi 0, %s199
    %s200 = sphi 0, %s197
    %s201 = sphi 0, %s200
    %s217 = sphi 0, %s201
  $region4: #{decoder_forward.7} parent=0 // loop_header_branch
    %17 = sbr.rel (%p15) target = $region8
  $region5: #{decoder_forward.7} parent=0 // loop_body
    %s19 = ssub.s32 %s14, 1
    %s20 = ssub.s32 %s14, 2
    %s21 = sadd.s32 %s14, 1
    %s22 = ssub.s32 %s14, %s21
    %p23 = scmp.eq.s32.totalorder %s22, 0
    %s25 = sadd.s32 %s24, 1
    %s26 = scalar_select %p23, %s24, %s25
    %p29 = pneg %p23
    %p30 = scmp.eq.s32.totalorder %s14, 1
    %p31 = por %p29, %p30
    %p32 = scmp.ne.s32.totalorder %s24, %s27
    %p33 = scmp.eq.s32.totalorder %s14, 0
    %p34 = por %p32, %p33
    %p35 = scmp.ne.s32.totalorder %s24, %s27
    %p36 = scmp.eq.s32.totalorder %s19, 1
    %p37 = por %p35, %p36
    %p38 = scmp.ne.s32.totalorder %s27, %s28
    %p39 = scmp.eq.s32.totalorder %s19, 0
    %p40 = por %p38, %p39
    %p41 = scmp.ne.s32.totalorder %s27, %s28
    %p42 = scmp.eq.s32.totalorder %s20, 1
    %p43 = por %p41, %p42
    %p45 = scmp.ne.s32.totalorder %s28, %s44
    %p46 = scmp.eq.s32.totalorder %s20, 0
    %p47 = por %p45, %p46
    %s49 = sadd.s32 %s48, 1
    %p52 = scmp.eq.s32.totalorder %s14, 1
    %p53 = scmp.ne.s32.totalorder %s48, %s50
    %p54 = scmp.eq.s32.totalorder %s14, 0
    %p55 = por %p53, %p54
    %p56 = scmp.ne.s32.totalorder %s48, %s50
    %p57 = scmp.eq.s32.totalorder %s19, 1
    %p58 = por %p56, %p57
    %p59 = scmp.ne.s32.totalorder %s50, %s51
    %p60 = scmp.eq.s32.totalorder %s19, 0
    %p61 = por %p59, %p60
    %p62 = scmp.ne.s32.totalorder %s50, %s51
    %p63 = scmp.eq.s32.totalorder %s20, 1
    %p64 = por %p62, %p63
    %p66 = scmp.ne.s32.totalorder %s51, %s65
    %p67 = scmp.eq.s32.totalorder %s20, 0
    %p68 = por %p66, %p67
    %s70 = sadd.s32 %s69, 1
    %p73 = scmp.eq.s32.totalorder %s14, 1
    %p74 = scmp.ne.s32.totalorder %s69, %s71
    %p75 = scmp.eq.s32.totalorder %s14, 0
    %p76 = por %p74, %p75
    %p77 = scmp.ne.s32.totalorder %s69, %s71
    %p78 = scmp.eq.s32.totalorder %s19, 1
    %p79 = por %p77, %p78
    %p80 = scmp.ne.s32.totalorder %s71, %s72
    %p81 = scmp.eq.s32.totalorder %s19, 0
    %p82 = por %p80, %p81
    %p83 = scmp.ne.s32.totalorder %s71, %s72
    %p84 = scmp.eq.s32.totalorder %s20, 1
    %p85 = por %p83, %p84
    %p87 = scmp.ne.s32.totalorder %s72, %s86
    %p88 = scmp.eq.s32.totalorder %s20, 0
    %p89 = por %p87, %p88
    %s91 = sadd.s32 %s90, 1
    %p94 = scmp.eq.s32.totalorder %s14, 1
    %p95 = scmp.ne.s32.totalorder %s90, %s92
    %p96 = scmp.eq.s32.totalorder %s14, 0
    %p97 = por %p95, %p96
    %p98 = scmp.ne.s32.totalorder %s90, %s92
    %p99 = scmp.eq.s32.totalorder %s19, 1
    %p100 = por %p98, %p99
    %p101 = scmp.ne.s32.totalorder %s92, %s93
    %p102 = scmp.eq.s32.totalorder %s19, 0
    %p103 = por %p101, %p102
    %p104 = scmp.ne.s32.totalorder %s92, %s93
    %p105 = scmp.eq.s32.totalorder %s20, 1
    %p106 = por %p104, %p105
    %p108 = scmp.ne.s32.totalorder %s93, %s107
    %p109 = scmp.eq.s32.totalorder %s20, 0
    %p110 = por %p108, %p109
    %s112 = sadd.s32 %s111, 1
    %p115 = scmp.eq.s32.totalorder %s14, 1
    %p116 = scmp.ne.s32.totalorder %s111, %s113
    %p117 = scmp.eq.s32.totalorder %s14, 0
    %p118 = por %p116, %p117
    %p119 = scmp.ne.s32.totalorder %s111, %s113
    %p120 = scmp.eq.s32.totalorder %s19, 1
    %p121 = por %p119, %p120
    %p122 = scmp.ne.s32.totalorder %s113, %s114
    %p123 = scmp.eq.s32.totalorder %s19, 0
    %p124 = por %p122, %p123
    %p125 = scmp.ne.s32.totalorder %s113, %s114
    %p126 = scmp.eq.s32.totalorder %s20, 1
    %p127 = por %p125, %p126
    %p129 = scmp.ne.s32.totalorder %s114, %s128
    %p130 = scmp.eq.s32.totalorder %s20, 0
    %p131 = por %p129, %p130
    %s133 = sadd.s32 %s132, 1
    %p136 = scmp.eq.s32.totalorder %s14, 1
    %p137 = scmp.ne.s32.totalorder %s132, %s134
    %p138 = scmp.eq.s32.totalorder %s14, 0
    %p139 = por %p137, %p138
    %p140 = scmp.ne.s32.totalorder %s132, %s134
    %p141 = scmp.eq.s32.totalorder %s19, 1
    %p142 = por %p140, %p141
    %p143 = scmp.ne.s32.totalorder %s134, %s135
    %p144 = scmp.eq.s32.totalorder %s19, 0
    %p145 = por %p143, %p144
    %p146 = scmp.ne.s32.totalorder %s134, %s135
    %p147 = scmp.eq.s32.totalorder %s20, 1
    %p148 = por %p146, %p147
    %p150 = scmp.ne.s32.totalorder %s135, %s149
    %p151 = scmp.eq.s32.totalorder %s20, 0
    %p152 = por %p150, %p151
    %s154 = sadd.s32 %s153, 1
    %p157 = scmp.eq.s32.totalorder %s14, 1
    %p158 = scmp.ne.s32.totalorder %s153, %s155
    %p159 = scmp.eq.s32.totalorder %s14, 0
    %p160 = por %p158, %p159
    %p161 = scmp.ne.s32.totalorder %s153, %s155
    %p162 = scmp.eq.s32.totalorder %s19, 1
    %p163 = por %p161, %p162
    %p164 = scmp.ne.s32.totalorder %s155, %s156
    %p165 = scmp.eq.s32.totalorder %s19, 0
    %p166 = por %p164, %p165
    %p167 = scmp.ne.s32.totalorder %s155, %s156
    %p168 = scmp.eq.s32.totalorder %s20, 1
    %p169 = por %p167, %p168
    %p171 = scmp.ne.s32.totalorder %s156, %s170
    %p172 = scmp.eq.s32.totalorder %s20, 0
    %p173 = por %p171, %p172
    %s175 = sadd.s32 %s174, 1
    %p178 = scmp.eq.s32.totalorder %s14, 1
    %p179 = scmp.ne.s32.totalorder %s174, %s176
    %p180 = scmp.eq.s32.totalorder %s14, 0
    %p181 = por %p179, %p180
    %p182 = scmp.ne.s32.totalorder %s174, %s176
    %p183 = scmp.eq.s32.totalorder %s19, 1
    %p184 = por %p182, %p183
    %p185 = scmp.ne.s32.totalorder %s176, %s177
    %p186 = scmp.eq.s32.totalorder %s19, 0
    %p187 = por %p185, %p186
    %p188 = scmp.ne.s32.totalorder %s176, %s177
    %p189 = scmp.eq.s32.totalorder %s20, 1
    %p190 = por %p188, %p189
    %p192 = scmp.ne.s32.totalorder %s177, %s191
    %p193 = scmp.eq.s32.totalorder %s20, 0
    %p194 = por %p192, %p193
    %s195 = ssub.s32 %s14, %s21
    %p196 = scmp.eq.s32.totalorder %s195, 0
    %s198 = sadd.s32 %s197, 1
    %s199 = scalar_select %p196, %s197, %s198
    %p202 = pneg %p196
    %p203 = scmp.eq.s32.totalorder %s14, 1
    %p204 = por %p202, %p203
    %p205 = scmp.ne.s32.totalorder %s197, %s200
    %p206 = scmp.eq.s32.totalorder %s14, 0
    %p207 = por %p205, %p206
    %p208 = scmp.ne.s32.totalorder %s197, %s200
    %p209 = scmp.eq.s32.totalorder %s19, 1
    %p210 = por %p208, %p209
    %p211 = scmp.ne.s32.totalorder %s200, %s201
    %p212 = scmp.eq.s32.totalorder %s19, 0
    %p213 = por %p211, %p212
    %p214 = scmp.ne.s32.totalorder %s200, %s201
    %p215 = scmp.eq.s32.totalorder %s20, 1
    %p216 = por %p214, %p215
    %p218 = scmp.ne.s32.totalorder %s201, %s217
    %p219 = scmp.eq.s32.totalorder %s20, 0
    %p220 = por %p218, %p219
    %p221 = scmp.le.s32.totalorder 1, %s14
    %p222 = scmp.lt.s32.totalorder %s14, 3
    %p223 = pnand %p221, %p222
    %p224 = pneg %p223
    // Predicated region
    $region9: #{decoder_forward.7} parent=5 // pred_check
      _
    $region10: #{decoder_forward.7} parent=5 // pred_check_branch
      %226 = sbr.rel (%p223) target = $region12
    $region11: #{decoder_forward.7} parent=5 // pred_region
      %s227 = ssub.s32 %s14, 1
      // Predicated region
      $region13: #{decoder_forward.7} parent=11 // pred_check
        %p228 = pneg %p61
      $region14: #{decoder_forward.7} parent=11 // pred_check_branch
        %230 = sbr.rel (%p228) target = $region16
      $region15: #{decoder_forward.7} parent=11 // pred_region
        _
      $region16: #{decoder_forward.7} parent=11 // pred_fallthru
        _
      // Predicated region
      $region17: #{decoder_forward.7} parent=11 // pred_check
        %p231 = pneg %p82
      $region18: #{decoder_forward.7} parent=11 // pred_check_branch
        %233 = sbr.rel (%p231) target = $region20
      $region19: #{decoder_forward.7} parent=11 // pred_region
        _
      $region20: #{decoder_forward.7} parent=11 // pred_fallthru
        _
      // Predicated region
      $region21: #{decoder_forward.7} parent=11 // pred_check
        %p234 = pneg %p103
      $region22: #{decoder_forward.7} parent=11 // pred_check_branch
        %236 = sbr.rel (%p234) target = $region24
      $region23: #{decoder_forward.7} parent=11 // pred_region
        _
      $region24: #{decoder_forward.7} parent=11 // pred_fallthru
        _
      // Predicated region
      $region25: #{decoder_forward.7} parent=11 // pred_check
        %p237 = pneg %p124
      $region26: #{decoder_forward.7} parent=11 // pred_check_branch
        %239 = sbr.rel (%p237) target = $region28
      $region27: #{decoder_forward.7} parent=11 // pred_region
        _
      $region28: #{decoder_forward.7} parent=11 // pred_fallthru
        _
      // Predicated region
      $region29: #{decoder_forward.7} parent=11 // pred_check
        %p240 = pneg %p145
      $region30: #{decoder_forward.7} parent=11 // pred_check_branch
        %242 = sbr.rel (%p240) target = $region32
      $region31: #{decoder_forward.7} parent=11 // pred_region
        _
      $region32: #{decoder_forward.7} parent=11 // pred_fallthru
        _
      // Predicated region
      $region33: #{decoder_forward.7} parent=11 // pred_check
        %p243 = pneg %p166
      $region34: #{decoder_forward.7} parent=11 // pred_check_branch
        %245 = sbr.rel (%p243) target = $region36
      $region35: #{decoder_forward.7} parent=11 // pred_region
        _
      $region36: #{decoder_forward.7} parent=11 // pred_fallthru
        _
      // Predicated region
      $region37: #{decoder_forward.7} parent=11 // pred_check
        %p246 = pneg %p187
      $region38: #{decoder_forward.7} parent=11 // pred_check_branch
        %248 = sbr.rel (%p246) target = $region40
      $region39: #{decoder_forward.7} parent=11 // pred_region
        _
      $region40: #{decoder_forward.7} parent=11 // pred_fallthru
        _
    $region12: #{decoder_forward.7} parent=5 // pred_fallthru
      _
    %p249 = scmp.lt.s32.totalorder %s14, 2
    // Predicated region
    $region41: #{decoder_forward.7} parent=5 // pred_check
      %p250 = pneg %p249
    $region42: #{decoder_forward.7} parent=5 // pred_check_branch
      %252 = sbr.rel (%p250) target = $region44
    $region43: #{decoder_forward.7} parent=5 // pred_region
      // Predicated region
      $region45: #{decoder_forward.7} parent=43 // pred_check
        %p253 = pneg %p34
      $region46: #{decoder_forward.7} parent=43 // pred_check_branch
        %255 = sbr.rel (%p253) target = $region48
      $region47: #{decoder_forward.7} parent=43 // pred_region
        %p256 = scmp.lt.s32.totalorder %s14, 1
        %s257 = scalar_select %p256, %s14, 1
        %s258 = smul.addr %s257, 8
        %s259 = scalar_lea.vmem %s0, %s258
      $region48: #{decoder_forward.7} parent=43 // pred_fallthru
        _
    $region44: #{decoder_forward.7} parent=5 // pred_fallthru
      _
    %p260 = scmp.le.s32.totalorder 1, %s14
    %p261 = scmp.lt.s32.totalorder %s14, 3
    %p262 = pnand %p260, %p261
    %p263 = pneg %p262
    // Predicated region
    $region49: #{decoder_forward.7} parent=5 // pred_check
      _
    $region50: #{decoder_forward.7} parent=5 // pred_check_branch
      %265 = sbr.rel (%p262) target = $region52
    $region51: #{decoder_forward.7} parent=5 // pred_region
      %s266 = ssub.s32 %s14, 1
      %p267 = scmp.lt.s32.totalorder %s19, 1
      %s268 = scalar_select %p267, %s19, 1
      %s269 = smul.addr %s268, 8
      %s270 = scalar_lea.vmem %s0, %s269
      %p271 = pneg %p40
      %p272 = pneg %p37
      %p273 = pneg %p61
      %p274 = pneg %p58
      %p275 = pneg %p82
      %p276 = pneg %p79
      %p277 = pneg %p103
      %p278 = pneg %p100
      %p279 = pneg %p124
      %p280 = pneg %p121
      %p281 = pneg %p145
      %p282 = pneg %p142
      %p283 = pneg %p166
      %p284 = pneg %p163
      %p285 = pneg %p187
      %p286 = pneg %p184
      %p287 = pneg %p213
      %p288 = pneg %p210
      %p289 = scmp.lt.s32.totalorder %s19, 1
      %s290 = scalar_select %p289, %s19, 1
      %s291 = smul.addr %s290, 8
      %s292 = scalar_lea.vmem %s8, %s291
      %p293 = scmp.lt.s32.totalorder %s19, 1
      %s294 = scalar_select %p293, %s19, 1
      %s295 = smul.addr %s294, 8
      %s296 = scalar_lea.vmem %s0, %s295
      %p297 = scmp.lt.s32.totalorder %s19, 1
      %s298 = scalar_select %p297, %s19, 1
      %s299 = smul.addr %s298, 8
      %s300 = scalar_lea.vmem %s8, %s299
      %v302 = vld [vmem:[%s296] sm:$0xff]
      %v303 = vpack.c.bf16 %v302, %v302
      %v304 = vld [vmem:[%s2] sm:$0xf]
      %v305 = vld [vmem:[%s2 + $0x4] sm:$0xf]
      %v306 = vld [vmem:[%s2 + $0x8] sm:$0xf]
      %v307 = vld [vmem:[%s2 + $0xc] sm:$0xf]
      %v308 = vld [vmem:[%s3] sm:$0x1]
      %v310 = vperm.slane %v308, 0
      %v316 = vunpack.c.l.b16 %v304
      %v317 = vunpack.c.l.b16 %v305
      %v318 = vunpack.c.l.b16 %v306
      %v319 = vunpack.c.l.b16 %v307
      %v320 = vpack.c.b16 %v317, %v316
      %v321 = vpack.c.b16 %v319, %v318
      %vm324 = vcmask 261120
      %v326 = vsel %vm324, %v303, 0
      %328 = vmatpush.bf16.msra.mxu0 0
      %329 = vmatpush.bf16.msra.mxu0 0
      %330 = vmatpush.bf16.msra.mxu0 0
      %331 = vmatpush.bf16.msra.mxu0 0
      %332 = vmatpush.bf16.msra.mxu0 0
      %333 = vmatpush.bf16.msra.mxu0 0
      %334 = vmatpush.bf16.msra.mxu0 %v321
      %335 = vmatpush.bf16.msra.mxu0 %v320
      %336 = vmatmul.bf16.gmra.mxu0 %v326
      %v337 = vpop.f32.mrf.mxu0
      %v338 = vadd.f32 %v310, %v337
      %v339 = vpop.f32.mrf.mxu0
      %340 = vdwg.mxu0
      %v341 = vld [vmem:[%s1] sm:$0xff]
      %v342 = vpack.c.bf16 %v338, %v338
      %344 = vrot.lane.b32.xlu0 %v342, 96
      %v345 = vpop.permute.xlu0 %344
      %vm346 = vcmask 64512
      %v348 = vsel %vm346, %v342, 0
      %v351 = vsel %vm346, %v345, 0
      %353 = vmatpush.bf16.xpose.msra.mxu0 0
      %354 = vmatpush.bf16.xpose.msra.mxu0 0
      %355 = vmatpush.bf16.xpose.msra.mxu0 0
      %356 = vmatpush.bf16.xpose.msra.mxu0 0
      %357 = vmatpush.bf16.xpose.msra.mxu0 0
      %358 = vmatpush.bf16.xpose.msra.mxu0 0
      %359 = vmatpush.bf16.xpose.msra.mxu0 0
      %360 = vmatpush.bf16.xpose.msra.mxu0 %v351
      %361 = vmatmul.bf16.gmra.mxu0 %v348
      %v362 = vpop.f32.mrf.mxu0
      %v363 = vadd.f32 0.0, %v362
      %v364 = vpop.f32.mrf.mxu0
      %365 = vdwg.mxu0
      %v366 = vmul.f32 %v363, 0.35355338
      %v367 = vadd.f32 %v366, %v341
      %v368 = vsel %vm346, %v367, -inf
      %369 = vmax.xlane.f32.xlu0 %v368
      %v370 = vpop.xlane.xlu0 %369
      %v371 = vsub.f32 %v367, %v370
      %v372 = vmul.f32 %v371, 1.442695
      %v373 = vpow.pop %v372
      %v374 = vsel %vm346, %v373, 0.0
      %375 = vadd.xlane.f32.xlu0 %v374
      %v376 = vpop.xlane.xlu0 %375
      %v377 = vrcp.pop %v376
      %v378 = vmul.f32 %v373, %v377
      %v379 = vpack.c.bf16 %v378, %v378
      %380 = vrot.lane.b32.xlu0 %v342, 64
      %v381 = vpop.permute.xlu0 %380
      %v383 = vsel %vm346, %v379, 0
      %vm385 = vcmask 1043456
      %v387 = vsel %vm385, %v381, 0
      %389 = vmatpush.bf16.msra.mxu0 0
      %390 = vmatpush.bf16.msra.mxu0 0
      %391 = vmatpush.bf16.msra.mxu0 0
      %392 = vmatpush.bf16.msra.mxu0 0
      %393 = vmatpush.bf16.msra.mxu0 0
      %394 = vmatpush.bf16.msra.mxu0 0
      %395 = vmatpush.bf16.msra.mxu0 0
      %396 = vmatpush.bf16.msra.mxu0 %v387
      %397 = vmatmul.bf16.gmra.mxu0 %v383
      %v398 = vpop.f32.mrf.mxu0
      %v399 = vadd.f32 0.0, %v398
      %v400 = vpop.f32.mrf.mxu0
      %401 = vdwg.mxu0
      %v402 = vpack.c.bf16 %v399, %v399
      %v403 = vld [vmem:[%s4] sm:$0xf]
      %404 = vrot.lane.b32.xlu0 %v342, 120
      %v405 = vpop.permute.xlu0 %404
      %406 = vrot.lane.b32.xlu0 %v342, 88
      %v407 = vpop.permute.xlu0 %406
      %v409 = vsel %vm346, %v405, 0
      %v412 = vsel %vm346, %v407, 0
      %414 = vmatpush.bf16.xpose.msra.mxu0 0
      %415 = vmatpush.bf16.xpose.msra.mxu0 0
      %416 = vmatpush.bf16.xpose.msra.mxu0 0
      %417 = vmatpush.bf16.xpose.msra.mxu0 0
      %418 = vmatpush.bf16.xpose.msra.mxu0 0
      %419 = vmatpush.bf16.xpose.msra.mxu0 0
      %420 = vmatpush.bf16.xpose.msra.mxu0 0
      %421 = vmatpush.bf16.xpose.msra.mxu0 %v412
      %422 = vmatmul.bf16.gmra.mxu0 %v409
      %v423 = vpop.f32.mrf.mxu0
      %v424 = vadd.f32 0.0, %v423
      %v425 = vpop.f32.mrf.mxu0
      %426 = vdwg.mxu0
      %v427 = vmul.f32 %v424, 0.35355338
      %v428 = vadd.f32 %v427, %v341
      %v429 = vsel %vm346, %v428, -inf
      %430 = vmax.xlane.f32.xlu0 %v429
      %v431 = vpop.xlane.xlu0 %430
      %v432 = vsub.f32 %v428, %v431
      %v433 = vmul.f32 %v432, 1.442695
      %v434 = vpow.pop %v433
      %v435 = vsel %vm346, %v434, 0.0
      %436 = vadd.xlane.f32.xlu0 %v435
      %v437 = vpop.xlane.xlu0 %436
      %v438 = vrcp.pop %v437
      %v439 = vmul.f32 %v434, %v438
      %v440 = vpack.c.bf16 %v439, %v439
      %441 = vrot.lane.b32.xlu0 %v342, 56
      %v442 = vpop.permute.xlu0 %441
      %v444 = vsel %vm346, %v440, 0
      %v447 = vsel %vm385, %v442, 0
      %449 = vmatpush.bf16.msra.mxu0 0
      %450 = vmatpush.bf16.msra.mxu0 0
      %451 = vmatpush.bf16.msra.mxu0 0
      %452 = vmatpush.bf16.msra.mxu0 0
      %453 = vmatpush.bf16.msra.mxu0 0
      %454 = vmatpush.bf16.msra.mxu0 0
      %455 = vmatpush.bf16.msra.mxu0 0
      %456 = vmatpush.bf16.msra.mxu0 %v447
      %457 = vmatmul.bf16.gmra.mxu0 %v444
      %v458 = vpop.f32.mrf.mxu0
      %v459 = vadd.f32 0.0, %v458
      %v460 = vpop.f32.mrf.mxu0
      %461 = vdwg.mxu0
      %v462 = vpack.c.bf16 %v459, %v459
      %v463 = vld [vmem:[%s4 + $0x4] sm:$0xf]
      %v465 = vsel %vm346, %v462, 0
      %v468 = vsel %vm385, %v463, 0
      %470 = vmatpush.bf16.msra.mxu0 0
      %471 = vmatpush.bf16.msra.mxu0 0
      %472 = vmatpush.bf16.msra.mxu0 0
      %473 = vmatpush.bf16.msra.mxu0 0
      %474 = vmatpush.bf16.msra.mxu0 0
      %475 = vmatpush.bf16.msra.mxu0 0
      %476 = vmatpush.bf16.msra.mxu0 0
      %477 = vmatpush.bf16.msra.mxu0 %v468
      %478 = vmatmul.bf16.gmra.mxu0 %v465
      %v479 = vpop.f32.mrf.mxu0
      %v480 = vadd.f32 0.0, %v479
      %v481 = vpop.f32.mrf.mxu0
      %482 = vdwg.mxu0
      %v484 = vsel %vm346, %v402, 0
      %v487 = vsel %vm385, %v403, 0
      %489 = vmatpush.bf16.msra.mxu0 0
      %490 = vmatpush.bf16.msra.mxu0 0
      %491 = vmatpush.bf16.msra.mxu0 0
      %492 = vmatpush.bf16.msra.mxu0 0
      %493 = vmatpush.bf16.msra.mxu0 0
      %494 = vmatpush.bf16.msra.mxu0 0
      %495 = vmatpush.bf16.msra.mxu0 0
      %496 = vmatpush.bf16.msra.mxu0 %v487
      %497 = vmatmul.bf16.gmra.mxu0 %v484
      %v498 = vpop.f32.mrf.mxu0
      %v499 = vadd.f32 %v480, %v498
      %v500 = vpop.f32.mrf.mxu0
      %501 = vdwg.mxu0
      %502 = vrot.lane.b32.xlu0 %v342, 112
      %v503 = vpop.permute.xlu0 %502
      %504 = vrot.lane.b32.xlu0 %v342, 80
      %v505 = vpop.permute.xlu0 %504
      %v507 = vsel %vm346, %v503, 0
      %v510 = vsel %vm346, %v505, 0
      %512 = vmatpush.bf16.xpose.msra.mxu0 0
      %513 = vmatpush.bf16.xpose.msra.mxu0 0
      %514 = vmatpush.bf16.xpose.msra.mxu0 0
      %515 = vmatpush.bf16.xpose.msra.mxu0 0
      %516 = vmatpush.bf16.xpose.msra.mxu0 0
      %517 = vmatpush.bf16.xpose.msra.mxu0 0
      %518 = vmatpush.bf16.xpose.msra.mxu0 0
      %519 = vmatpush.bf16.xpose.msra.mxu0 %v510
      %520 = vmatmul.bf16.gmra.mxu0 %v507
      %v521 = vpop.f32.mrf.mxu0
      %v522 = vadd.f32 0.0, %v521
      %v523 = vpop.f32.mrf.mxu0
      %524 = vdwg.mxu0
      %v525 = vmul.f32 %v522, 0.35355338
      %v526 = vadd.f32 %v525, %v341
      %v527 = vsel %vm346, %v526, -inf
      %528 = vmax.xlane.f32.xlu0 %v527
      %v529 = vpop.xlane.xlu0 %528
      %v530 = vsub.f32 %v526, %v529
      %v531 = vmul.f32 %v530, 1.442695
      %v532 = vpow.pop %v531
      %v533 = vsel %vm346, %v532, 0.0
      %534 = vadd.xlane.f32.xlu0 %v533
      %v535 = vpop.xlane.xlu0 %534
      %v536 = vrcp.pop %v535
      %v537 = vmul.f32 %v532, %v536
      %v538 = vpack.c.bf16 %v537, %v537
      %539 = vrot.lane.b32.xlu0 %v342, 48
      %v540 = vpop.permute.xlu0 %539
      %v542 = vsel %vm346, %v538, 0
      %v545 = vsel %vm385, %v540, 0
      %547 = vmatpush.bf16.msra.mxu0 0
      %548 = vmatpush.bf16.msra.mxu0 0
      %549 = vmatpush.bf16.msra.mxu0 0
      %550 = vmatpush.bf16.msra.mxu0 0
      %551 = vmatpush.bf16.msra.mxu0 0
      %552 = vmatpush.bf16.msra.mxu0 0
      %553 = vmatpush.bf16.msra.mxu0 0
      %554 = vmatpush.bf16.msra.mxu0 %v545
      %555 = vmatmul.bf16.gmra.mxu0 %v542
      %v556 = vpop.f32.mrf.mxu0
      %v557 = vadd.f32 0.0, %v556
      %v558 = vpop.f32.mrf.mxu0
      %559 = vdwg.mxu0
      %v560 = vpack.c.bf16 %v557, %v557
      %v561 = vld [vmem:[%s4 + $0x8] sm:$0xf]
      %v563 = vsel %vm346, %v560, 0
      %v566 = vsel %vm385, %v561, 0
      %568 = vmatpush.bf16.msra.mxu0 0
      %569 = vmatpush.bf16.msra.mxu0 0
      %570 = vmatpush.bf16.msra.mxu0 0
      %571 = vmatpush.bf16.msra.mxu0 0
      %572 = vmatpush.bf16.msra.mxu0 0
      %573 = vmatpush.bf16.msra.mxu0 0
      %574 = vmatpush.bf16.msra.mxu0 0
      %575 = vmatpush.bf16.msra.mxu0 %v566
      %576 = vmatmul.bf16.gmra.mxu0 %v563
      %v577 = vpop.f32.mrf.mxu0
      %v578 = vadd.f32 0.0, %v577
      %v579 = vpop.f32.mrf.mxu0
      %580 = vdwg.mxu0
      %v581 = vadd.f32 %v499, %v578
      %582 = vrot.lane.b32.xlu0 %v342, 104
      %v583 = vpop.permute.xlu0 %582
      %584 = vrot.lane.b32.xlu0 %v342, 72
      %v585 = vpop.permute.xlu0 %584
      %v587 = vsel %vm346, %v583, 0
      %v590 = vsel %vm346, %v585, 0
      %592 = vmatpush.bf16.xpose.msra.mxu0 0
      %593 = vmatpush.bf16.xpose.msra.mxu0 0
      %594 = vmatpush.bf16.xpose.msra.mxu0 0
      %595 = vmatpush.bf16.xpose.msra.mxu0 0
      %596 = vmatpush.bf16.xpose.msra.mxu0 0
      %597 = vmatpush.bf16.xpose.msra.mxu0 0
      %598 = vmatpush.bf16.xpose.msra.mxu0 0
      %599 = vmatpush.bf16.xpose.msra.mxu0 %v590
      %600 = vmatmul.bf16.gmra.mxu0 %v587
      %v601 = vpop.f32.mrf.mxu0
      %v602 = vadd.f32 0.0, %v601
      %v603 = vpop.f32.mrf.mxu0
      %604 = vdwg.mxu0
      %v605 = vmul.f32 %v602, 0.35355338
      %v606 = vadd.f32 %v605, %v341
      %v607 = vsel %vm346, %v606, -inf
      %608 = vmax.xlane.f32.xlu0 %v607
      %v609 = vpop.xlane.xlu0 %608
      %v610 = vsub.f32 %v606, %v609
      %v611 = vmul.f32 %v610, 1.442695
      %v612 = vpow.pop %v611
      %v613 = vsel %vm346, %v612, 0.0
      %614 = vadd.xlane.f32.xlu0 %v613
      %v615 = vpop.xlane.xlu0 %614
      %v616 = vrcp.pop %v615
      %v617 = vmul.f32 %v612, %v616
      %v618 = vpack.c.bf16 %v617, %v617
      %619 = vrot.lane.b32.xlu0 %v342, 40
      %v620 = vpop.permute.xlu0 %619
      %v622 = vsel %vm346, %v618, 0
      %v625 = vsel %vm385, %v620, 0
      %627 = vmatpush.bf16.msra.mxu0 0
      %628 = vmatpush.bf16.msra.mxu0 0
      %629 = vmatpush.bf16.msra.mxu0 0
      %630 = vmatpush.bf16.msra.mxu0 0
      %631 = vmatpush.bf16.msra.mxu0 0
      %632 = vmatpush.bf16.msra.mxu0 0
      %633 = vmatpush.bf16.msra.mxu0 0
      %634 = vmatpush.bf16.msra.mxu0 %v625
      %635 = vmatmul.bf16.gmra.mxu0 %v622
      %v636 = vpop.f32.mrf.mxu0
      %v637 = vadd.f32 0.0, %v636
      %v638 = vpop.f32.mrf.mxu0
      %639 = vdwg.mxu0
      %v640 = vpack.c.bf16 %v637, %v637
      %v641 = vld [vmem:[%s4 + $0xc] sm:$0xf]
      %v643 = vsel %vm346, %v640, 0
      %v646 = vsel %vm385, %v641, 0
      %648 = vmatpush.bf16.msra.mxu0 0
      %649 = vmatpush.bf16.msra.mxu0 0
      %650 = vmatpush.bf16.msra.mxu0 0
      %651 = vmatpush.bf16.msra.mxu0 0
      %652 = vmatpush.bf16.msra.mxu0 0
      %653 = vmatpush.bf16.msra.mxu0 0
      %654 = vmatpush.bf16.msra.mxu0 0
      %655 = vmatpush.bf16.msra.mxu0 %v646
      %656 = vmatmul.bf16.gmra.mxu0 %v643
      %v657 = vpop.f32.mrf.mxu0
      %v658 = vadd.f32 0.0, %v657
      %v659 = vpop.f32.mrf.mxu0
      %660 = vdwg.mxu0
      %v661 = vadd.f32 %v581, %v658
      %v662 = vld [vmem:[%s5] sm:$0x1]
      %v664 = vperm.slane %v662, 0
      %v666 = vadd.f32 %v661, %v664
      %v667 = vadd.f32 %v666, %v302
      %v668 = vld [vmem:[%s6] sm:$0x1]
      %v669 = vld [vmem:[%s7] sm:$0x1]
      %v670 = vsel %vm324, %v667, 0.0
      %671 = vadd.xlane.f32.xlu0 %v670
      %v672 = vpop.xlane.xlu0 %671
      %v673 = vrcp.pop 32.0
      %v674 = vmul.f32 32.0, %v673
      %v675 = vsub.f32 1.0, %v674
      %v676 = vmul.f32 %v673, %v675
      %v677 = vadd.f32 %v673, %v676
      %vm678 = vweird.f32 %v673
      %v679 = vsel %vm678, %v673, %v677
      %v680 = vmul.f32 %v672, %v679
      %v681 = vsub.f32 %v667, %v680
      %v682 = vmul.f32 %v681, %v681
      %v683 = vsel %vm324, %v682, 0.0
      %684 = vadd.xlane.f32.xlu0 %v683
      %v685 = vpop.xlane.xlu0 %684
      %v686 = vmul.f32 %v685, %v679
      %v687 = vadd.f32 %v686, 1e-05
      %v688 = vrsqrt.pop %v687
      %v689 = vmul.f32 %v688, %v687
      %v690 = vmul.f32 %v689, %v688
      %v691 = vmul.f32 0.5, %v690
      %v692 = vsub.f32 1.5, %v691
      %v693 = vmul.f32 %v688, %v692
      %vm694 = vweird.f32 %v687
      %vm695 = vweird.f32 %v688
      %vm696 = vmor %vm694, %vm695
      %v697 = vsel %vm696, %v688, %v693
      %v698 = vmul.f32 %v681, %v697
      %v700 = vperm.slane %v668, 0
      %v702 = vmul.f32 %v698, %v700
      %v704 = vperm.slane %v669, 0
      %v706 = vadd.f32 %v702, %v704
      %707 = vst.msk [vmem:[%s300] sm:$0xff] %vm324, %v706
      %p708 = scmp.lt.s32.totalorder %s19, 1
      %s709 = scalar_select %p708, %s19, 1
      %s710 = smul.addr %s709, 8
      %s711 = scalar_lea.vmem %s8, %s710
      // Predicated region
      $region53: #{decoder_forward.7} parent=51 // pred_check
        %p712 = pneg %p210
      $region54: #{decoder_forward.7} parent=51 // pred_check_branch
        %714 = sbr.rel (%p712) target = $region56
      $region55: #{decoder_forward.7} parent=51 // pred_region
        _
      $region56: #{decoder_forward.7} parent=51 // pred_fallthru
        _
    $region52: #{decoder_forward.7} parent=5 // pred_fallthru
      _
    %p715 = scmp.le.s32.totalorder 2, %s14
    // Predicated region
    $region57: #{decoder_forward.7} parent=5 // pred_check
      %p716 = pneg %p715
    $region58: #{decoder_forward.7} parent=5 // pred_check_branch
      %718 = sbr.rel (%p716) target = $region60
    $region59: #{decoder_forward.7} parent=5 // pred_region
      %s719 = ssub.s32 %s14, 2
      // Predicated region
      $region61: #{decoder_forward.7} parent=59 // pred_check
        %p720 = pneg %p216
      $region62: #{decoder_forward.7} parent=59 // pred_check_branch
        %722 = sbr.rel (%p720) target = $region64
      $region63: #{decoder_forward.7} parent=59 // pred_region
        %p723 = scmp.lt.s32.totalorder %s20, 1
        %s724 = scalar_select %p723, %s20, 1
        %s725 = smul.addr %s724, 8
        %s726 = scalar_lea.vmem %s8, %s725
      $region64: #{decoder_forward.7} parent=59 // pred_fallthru
        _
    $region60: #{decoder_forward.7} parent=5 // pred_fallthru
      _
  $region6: #{decoder_forward.7} parent=0 // loop_footer
    %s18 = sadd.s32 1, %s14
  $region7: #{decoder_forward.7} parent=0 // loop_footer_branch
    %13 = sbr.rel target = $region3
  $region8: #{decoder_forward.7} parent=0 // loop_exit
    _

// kernel: decoder_forward.8
$region0: #{decoder_forward.8}
  #allocation0 [shape = 'u32[]', space=smem, size = 0x4, offset = 0x4, fixed_abs, tag = 'smem constant byte address 0x4 - core index']
  #allocation1 [shape = 'u32[72,128]{1,0:T(1,128)}', space=vmem, size = 0x9000, scoped, tag = 'internal scratch']
  %s0 = inlined_call_operand.vmem [shape: f32[2,8,32], index: 0, kind: input, shape index: {}]
  %s1 = inlined_call_operand.vmem [shape: f32[2,8,32], index: 1, kind: input, shape index: {}]
  %s2 = inlined_call_operand.vmem [shape: f32[8,8], index: 2, kind: input, shape index: {}]
  %s3 = inlined_call_operand.vmem [shape: bf16[32,32], index: 3, kind: input, shape index: {}]
  %s4 = inlined_call_operand.vmem [shape: f32[1,32], index: 4, kind: input, shape index: {}]
  %s5 = inlined_call_operand.vmem [shape: bf16[32,64], index: 5, kind: input, shape index: {}]
  %s6 = inlined_call_operand.vmem [shape: f32[1,64], index: 6, kind: input, shape index: {}]
  %s7 = inlined_call_operand.vmem [shape: bf16[32,32], index: 7, kind: input, shape index: {}]
  %s8 = inlined_call_operand.vmem [shape: f32[1,32], index: 8, kind: input, shape index: {}]
  %s9 = inlined_call_operand.vmem [shape: f32[1,32], index: 9, kind: input, shape index: {}]
  %s10 = inlined_call_operand.vmem [shape: f32[1,32], index: 10, kind: input, shape index: {}]
  %s11 = inlined_call_operand.vmem [shape: f32[2,8,32], index: 11, kind: output, shape index: {}]
  %s12 = sld [smem:[#allocation0]]
  $region77: #{decoder_forward.8} parent=0
    _
  %s14 = ssub.s32 1, %s12
  %s15 = scalar_select 0, %s14, %s12
  loop: start=0, step=1, limit=4
  $region2: #{decoder_forward.8} parent=0 // loop_pre_header
    _
  $region3: #{decoder_forward.8} parent=0 // loop_header
    %s17 = sphi 0, %s21
    %p18 = scmp.ge.s32.totalorder %s17, 4
    %s27 = sphi 0, %s29
    %s30 = sphi 0, %s27
    %s31 = sphi 0, %s30
    %s47 = sphi 0, %s31
    %s53 = sphi 0, %s55
    %s56 = sphi 0, %s53
    %s57 = sphi 0, %s56
    %s73 = sphi 0, %s57
    %s77 = sphi 0, %s77
    %s79 = sphi 0, %s77
    %s80 = sphi 0, %s79
    %s94 = sphi 0, %s80
    %s98 = sphi 0, %s98
    %s100 = sphi 0, %s98
    %s101 = sphi 0, %s100
    %s115 = sphi 0, %s101
    %s119 = sphi 0, %s119
    %s121 = sphi 0, %s119
    %s122 = sphi 0, %s121
    %s136 = sphi 0, %s122
    %s140 = sphi 0, %s140
    %s142 = sphi 0, %s140
    %s143 = sphi 0, %s142
    %s157 = sphi 0, %s143
    %s161 = sphi 0, %s161
    %s163 = sphi 0, %s161
    %s164 = sphi 0, %s163
    %s178 = sphi 0, %s164
    %s182 = sphi 0, %s182
    %s184 = sphi 0, %s182
    %s185 = sphi 0, %s184
    %s199 = sphi 0, %s185
    %s203 = sphi 0, %s203
    %s205 = sphi 0, %s203
    %s206 = sphi 0, %s205
    %s220 = sphi 0, %s206
    %s224 = sphi 0, %s224
    %s226 = sphi 0, %s224
    %s227 = sphi 0, %s226
    %s241 = sphi 0, %s227
    %s245 = sphi 0, %s245
    %s247 = sphi 0, %s245
    %s248 = sphi 0, %s247
    %s262 = sphi 0, %s248
    %s268 = sphi 0, %s270
    %s271 = sphi 0, %s268
    %s272 = sphi 0, %s271
    %s288 = sphi 0, %s272
  $region4: #{decoder_forward.8} parent=0 // loop_header_branch
    %20 = sbr.rel (%p18) target = $region8
  $region5: #{decoder_forward.8} parent=0 // loop_body
    %s22 = ssub.s32 %s17, 1
    %s23 = ssub.s32 %s17, 2
    %s24 = sadd.s32 %s17, 1
    %s25 = ssub.s32 %s17, %s24
    %p26 = scmp.eq.s32.totalorder %s25, 0
    %s28 = sadd.s32 %s27, 1
    %s29 = scalar_select %p26, %s27, %s28
    %p32 = pneg %p26
    %p33 = scmp.eq.s32.totalorder %s17, 1
    %p34 = por %p32, %p33
    %p35 = scmp.ne.s32.totalorder %s27, %s30
    %p36 = scmp.eq.s32.totalorder %s17, 0
    %p37 = por %p35, %p36
    %p38 = scmp.ne.s32.totalorder %s27, %s30
    %p39 = scmp.eq.s32.totalorder %s22, 1
    %p40 = por %p38, %p39
    %p41 = scmp.ne.s32.totalorder %s30, %s31
    %p42 = scmp.eq.s32.totalorder %s22, 0
    %p43 = por %p41, %p42
    %p44 = scmp.ne.s32.totalorder %s30, %s31
    %p45 = scmp.eq.s32.totalorder %s23, 1
    %p46 = por %p44, %p45
    %p48 = scmp.ne.s32.totalorder %s31, %s47
    %p49 = scmp.eq.s32.totalorder %s23, 0
    %p50 = por %p48, %p49
    %s51 = ssub.s32 %s17, %s24
    %p52 = scmp.eq.s32.totalorder %s51, 0
    %s54 = sadd.s32 %s53, 1
    %s55 = scalar_select %p52, %s53, %s54
    %p58 = pneg %p52
    %p59 = scmp.eq.s32.totalorder %s17, 1
    %p60 = por %p58, %p59
    %p61 = scmp.ne.s32.totalorder %s53, %s56
    %p62 = scmp.eq.s32.totalorder %s17, 0
    %p63 = por %p61, %p62
    %p64 = scmp.ne.s32.totalorder %s53, %s56
    %p65 = scmp.eq.s32.totalorder %s22, 1
    %p66 = por %p64, %p65
    %p67 = scmp.ne.s32.totalorder %s56, %s57
    %p68 = scmp.eq.s32.totalorder %s22, 0
    %p69 = por %p67, %p68
    %p70 = scmp.ne.s32.totalorder %s56, %s57
    %p71 = scmp.eq.s32.totalorder %s23, 1
    %p72 = por %p70, %p71
    %p74 = scmp.ne.s32.totalorder %s57, %s73
    %p75 = scmp.eq.s32.totalorder %s23, 0
    %p76 = por %p74, %p75
    %s78 = sadd.s32 %s77, 1
    %p81 = scmp.eq.s32.totalorder %s17, 1
    %p82 = scmp.ne.s32.totalorder %s77, %s79
    %p83 = scmp.eq.s32.totalorder %s17, 0
    %p84 = por %p82, %p83
    %p85 = scmp.ne.s32.totalorder %s77, %s79
    %p86 = scmp.eq.s32.totalorder %s22, 1
    %p87 = por %p85, %p86
    %p88 = scmp.ne.s32.totalorder %s79, %s80
    %p89 = scmp.eq.s32.totalorder %s22, 0
    %p90 = por %p88, %p89
    %p91 = scmp.ne.s32.totalorder %s79, %s80
    %p92 = scmp.eq.s32.totalorder %s23, 1
    %p93 = por %p91, %p92
    %p95 = scmp.ne.s32.totalorder %s80, %s94
    %p96 = scmp.eq.s32.totalorder %s23, 0
    %p97 = por %p95, %p96
    %s99 = sadd.s32 %s98, 1
    %p102 = scmp.eq.s32.totalorder %s17, 1
    %p103 = scmp.ne.s32.totalorder %s98, %s100
    %p104 = scmp.eq.s32.totalorder %s17, 0
    %p105 = por %p103, %p104
    %p106 = scmp.ne.s32.totalorder %s98, %s100
    %p107 = scmp.eq.s32.totalorder %s22, 1
    %p108 = por %p106, %p107
    %p109 = scmp.ne.s32.totalorder %s100, %s101
    %p110 = scmp.eq.s32.totalorder %s22, 0
    %p111 = por %p109, %p110
    %p112 = scmp.ne.s32.totalorder %s100, %s101
    %p113 = scmp.eq.s32.totalorder %s23, 1
    %p114 = por %p112, %p113
    %p116 = scmp.ne.s32.totalorder %s101, %s115
    %p117 = scmp.eq.s32.totalorder %s23, 0
    %p118 = por %p116, %p117
    %s120 = sadd.s32 %s119, 1
    %p123 = scmp.eq.s32.totalorder %s17, 1
    %p124 = scmp.ne.s32.totalorder %s119, %s121
    %p125 = scmp.eq.s32.totalorder %s17, 0
    %p126 = por %p124, %p125
    %p127 = scmp.ne.s32.totalorder %s119, %s121
    %p128 = scmp.eq.s32.totalorder %s22, 1
    %p129 = por %p127, %p128
    %p130 = scmp.ne.s32.totalorder %s121, %s122
    %p131 = scmp.eq.s32.totalorder %s22, 0
    %p132 = por %p130, %p131
    %p133 = scmp.ne.s32.totalorder %s121, %s122
    %p134 = scmp.eq.s32.totalorder %s23, 1
    %p135 = por %p133, %p134
    %p137 = scmp.ne.s32.totalorder %s122, %s136
    %p138 = scmp.eq.s32.totalorder %s23, 0
    %p139 = por %p137, %p138
    %s141 = sadd.s32 %s140, 1
    %p144 = scmp.eq.s32.totalorder %s17, 1
    %p145 = scmp.ne.s32.totalorder %s140, %s142
    %p146 = scmp.eq.s32.totalorder %s17, 0
    %p147 = por %p145, %p146
    %p148 = scmp.ne.s32.totalorder %s140, %s142
    %p149 = scmp.eq.s32.totalorder %s22, 1
    %p150 = por %p148, %p149
    %p151 = scmp.ne.s32.totalorder %s142, %s143
    %p152 = scmp.eq.s32.totalorder %s22, 0
    %p153 = por %p151, %p152
    %p154 = scmp.ne.s32.totalorder %s142, %s143
    %p155 = scmp.eq.s32.totalorder %s23, 1
    %p156 = por %p154, %p155
    %p158 = scmp.ne.s32.totalorder %s143, %s157
    %p159 = scmp.eq.s32.totalorder %s23, 0
    %p160 = por %p158, %p159
    %s162 = sadd.s32 %s161, 1
    %p165 = scmp.eq.s32.totalorder %s17, 1
    %p166 = scmp.ne.s32.totalorder %s161, %s163
    %p167 = scmp.eq.s32.totalorder %s17, 0
    %p168 = por %p166, %p167
    %p169 = scmp.ne.s32.totalorder %s161, %s163
    %p170 = scmp.eq.s32.totalorder %s22, 1
    %p171 = por %p169, %p170
    %p172 = scmp.ne.s32.totalorder %s163, %s164
    %p173 = scmp.eq.s32.totalorder %s22, 0
    %p174 = por %p172, %p173
    %p175 = scmp.ne.s32.totalorder %s163, %s164
    %p176 = scmp.eq.s32.totalorder %s23, 1
    %p177 = por %p175, %p176
    %p179 = scmp.ne.s32.totalorder %s164, %s178
    %p180 = scmp.eq.s32.totalorder %s23, 0
    %p181 = por %p179, %p180
    %s183 = sadd.s32 %s182, 1
    %p186 = scmp.eq.s32.totalorder %s17, 1
    %p187 = scmp.ne.s32.totalorder %s182, %s184
    %p188 = scmp.eq.s32.totalorder %s17, 0
    %p189 = por %p187, %p188
    %p190 = scmp.ne.s32.totalorder %s182, %s184
    %p191 = scmp.eq.s32.totalorder %s22, 1
    %p192 = por %p190, %p191
    %p193 = scmp.ne.s32.totalorder %s184, %s185
    %p194 = scmp.eq.s32.totalorder %s22, 0
    %p195 = por %p193, %p194
    %p196 = scmp.ne.s32.totalorder %s184, %s185
    %p197 = scmp.eq.s32.totalorder %s23, 1
    %p198 = por %p196, %p197
    %p200 = scmp.ne.s32.totalorder %s185, %s199
    %p201 = scmp.eq.s32.totalorder %s23, 0
    %p202 = por %p200, %p201
    %s204 = sadd.s32 %s203, 1
    %p207 = scmp.eq.s32.totalorder %s17, 1
    %p208 = scmp.ne.s32.totalorder %s203, %s205
    %p209 = scmp.eq.s32.totalorder %s17, 0
    %p210 = por %p208, %p209
    %p211 = scmp.ne.s32.totalorder %s203, %s205
    %p212 = scmp.eq.s32.totalorder %s22, 1
    %p213 = por %p211, %p212
    %p214 = scmp.ne.s32.totalorder %s205, %s206
    %p215 = scmp.eq.s32.totalorder %s22, 0
    %p216 = por %p214, %p215
    %p217 = scmp.ne.s32.totalorder %s205, %s206
    %p218 = scmp.eq.s32.totalorder %s23, 1
    %p219 = por %p217, %p218
    %p221 = scmp.ne.s32.totalorder %s206, %s220
    %p222 = scmp.eq.s32.totalorder %s23, 0
    %p223 = por %p221, %p222
    %s225 = sadd.s32 %s224, 1
    %p228 = scmp.eq.s32.totalorder %s17, 1
    %p229 = scmp.ne.s32.totalorder %s224, %s226
    %p230 = scmp.eq.s32.totalorder %s17, 0
    %p231 = por %p229, %p230
    %p232 = scmp.ne.s32.totalorder %s224, %s226
    %p233 = scmp.eq.s32.totalorder %s22, 1
    %p234 = por %p232, %p233
    %p235 = scmp.ne.s32.totalorder %s226, %s227
    %p236 = scmp.eq.s32.totalorder %s22, 0
    %p237 = por %p235, %p236
    %p238 = scmp.ne.s32.totalorder %s226, %s227
    %p239 = scmp.eq.s32.totalorder %s23, 1
    %p240 = por %p238, %p239
    %p242 = scmp.ne.s32.totalorder %s227, %s241
    %p243 = scmp.eq.s32.totalorder %s23, 0
    %p244 = por %p242, %p243
    %s246 = sadd.s32 %s245, 1
    %p249 = scmp.eq.s32.totalorder %s17, 1
    %p250 = scmp.ne.s32.totalorder %s245, %s247
    %p251 = scmp.eq.s32.totalorder %s17, 0
    %p252 = por %p250, %p251
    %p253 = scmp.ne.s32.totalorder %s245, %s247
    %p254 = scmp.eq.s32.totalorder %s22, 1
    %p255 = por %p253, %p254
    %p256 = scmp.ne.s32.totalorder %s247, %s248
    %p257 = scmp.eq.s32.totalorder %s22, 0
    %p258 = por %p256, %p257
    %p259 = scmp.ne.s32.totalorder %s247, %s248
    %p260 = scmp.eq.s32.totalorder %s23, 1
    %p261 = por %p259, %p260
    %p263 = scmp.ne.s32.totalorder %s248, %s262
    %p264 = scmp.eq.s32.totalorder %s23, 0
    %p265 = por %p263, %p264
    %s266 = ssub.s32 %s17, %s24
    %p267 = scmp.eq.s32.totalorder %s266, 0
    %s269 = sadd.s32 %s268, 1
    %s270 = scalar_select %p267, %s268, %s269
    %p273 = pneg %p267
    %p274 = scmp.eq.s32.totalorder %s17, 1
    %p275 = por %p273, %p274
    %p276 = scmp.ne.s32.totalorder %s268, %s271
    %p277 = scmp.eq.s32.totalorder %s17, 0
    %p278 = por %p276, %p277
    %p279 = scmp.ne.s32.totalorder %s268, %s271
    %p280 = scmp.eq.s32.totalorder %s22, 1
    %p281 = por %p279, %p280
    %p282 = scmp.ne.s32.totalorder %s271, %s272
    %p283 = scmp.eq.s32.totalorder %s22, 0
    %p284 = por %p282, %p283
    %p285 = scmp.ne.s32.totalorder %s271, %s272
    %p286 = scmp.eq.s32.totalorder %s23, 1
    %p287 = por %p285, %p286
    %p289 = scmp.ne.s32.totalorder %s272, %s288
    %p290 = scmp.eq.s32.totalorder %s23, 0
    %p291 = por %p289, %p290
    %p292 = scmp.le.s32.totalorder 1, %s17
    %p293 = scmp.lt.s32.totalorder %s17, 3
    %p294 = pnand %p292, %p293
    %p295 = pneg %p294
    // Predicated region
    $region9: #{decoder_forward.8} parent=5 // pred_check
      _
    $region10: #{decoder_forward.8} parent=5 // pred_check_branch
      %297 = sbr.rel (%p294) target = $region12
    $region11: #{decoder_forward.8} parent=5 // pred_region
      %s298 = ssub.s32 %s17, 1
      // Predicated region
      $region13: #{decoder_forward.8} parent=11 // pred_check
        %p299 = pneg %p90
      $region14: #{decoder_forward.8} parent=11 // pred_check_branch
        %301 = sbr.rel (%p299) target = $region16
      $region15: #{decoder_forward.8} parent=11 // pred_region
        _
      $region16: #{decoder_forward.8} parent=11 // pred_fallthru
        _
      // Predicated region
      $region17: #{decoder_forward.8} parent=11 // pred_check
        %p302 = pneg %p111
      $region18: #{decoder_forward.8} parent=11 // pred_check_branch
        %304 = sbr.rel (%p302) target = $region20
      $region19: #{decoder_forward.8} parent=11 // pred_region
        _
      $region20: #{decoder_forward.8} parent=11 // pred_fallthru
        _
      // Predicated region
      $region21: #{decoder_forward.8} parent=11 // pred_check
        %p305 = pneg %p132
      $region22: #{decoder_forward.8} parent=11 // pred_check_branch
        %307 = sbr.rel (%p305) target = $region24
      $region23: #{decoder_forward.8} parent=11 // pred_region
        _
      $region24: #{decoder_forward.8} parent=11 // pred_fallthru
        _
      // Predicated region
      $region25: #{decoder_forward.8} parent=11 // pred_check
        %p308 = pneg %p153
      $region26: #{decoder_forward.8} parent=11 // pred_check_branch
        %310 = sbr.rel (%p308) target = $region28
      $region27: #{decoder_forward.8} parent=11 // pred_region
        _
      $region28: #{decoder_forward.8} parent=11 // pred_fallthru
        _
      // Predicated region
      $region29: #{decoder_forward.8} parent=11 // pred_check
        %p311 = pneg %p174
      $region30: #{decoder_forward.8} parent=11 // pred_check_branch
        %313 = sbr.rel (%p311) target = $region32
      $region31: #{decoder_forward.8} parent=11 // pred_region
        _
      $region32: #{decoder_forward.8} parent=11 // pred_fallthru
        _
      // Predicated region
      $region33: #{decoder_forward.8} parent=11 // pred_check
        %p314 = pneg %p195
      $region34: #{decoder_forward.8} parent=11 // pred_check_branch
        %316 = sbr.rel (%p314) target = $region36
      $region35: #{decoder_forward.8} parent=11 // pred_region
        _
      $region36: #{decoder_forward.8} parent=11 // pred_fallthru
        _
      // Predicated region
      $region37: #{decoder_forward.8} parent=11 // pred_check
        %p317 = pneg %p216
      $region38: #{decoder_forward.8} parent=11 // pred_check_branch
        %319 = sbr.rel (%p317) target = $region40
      $region39: #{decoder_forward.8} parent=11 // pred_region
        _
      $region40: #{decoder_forward.8} parent=11 // pred_fallthru
        _
      // Predicated region
      $region41: #{decoder_forward.8} parent=11 // pred_check
        %p320 = pneg %p237
      $region42: #{decoder_forward.8} parent=11 // pred_check_branch
        %322 = sbr.rel (%p320) target = $region44
      $region43: #{decoder_forward.8} parent=11 // pred_region
        _
      $region44: #{decoder_forward.8} parent=11 // pred_fallthru
        _
      // Predicated region
      $region45: #{decoder_forward.8} parent=11 // pred_check
        %p323 = pneg %p258
      $region46: #{decoder_forward.8} parent=11 // pred_check_branch
        %325 = sbr.rel (%p323) target = $region48
      $region47: #{decoder_forward.8} parent=11 // pred_region
        _
      $region48: #{decoder_forward.8} parent=11 // pred_fallthru
        _
    $region12: #{decoder_forward.8} parent=5 // pred_fallthru
      _
    %p326 = scmp.lt.s32.totalorder %s17, 2
    // Predicated region
    $region49: #{decoder_forward.8} parent=5 // pred_check
      %p327 = pneg %p326
    $region50: #{decoder_forward.8} parent=5 // pred_check_branch
      %329 = sbr.rel (%p327) target = $region52
    $region51: #{decoder_forward.8} parent=5 // pred_region
      // Predicated region
      $region53: #{decoder_forward.8} parent=51 // pred_check
        %p330 = pneg %p37
      $region54: #{decoder_forward.8} parent=51 // pred_check_branch
        %332 = sbr.rel (%p330) target = $region56
      $region55: #{decoder_forward.8} parent=51 // pred_region
        %p333 = scmp.lt.s32.totalorder %s17, 1
        %s334 = scalar_select %p333, %s17, 1
        %s335 = smul.addr %s334, 8
        %s336 = scalar_lea.vmem %s0, %s335
      $region56: #{decoder_forward.8} parent=51 // pred_fallthru
        _
      // Predicated region
      $region57: #{decoder_forward.8} parent=51 // pred_check
        %p337 = pneg %p63
      $region58: #{decoder_forward.8} parent=51 // pred_check_branch
        %339 = sbr.rel (%p337) target = $region60
      $region59: #{decoder_forward.8} parent=51 // pred_region
        %p340 = scmp.lt.s32.totalorder %s17, 1
        %s341 = scalar_select %p340, %s17, 1
        %s342 = smul.addr %s341, 8
        %s343 = scalar_lea.vmem %s1, %s342
      $region60: #{decoder_forward.8} parent=51 // pred_fallthru
        _
    $region52: #{decoder_forward.8} parent=5 // pred_fallthru
      _
    %p344 = scmp.le.s32.totalorder 1, %s17
    %p345 = scmp.lt.s32.totalorder %s17, 3
    %p346 = pnand %p344, %p345
    %p347 = pneg %p346
    // Predicated region
    $region61: #{decoder_forward.8} parent=5 // pred_check
      _
    $region62: #{decoder_forward.8} parent=5 // pred_check_branch
      %349 = sbr.rel (%p346) target = $region64
    $region63: #{decoder_forward.8} parent=5 // pred_region
      %s350 = ssub.s32 %s17, 1
      %p351 = scmp.lt.s32.totalorder %s22, 1
      %s352 = scalar_select %p351, %s22, 1
      %s353 = smul.addr %s352, 8
      %s354 = scalar_lea.vmem %s0, %s353
      %p355 = pneg %p43
      %p356 = pneg %p40
      %p357 = scmp.lt.s32.totalorder %s22, 1
      %s358 = scalar_select %p357, %s22, 1
      %s359 = smul.addr %s358, 8
      %s360 = scalar_lea.vmem %s1, %s359
      %p361 = pneg %p69
      %p362 = pneg %p66
      %p363 = pneg %p90
      %p364 = pneg %p87
      %p365 = pneg %p111
      %p366 = pneg %p108
      %p367 = pneg %p132
      %p368 = pneg %p129
      %p369 = pneg %p153
      %p370 = pneg %p150
      %p371 = pneg %p174
      %p372 = pneg %p171
      %p373 = pneg %p195
      %p374 = pneg %p192
      %p375 = pneg %p216
      %p376 = pneg %p213
      %p377 = pneg %p237
      %p378 = pneg %p234
      %p379 = pneg %p258
      %p380 = pneg %p255
      %p381 = pneg %p284
      %p382 = pneg %p281
      %p383 = scmp.lt.s32.totalorder %s22, 1
      %s384 = scalar_select %p383, %s22, 1
      %s385 = smul.addr %s384, 8
      %s386 = scalar_lea.vmem %s11, %s385
      %p387 = scmp.lt.s32.totalorder %s22, 1
      %s388 = scalar_select %p387, %s22, 1
      %s389 = smul.addr %s388, 8
      %s390 = scalar_lea.vmem %s0, %s389
      %p391 = scmp.lt.s32.totalorder %s22, 1
      %s392 = scalar_select %p391, %s22, 1
      %s393 = smul.addr %s392, 8
      %s394 = scalar_lea.vmem %s1, %s393
      %p395 = scmp.lt.s32.totalorder %s22, 1
      %s396 = scalar_select %p395, %s22, 1
      %s397 = smul.addr %s396, 8
      %s398 = scalar_lea.vmem %s11, %s397
      %v400 = vld [vmem:[%s390] sm:$0xff]
      %v401 = vld [vmem:[%s394] sm:$0xff]
      %v402 = vpack.c.bf16 %v400, %v400
      %v403 = vld [vmem:[%s3] sm:$0xf]
      %v404 = vld [vmem:[%s3 + $0x4] sm:$0xf]
      %v405 = vld [vmem:[%s3 + $0x8] sm:$0xf]
      %v406 = vld [vmem:[%s3 + $0xc] sm:$0xf]
      %v407 = vld [vmem:[%s4] sm:$0x1]
      %v409 = vperm.slane %v407, 0
      %v415 = vunpack.c.l.b16 %v403
      %v416 = vunpack.c.l.b16 %v404
      %v417 = vunpack.c.l.b16 %v405
      %v418 = vunpack.c.l.b16 %v406
      %v419 = vpack.c.b16 %v416, %v415
      %v420 = vpack.c.b16 %v418, %v417
      %vm423 = vcmask 261120
      %v425 = vsel %vm423, %v402, 0
      %427 = vmatpush.bf16.msra.mxu0 0
      %428 = vmatpush.bf16.msra.mxu0 0
      %429 = vmatpush.bf16.msra.mxu0 0
      %430 = vmatpush.bf16.msra.mxu0 0
      %431 = vmatpush.bf16.msra.mxu0 0
      %432 = vmatpush.bf16.msra.mxu0 0
      %433 = vmatpush.bf16.msra.mxu0 %v420
      %434 = vmatpush.bf16.msra.mxu0 %v419
      %435 = vmatmul.bf16.gmra.mxu0 %v425
      %v436 = vpop.f32.mrf.mxu0
      %v437 = vadd.f32 %v409, %v436
      %v438 = vpop.f32.mrf.mxu0
      %439 = vdwg.mxu0
      %v440 = vpack.c.bf16 %v401, %v401
      %v441 = vld [vmem:[%s5] sm:$0xf]
      %v442 = vld [vmem:[%s5 + $0x4] sm:$0xf]
      %v443 = vld [vmem:[%s5 + $0x8] sm:$0xf]
      %v444 = vld [vmem:[%s5 + $0xc] sm:$0xf]
      %v445 = vld [vmem:[%s6] sm:$0x1]
      %v447 = vperm.slane %v445, 0
      %v453 = vunpack.c.l.b16 %v441
      %v454 = vunpack.c.l.b16 %v442
      %v455 = vunpack.c.l.b16 %v443
      %v456 = vunpack.c.l.b16 %v444
      %v457 = vpack.c.b16 %v454, %v453
      %v458 = vpack.c.b16 %v456, %v455
      %v462 = vsel %vm423, %v440, 0
      %464 = vmatpush.bf16.msra.mxu0 0
      %465 = vmatpush.bf16.msra.mxu0 0
      %466 = vmatpush.bf16.msra.mxu0 0
      %467 = vmatpush.bf16.msra.mxu0 0
      %468 = vmatpush.bf16.msra.mxu0 0
      %469 = vmatpush.bf16.msra.mxu0 0
      %470 = vmatpush.bf16.msra.mxu0 %v458
      %471 = vmatpush.bf16.msra.mxu0 %v457
      %472 = vmatmul.bf16.gmra.mxu0 %v462
      %v473 = vpop.f32.mrf.mxu0
      %v474 = vadd.f32 %v447, %v473
      %v475 = vpop.f32.mrf.mxu0
      %476 = vdwg.mxu0
      %v477 = vld [vmem:[%s2] sm:$0xff]
      %v478 = vpack.c.bf16 %v437, %v437
      %v479 = vpack.c.bf16 %v474, %v474
      %vm480 = vcmask 64512
      %v482 = vsel %vm480, %v478, 0
      %v485 = vsel %vm480, %v479, 0
      %487 = vmatpush.bf16.xpose.msra.mxu0 0
      %488 = vmatpush.bf16.xpose.msra.mxu0 0
      %489 = vmatpush.bf16.xpose.msra.mxu0 0
      %490 = vmatpush.bf16.xpose.msra.mxu0 0
      %491 = vmatpush.bf16.xpose.msra.mxu0 0
      %492 = vmatpush.bf16.xpose.msra.mxu0 0
      %493 = vmatpush.bf16.xpose.msra.mxu0 0
      %494 = vmatpush.bf16.xpose.msra.mxu0 %v485
      %495 = vmatmul.bf16.gmra.mxu0 %v482
      %v496 = vpop.f32.mrf.mxu0
      %v497 = vadd.f32 0.0, %v496
      %v498 = vpop.f32.mrf.mxu0
      %499 = vdwg.mxu0
      %v500 = vmul.f32 %v497, 0.35355338
      %v501 = vadd.f32 %v500, %v477
      %v502 = vsel %vm480, %v501, -inf
      %503 = vmax.xlane.f32.xlu0 %v502
      %v504 = vpop.xlane.xlu0 %503
      %v505 = vsub.f32 %v501, %v504
      %v506 = vmul.f32 %v505, 1.442695
      %v507 = vpow.pop %v506
      %v508 = vsel %vm480, %v507, 0.0
      %509 = vadd.xlane.f32.xlu0 %v508
      %v510 = vpop.xlane.xlu0 %509
      %v511 = vrcp.pop %v510
      %v512 = vmul.f32 %v507, %v511
      %v513 = vpack.c.bf16 %v512, %v512
      %515 = vrot.lane.b32.xlu0 %v479, 96
      %v516 = vpop.permute.xlu0 %515
      %v518 = vsel %vm480, %v513, 0
      %vm520 = vcmask 1043456
      %v522 = vsel %vm520, %v516, 0
      %524 = vmatpush.bf16.msra.mxu0 0
      %525 = vmatpush.bf16.msra.mxu0 0
      %526 = vmatpush.bf16.msra.mxu0 0
      %527 = vmatpush.bf16.msra.mxu0 0
      %528 = vmatpush.bf16.msra.mxu0 0
      %529 = vmatpush.bf16.msra.mxu0 0
      %530 = vmatpush.bf16.msra.mxu0 0
      %531 = vmatpush.bf16.msra.mxu0 %v522
      %532 = vmatmul.bf16.gmra.mxu0 %v518
      %v533 = vpop.f32.mrf.mxu0
      %v534 = vadd.f32 0.0, %v533
      %v535 = vpop.f32.mrf.mxu0
      %536 = vdwg.mxu0
      %v537 = vpack.c.bf16 %v534, %v534
      %v538 = vld [vmem:[%s7] sm:$0xf]
      %540 = vrot.lane.b32.xlu0 %v478, 120
      %v541 = vpop.permute.xlu0 %540
      %542 = vrot.lane.b32.xlu0 %v479, 120
      %v543 = vpop.permute.xlu0 %542
      %v545 = vsel %vm480, %v541, 0
      %v548 = vsel %vm480, %v543, 0
      %550 = vmatpush.bf16.xpose.msra.mxu0 0
      %551 = vmatpush.bf16.xpose.msra.mxu0 0
      %552 = vmatpush.bf16.xpose.msra.mxu0 0
      %553 = vmatpush.bf16.xpose.msra.mxu0 0
      %554 = vmatpush.bf16.xpose.msra.mxu0 0
      %555 = vmatpush.bf16.xpose.msra.mxu0 0
      %556 = vmatpush.bf16.xpose.msra.mxu0 0
      %557 = vmatpush.bf16.xpose.msra.mxu0 %v548
      %558 = vmatmul.bf16.gmra.mxu0 %v545
      %v559 = vpop.f32.mrf.mxu0
      %v560 = vadd.f32 0.0, %v559
      %v561 = vpop.f32.mrf.mxu0
      %562 = vdwg.mxu0
      %v563 = vmul.f32 %v560, 0.35355338
      %v564 = vadd.f32 %v563, %v477
      %v565 = vsel %vm480, %v564, -inf
      %566 = vmax.xlane.f32.xlu0 %v565
      %v567 = vpop.xlane.xlu0 %566
      %v568 = vsub.f32 %v564, %v567
      %v569 = vmul.f32 %v568, 1.442695
      %v570 = vpow.pop %v569
      %v571 = vsel %vm480, %v570, 0.0
      %572 = vadd.xlane.f32.xlu0 %v571
      %v573 = vpop.xlane.xlu0 %572
      %v574 = vrcp.pop %v573
      %v575 = vmul.f32 %v570, %v574
      %v576 = vpack.c.bf16 %v575, %v575
      %577 = vrot.lane.b32.xlu0 %v479, 88
      %v578 = vpop.permute.xlu0 %577
      %v580 = vsel %vm480, %v576, 0
      %v583 = vsel %vm520, %v578, 0
      %585 = vmatpush.bf16.msra.mxu0 0
      %586 = vmatpush.bf16.msra.mxu0 0
      %587 = vmatpush.bf16.msra.mxu0 0
      %588 = vmatpush.bf16.msra.mxu0 0
      %589 = vmatpush.bf16.msra.mxu0 0
      %590 = vmatpush.bf16.msra.mxu0 0
      %591 = vmatpush.bf16.msra.mxu0 0
      %592 = vmatpush.bf16.msra.mxu0 %v583
      %593 = vmatmul.bf16.gmra.mxu0 %v580
      %v594 = vpop.f32.mrf.mxu0
      %v595 = vadd.f32 0.0, %v594
      %v596 = vpop.f32.mrf.mxu0
      %597 = vdwg.mxu0
      %v598 = vpack.c.bf16 %v595, %v595
      %v599 = vld [vmem:[%s7 + $0x4] sm:$0xf]
      %v601 = vsel %vm480, %v598, 0
      %v604 = vsel %vm520, %v599, 0
      %606 = vmatpush.bf16.msra.mxu0 0
      %607 = vmatpush.bf16.msra.mxu0 0
      %608 = vmatpush.bf16.msra.mxu0 0
      %609 = vmatpush.bf16.msra.mxu0 0
      %610 = vmatpush.bf16.msra.mxu0 0
      %611 = vmatpush.bf16.msra.mxu0 0
      %612 = vmatpush.bf16.msra.mxu0 0
      %613 = vmatpush.bf16.msra.mxu0 %v604
      %614 = vmatmul.bf16.gmra.mxu0 %v601
      %v615 = vpop.f32.mrf.mxu0
      %v616 = vadd.f32 0.0, %v615
      %v617 = vpop.f32.mrf.mxu0
      %618 = vdwg.mxu0
      %v620 = vsel %vm480, %v537, 0
      %v623 = vsel %vm520, %v538, 0
      %625 = vmatpush.bf16.msra.mxu0 0
      %626 = vmatpush.bf16.msra.mxu0 0
      %627 = vmatpush.bf16.msra.mxu0 0
      %628 = vmatpush.bf16.msra.mxu0 0
      %629 = vmatpush.bf16.msra.mxu0 0
      %630 = vmatpush.bf16.msra.mxu0 0
      %631 = vmatpush.bf16.msra.mxu0 0
      %632 = vmatpush.bf16.msra.mxu0 %v623
      %633 = vmatmul.bf16.gmra.mxu0 %v620
      %v634 = vpop.f32.mrf.mxu0
      %v635 = vadd.f32 %v616, %v634
      %v636 = vpop.f32.mrf.mxu0
      %637 = vdwg.mxu0
      %638 = vrot.lane.b32.xlu0 %v478, 112
      %v639 = vpop.permute.xlu0 %638
      %640 = vrot.lane.b32.xlu0 %v479, 112
      %v641 = vpop.permute.xlu0 %640
      %v643 = vsel %vm480, %v639, 0
      %v646 = vsel %vm480, %v641, 0
      %648 = vmatpush.bf16.xpose.msra.mxu0 0
      %649 = vmatpush.bf16.xpose.msra.mxu0 0
      %650 = vmatpush.bf16.xpose.msra.mxu0 0
      %651 = vmatpush.bf16.xpose.msra.mxu0 0
      %652 = vmatpush.bf16.xpose.msra.mxu0 0
      %653 = vmatpush.bf16.xpose.msra.mxu0 0
      %654 = vmatpush.bf16.xpose.msra.mxu0 0
      %655 = vmatpush.bf16.xpose.msra.mxu0 %v646
      %656 = vmatmul.bf16.gmra.mxu0 %v643
      %v657 = vpop.f32.mrf.mxu0
      %v658 = vadd.f32 0.0, %v657
      %v659 = vpop.f32.mrf.mxu0
      %660 = vdwg.mxu0
      %v661 = vmul.f32 %v658, 0.35355338
      %v662 = vadd.f32 %v661, %v477
      %v663 = vsel %vm480, %v662, -inf
      %664 = vmax.xlane.f32.xlu0 %v663
      %v665 = vpop.xlane.xlu0 %664
      %v666 = vsub.f32 %v662, %v665
      %v667 = vmul.f32 %v666, 1.442695
      %v668 = vpow.pop %v667
      %v669 = vsel %vm480, %v668, 0.0
      %670 = vadd.xlane.f32.xlu0 %v669
      %v671 = vpop.xlane.xlu0 %670
      %v672 = vrcp.pop %v671
      %v673 = vmul.f32 %v668, %v672
      %v674 = vpack.c.bf16 %v673, %v673
      %675 = vrot.lane.b32.xlu0 %v479, 80
      %v676 = vpop.permute.xlu0 %675
      %v678 = vsel %vm480, %v674, 0
      %v681 = vsel %vm520, %v676, 0
      %683 = vmatpush.bf16.msra.mxu0 0
      %684 = vmatpush.bf16.msra.mxu0 0
      %685 = vmatpush.bf16.msra.mxu0 0
      %686 = vmatpush.bf16.msra.mxu0 0
      %687 = vmatpush.bf16.msra.mxu0 0
      %688 = vmatpush.bf16.msra.mxu0 0
      %689 = vmatpush.bf16.msra.mxu0 0
      %690 = vmatpush.bf16.msra.mxu0 %v681
      %691 = vmatmul.bf16.gmra.mxu0 %v678
      %v692 = vpop.f32.mrf.mxu0
      %v693 = vadd.f32 0.0, %v692
      %v694 = vpop.f32.mrf.mxu0
      %695 = vdwg.mxu0
      %v696 = vpack.c.bf16 %v693, %v693
      %v697 = vld [vmem:[%s7 + $0x8] sm:$0xf]
      %v699 = vsel %vm480, %v696, 0
      %v702 = vsel %vm520, %v697, 0
      %704 = vmatpush.bf16.msra.mxu0 0
      %705 = vmatpush.bf16.msra.mxu0 0
      %706 = vmatpush.bf16.msra.mxu0 0
      %707 = vmatpush.bf16.msra.mxu0 0
      %708 = vmatpush.bf16.msra.mxu0 0
      %709 = vmatpush.bf16.msra.mxu0 0
      %710 = vmatpush.bf16.msra.mxu0 0
      %711 = vmatpush.bf16.msra.mxu0 %v702
      %712 = vmatmul.bf16.gmra.mxu0 %v699
      %v713 = vpop.f32.mrf.mxu0
      %v714 = vadd.f32 0.0, %v713
      %v715 = vpop.f32.mrf.mxu0
      %716 = vdwg.mxu0
      %v717 = vadd.f32 %v635, %v714
      %718 = vrot.lane.b32.xlu0 %v478, 104
      %v719 = vpop.permute.xlu0 %718
      %720 = vrot.lane.b32.xlu0 %v479, 104
      %v721 = vpop.permute.xlu0 %720
      %v723 = vsel %vm480, %v719, 0
      %v726 = vsel %vm480, %v721, 0
      %728 = vmatpush.bf16.xpose.msra.mxu0 0
      %729 = vmatpush.bf16.xpose.msra.mxu0 0
      %730 = vmatpush.bf16.xpose.msra.mxu0 0
      %731 = vmatpush.bf16.xpose.msra.mxu0 0
      %732 = vmatpush.bf16.xpose.msra.mxu0 0
      %733 = vmatpush.bf16.xpose.msra.mxu0 0
      %734 = vmatpush.bf16.xpose.msra.mxu0 0
      %735 = vmatpush.bf16.xpose.msra.mxu0 %v726
      %736 = vmatmul.bf16.gmra.mxu0 %v723
      %v737 = vpop.f32.mrf.mxu0
      %v738 = vadd.f32 0.0, %v737
      %v739 = vpop.f32.mrf.mxu0
      %740 = vdwg.mxu0
      %v741 = vmul.f32 %v738, 0.35355338
      %v742 = vadd.f32 %v741, %v477
      %v743 = vsel %vm480, %v742, -inf
      %744 = vmax.xlane.f32.xlu0 %v743
      %v745 = vpop.xlane.xlu0 %744
      %v746 = vsub.f32 %v742, %v745
      %v747 = vmul.f32 %v746, 1.442695
      %v748 = vpow.pop %v747
      %v749 = vsel %vm480, %v748, 0.0
      %750 = vadd.xlane.f32.xlu0 %v749
      %v751 = vpop.xlane.xlu0 %750
      %v752 = vrcp.pop %v751
      %v753 = vmul.f32 %v748, %v752
      %v754 = vpack.c.bf16 %v753, %v753
      %755 = vrot.lane.b32.xlu0 %v479, 72
      %v756 = vpop.permute.xlu0 %755
      %v758 = vsel %vm480, %v754, 0
      %v761 = vsel %vm520, %v756, 0
      %763 = vmatpush.bf16.msra.mxu0 0
      %764 = vmatpush.bf16.msra.mxu0 0
      %765 = vmatpush.bf16.msra.mxu0 0
      %766 = vmatpush.bf16.msra.mxu0 0
      %767 = vmatpush.bf16.msra.mxu0 0
      %768 = vmatpush.bf16.msra.mxu0 0
      %769 = vmatpush.bf16.msra.mxu0 0
      %770 = vmatpush.bf16.msra.mxu0 %v761
      %771 = vmatmul.bf16.gmra.mxu0 %v758
      %v772 = vpop.f32.mrf.mxu0
      %v773 = vadd.f32 0.0, %v772
      %v774 = vpop.f32.mrf.mxu0
      %775 = vdwg.mxu0
      %v776 = vpack.c.bf16 %v773, %v773
      %v777 = vld [vmem:[%s7 + $0xc] sm:$0xf]
      %v779 = vsel %vm480, %v776, 0
      %v782 = vsel %vm520, %v777, 0
      %784 = vmatpush.bf16.msra.mxu0 0
      %785 = vmatpush.bf16.msra.mxu0 0
      %786 = vmatpush.bf16.msra.mxu0 0
      %787 = vmatpush.bf16.msra.mxu0 0
      %788 = vmatpush.bf16.msra.mxu0 0
      %789 = vmatpush.bf16.msra.mxu0 0
      %790 = vmatpush.bf16.msra.mxu0 0
      %791 = vmatpush.bf16.msra.mxu0 %v782
      %792 = vmatmul.bf16.gmra.mxu0 %v779
      %v793 = vpop.f32.mrf.mxu0
      %v794 = vadd.f32 0.0, %v793
      %v795 = vpop.f32.mrf.mxu0
      %796 = vdwg.mxu0
      %v797 = vadd.f32 %v717, %v794
      %v798 = vld [vmem:[%s8] sm:$0x1]
      %v800 = vperm.slane %v798, 0
      %v802 = vadd.f32 %v797, %v800
      %v803 = vadd.f32 %v802, %v400
      %v804 = vld [vmem:[%s9] sm:$0x1]
      %v805 = vld [vmem:[%s10] sm:$0x1]
      %v806 = vsel %vm423, %v803, 0.0
      %807 = vadd.xlane.f32.xlu0 %v806
      %v808 = vpop.xlane.xlu0 %807
      %v809 = vrcp.pop 32.0
      %v810 = vmul.f32 32.0, %v809
      %v811 = vsub.f32 1.0, %v810
      %v812 = vmul.f32 %v809, %v811
      %v813 = vadd.f32 %v809, %v812
      %vm814 = vweird.f32 %v809
      %v815 = vsel %vm814, %v809, %v813
      %v816 = vmul.f32 %v808, %v815
      %v817 = vsub.f32 %v803, %v816
      %v818 = vmul.f32 %v817, %v817
      %v819 = vsel %vm423, %v818, 0.0
      %820 = vadd.xlane.f32.xlu0 %v819
      %v821 = vpop.xlane.xlu0 %820
      %v822 = vmul.f32 %v821, %v815
      %v823 = vadd.f32 %v822, 1e-05
      %v824 = vrsqrt.pop %v823
      %v825 = vmul.f32 %v824, %v823
      %v826 = vmul.f32 %v825, %v824
      %v827 = vmul.f32 0.5, %v826
      %v828 = vsub.f32 1.5, %v827
      %v829 = vmul.f32 %v824, %v828
      %vm830 = vweird.f32 %v823
      %vm831 = vweird.f32 %v824
      %vm832 = vmor %vm830, %vm831
      %v833 = vsel %vm832, %v824, %v829
      %v834 = vmul.f32 %v817, %v833
      %v836 = vperm.slane %v804, 0
      %v838 = vmul.f32 %v834, %v836
      %v840 = vperm.slane %v805, 0
      %v842 = vadd.f32 %v838, %v840
      %843 = vst.msk [vmem:[%s398] sm:$0xff] %vm423, %v842
      %p844 = scmp.lt.s32.totalorder %s22, 1
      %s845 = scalar_select %p844, %s22, 1
      %s846 = smul.addr %s845, 8
      %s847 = scalar_lea.vmem %s11, %s846
      // Predicated region
      $region65: #{decoder_forward.8} parent=63 // pred_check
        %p848 = pneg %p281
      $region66: #{decoder_forward.8} parent=63 // pred_check_branch
        %850 = sbr.rel (%p848) target = $region68
      $region67: #{decoder_forward.8} parent=63 // pred_region
        _
      $region68: #{decoder_forward.8} parent=63 // pred_fallthru
        _
    $region64: #{decoder_forward.8} parent=5 // pred_fallthru
      _
    %p851 = scmp.le.s32.totalorder 2, %s17
    // Predicated region
    $region69: #{decoder_forward.8} parent=5 // pred_check
      %p852 = pneg %p851
    $region70: #{decoder_forward.8} parent=5 // pred_check_branch
      %854 = sbr.rel (%p852) target = $region72
    $region71: #{decoder_forward.8} parent=5 // pred_region
      %s855 = ssub.s32 %s17, 2
      // Predicated region
      $region73: #{decoder_forward.8} parent=71 // pred_check
        %p856 = pneg %p287
      $region74: #{decoder_forward.8} parent=71 // pred_check_branch
        %858 = sbr.rel (%p856) target = $region76
      $region75: #{decoder_forward.8} parent=71 // pred_region
        %p859 = scmp.lt.s32.totalorder %s23, 1
        %s860 = scalar_select %p859, %s23, 1
        %s861 = smul.addr %s860, 8
        %s862 = scalar_lea.vmem %s11, %s861
      $region76: #{decoder_forward.8} parent=71 // pred_fallthru
        _
    $region72: #{decoder_forward.8} parent=5 // pred_fallthru
      _
  $region6: #{decoder_forward.8} parent=0 // loop_footer
    %s21 = sadd.s32 1, %s17
  $region7: #{decoder_forward.8} parent=0 // loop_footer_branch
    %16 = sbr.rel target = $region3
  $region8: #{decoder_forward.8} parent=0 // loop_exit
    _

</llo_original>
